<compile_context>
chip_gen: v7x
topology: tpu7x:2x2x1
jax: 0.10.0
libtpu: 0.0.40
codegen_flags: <defaults>
</compile_context>

<pallas_src>
import math
import functools

import jax
import jax.numpy as jnp
from jax import lax
from jax.experimental import pallas as pl
from jax.experimental.pallas import tpu as pltpu

D_STATE = 2          # n (kernel unrolls this statically; must be 2, as in the module)
EXPAND = 1
D_CONV = 4
LN_EPS = 1e-5


def _ssm_cha_kernel(
    # inputs
    x_ref,        # (B_BLK, L, D)          f32
    w_in_ref,     # (D, 2*d_inner)         f32
    w_conv_ref,   # (D_CONV, d_inner)      f32
    b_conv_ref,   # (1, d_inner)           f32
    w_xf_ref,     # (d_inner, d_inner+2n)  f32  fused [W_delta | W_B | W_C]
    b_dt_ref,     # (1, d_inner)           f32
    a_t_ref,      # (n, d_inner)           f32  A_log transposed (lane-dense rows)
    d_skip_ref,   # (1, d_inner)           f32
    w_out_ref,    # (d_inner, out_c)       f32
    gamma_ref,    # (1, out_c)             f32
    beta_ref,     # (1, out_c)             f32
    # output
    out_ref,      # (B_BLK, L, out_c)      f32
    # scratch (all lane-dense: d_inner on lanes)
    dA0_ref, dA1_ref,      # (B_BLK, L, d_inner)
    dBu0_ref, dBu1_ref,    # (B_BLK, L, d_inner)
    cb0_ref, cb1_ref,      # (B_BLK, L, d_inner)
    y_ref,                 # (B_BLK, L, d_inner)
    s0_ref, s1_ref,        # (B_BLK, d_inner)  carried scan state (n unrolled)
    *, B_BLK, L, d_inner, CH, n_chunks,
):
    f32 = jnp.float32
    bf16 = jnp.bfloat16
    D = x_ref.shape[2]
    M = B_BLK * L

    # ---- in_proj: (B*L, D) @ (D, 2*d_inner)  (bf16 operands, f32 accumulation) ----
    x = x_ref[...].reshape(M, D)
    xz = jnp.dot(x.astype(bf16), w_in_ref[...].astype(bf16),
                 preferred_element_type=f32)                                # (M, 2*d_inner)
    xp = xz[:, :d_inner]
    res = xz[:, d_inner:]

    # ---- causal depthwise conv1d along L (flattened rows, masked at batch boundaries) ----
    pos = lax.broadcasted_iota(jnp.int32, (B_BLK, L, d_inner), 1).reshape(M, d_inner)
    wc = w_conv_ref[...]                                                    # (D_CONV, d_inner)
    acc = wc[D_CONV - 1][None, :] * xp                                      # shift-0 tap
    for k in range(D_CONV - 1):                                             # static unroll
        s = D_CONV - 1 - k
        shifted = jnp.where(pos >= s, pltpu.roll(xp, shift=s, axis=0), 0.0)
        acc = acc + wc[k][None, :] * shifted
    xc = acc + b_conv_ref[...]
    xc = xc * jax.nn.sigmoid(xc)                                            # SiLU

    # ---- fused x_proj (+ folded dt_proj): ONE matmul -> [delta_pre | B | C] ----
    x_dbl = jnp.dot(xc.astype(bf16), w_xf_ref[...].astype(bf16),
                    preferred_element_type=f32)                             # (M, d_inner+2n)
    delta = jax.nn.softplus(x_dbl[:, :d_inner] + b_dt_ref[...])             # (M, d_inner)
    dxc = delta * xc                                                        # reused for dBu

    neg_A = -jnp.exp(a_t_ref[...])                                          # (2, d_inner)
    dA0_ref[...] = jnp.exp(delta * neg_A[0][None, :]).reshape(B_BLK, L, d_inner)
    dA1_ref[...] = jnp.exp(delta * neg_A[1][None, :]).reshape(B_BLK, L, d_inner)

    b0 = d_inner                                                            # B columns
    dBu0_ref[...] = (dxc * x_dbl[:, b0 + 0:b0 + 1]).reshape(B_BLK, L, d_inner)
    dBu1_ref[...] = (dxc * x_dbl[:, b0 + 1:b0 + 2]).reshape(B_BLK, L, d_inner)

    c0i = d_inner + 2                                                       # C columns (n = 2)
    cb0_ref[...] = jnp.broadcast_to(x_dbl[:, c0i + 0:c0i + 1],
                                    (M, d_inner)).reshape(B_BLK, L, d_inner)
    cb1_ref[...] = jnp.broadcast_to(x_dbl[:, c0i + 1:c0i + 2],
                                    (M, d_inner)).reshape(B_BLK, L, d_inner)

    # ---- selective scan: chunked (CH steps/iter), 8-step register unroll, C folded in ----
    s0_ref[...] = jnp.zeros_like(s0_ref)
    s1_ref[...] = jnp.zeros_like(s1_ref)
    sub = lax.broadcasted_iota(jnp.int32, (1, CH, 1), 1)                    # hoisted
    zero_chunk = jnp.zeros((B_BLK, CH, d_inner), f32)                       # hoisted

    @pl.loop(0, n_chunks)
    def _(ci):
        t0 = pl.multiple_of(ci * CH, CH)
        a0 = dA0_ref[:, pl.ds(t0, CH), :]
        a1 = dA1_ref[:, pl.ds(t0, CH), :]
        u0 = dBu0_ref[:, pl.ds(t0, CH), :]
        u1 = dBu1_ref[:, pl.ds(t0, CH), :]
        c0 = cb0_ref[:, pl.ds(t0, CH), :]
        c1 = cb1_ref[:, pl.ds(t0, CH), :]
        s0 = s0_ref[...]
        s1 = s1_ref[...]
        y_chunk = zero_chunk
        for j in range(CH):                                                 # static unroll
            s0 = a0[:, j, :] * s0 + u0[:, j, :]
            s1 = a1[:, j, :] * s1 + u1[:, j, :]
            row = c0[:, j, :] * s0 + c1[:, j, :] * s1                       # C folded into scan
            y_chunk = jnp.where(sub == j, row[:, None, :], y_chunk)
        s0_ref[...] = s0
        s1_ref[...] = s1
        y_ref[:, pl.ds(t0, CH), :] = y_chunk                                # one full-tile store

    # ---- D-skip, gate, out_proj, LayerNorm ----
    y = y_ref[...].reshape(M, d_inner)
    y = y + xc * d_skip_ref[...]
    y = y * (res * jax.nn.sigmoid(res))                                     # gate with SiLU(res)
    out = jnp.dot(y.astype(bf16), w_out_ref[...].astype(bf16),
                  preferred_element_type=f32)                               # (M, out_c)

    mu = jnp.mean(out, axis=-1, keepdims=True)
    var = jnp.mean((out - mu) ** 2, axis=-1, keepdims=True)
    normed = (out - mu) * lax.rsqrt(var + LN_EPS)
    normed = normed * gamma_ref[...] + beta_ref[...]
    out_ref[...] = normed.reshape(B_BLK, L, -1).astype(out_ref.dtype)


def init_params(key, n_channels, out_channels):
    d_model = n_channels
    d_inner = EXPAND * d_model
    n = D_STATE
    dt_rank = math.ceil(d_model / 16)
    ks = jax.random.split(key, 8)
    s = 0.2
    return {
        "w_in_t":  s * jax.random.normal(ks[0], (d_model, 2 * d_inner), jnp.float32),
        "w_conv":  s * jax.random.normal(ks[1], (D_CONV, d_inner), jnp.float32),
        "b_conv":  s * jax.random.normal(ks[2], (1, d_inner), jnp.float32),
        "w_x_t":   s * jax.random.normal(ks[3], (d_inner, dt_rank + 2 * n), jnp.float32),
        "w_dt_t":  s * jax.random.normal(ks[4], (dt_rank, d_inner), jnp.float32),
        "b_dt":    s * jax.random.normal(ks[5], (1, d_inner), jnp.float32),
        "a_log":   jnp.log(jnp.tile(jnp.arange(1, n + 1, dtype=jnp.float32)[None, :],
                                    (d_inner, 1))),
        "d":       jnp.ones((1, d_inner), jnp.float32),
        "w_out_t": s * jax.random.normal(ks[6], (d_inner, out_channels), jnp.float32),
        "ln_gamma": jnp.ones((1, out_channels), jnp.float32),
        "ln_beta":  jnp.zeros((1, out_channels), jnp.float32),
    }


def ssm_cha_forward(x, params):
    b, c, h, w = x.shape
    L = h * w
    D = c
    d_inner = EXPAND * D
    dt_rank = math.ceil(D / 16)
    out_c = params["w_out_t"].shape[1]
    assert D_STATE == 2, "kernel statically unrolls n = d_state = 2"
    assert L % 8 == 0, "h*w must be a multiple of 8 for the chunked scan / tiled reshapes"

    # (b, c, h, w) -> (b, L=h*w, D=c)  [== PyTorch permute(0,2,3,1).flatten(1,2)]
    x_seq = jnp.transpose(x, (0, 2, 3, 1)).reshape(b, L, D).astype(jnp.float32)

    # Host-side one-time parameter prep:
    #   fold dt_proj into x_proj: W_delta = W_x[:, :r] @ W_dt  (exact, f32)
    w_x, w_dt = params["w_x_t"], params["w_dt_t"]
    w_delta = jnp.dot(w_x[:, :dt_rank], w_dt, precision=lax.Precision.HIGHEST)
    w_xf = jnp.concatenate([w_delta, w_x[:, dt_rank:]], axis=1)     # (d_inner, d_inner+2n)
    a_t = jnp.transpose(params["a_log"])                            # (n, d_inner), lane-dense

    B_BLK = b                  # whole batch per grid step -> batched matmul M dimension
    n_blocks = b // B_BLK
    CH = 8
    n_chunks = L // CH

    kernel = functools.partial(_ssm_cha_kernel, B_BLK=B_BLK, L=L, d_inner=d_inner,
                               CH=CH, n_chunks=n_chunks)

    # Grid-invariant weights: whole array resident in VMEM (no per-step re-DMA / double-buffer).
    wspec = pl.BlockSpec(memory_space=pltpu.MemorySpace.VMEM)

    grid_spec = pltpu.PrefetchScalarGridSpec(
        num_scalar_prefetch=0,
        grid=(n_blocks,),
        in_specs=[
            pl.BlockSpec((B_BLK, L, D), lambda i: (i, 0, 0)),
            wspec, wspec, wspec, wspec, wspec, wspec, wspec, wspec, wspec, wspec,
        ],
        out_specs=pl.BlockSpec((B_BLK, L, out_c), lambda i: (i, 0, 0)),
        scratch_shapes=(
            [pltpu.VMEM((B_BLK, L, d_inner), jnp.float32) for _ in range(7)]
            + [pltpu.VMEM((B_BLK, d_inner), jnp.float32) for _ in range(2)]
        ),
    )

    out = pl.pallas_call(
        kernel,
        out_shape=jax.ShapeDtypeStruct((b, L, out_c), jnp.float32),
        grid_spec=grid_spec,
        compiler_params=pltpu.CompilerParams(
            dimension_semantics=("parallel",),            # independent batch blocks (v7x 2 TCs)
            vmem_limit_bytes=32 * 1024 * 1024,
        ),
    )(x_seq, params["w_in_t"], params["w_conv"], params["b_conv"], w_xf,
      params["b_dt"], a_t, params["d"], params["w_out_t"],
      params["ln_gamma"], params["ln_beta"])

    # (b, L, out_c) -> (b, h, w, out_c) -> (b, out_c, h, w)
    return jnp.transpose(out.reshape(b, h, w, out_c), (0, 3, 1, 2))


def ssm_cha_reference(x, params):
    """Pure-JAX reference mirroring the PyTorch SSM_cha forward (mamba-minimal semantics).
    Weight matmuls use bf16 operands + f32 accumulation, matching the kernel's precision policy."""
    b, c, h, w = x.shape
    L, D = h * w, c
    d_inner = EXPAND * D
    n = D_STATE
    r = math.ceil(D / 16)
    bf = lambda t: t.astype(jnp.bfloat16)

    xs = jnp.transpose(x, (0, 2, 3, 1)).reshape(b, L, D).astype(jnp.float32)
    xz = jnp.einsum("bld,de->ble", bf(xs), bf(params["w_in_t"]),
                    preferred_element_type=jnp.float32)
    xp, res = xz[..., :d_inner], xz[..., d_inner:]

    wc = params["w_conv"]
    xp_pad = jnp.pad(xp, ((0, 0), (D_CONV - 1, 0), (0, 0)))
    xc = sum(wc[k][None, None, :] * xp_pad[:, k:k + L, :] for k in range(D_CONV))
    xc = xc + params["b_conv"][0]
    xc = jax.nn.silu(xc)

    x_dbl = jnp.einsum("bld,de->ble", bf(xc), bf(params["w_x_t"]),
                       preferred_element_type=jnp.float32)
    delta_r = x_dbl[..., :r]
    Bm = x_dbl[..., r:r + n]
    Cm = x_dbl[..., r + n:]
    delta = jax.nn.softplus(
        jnp.einsum("blr,rd->bld", bf(delta_r), bf(params["w_dt_t"]),
                   preferred_element_type=jnp.float32) + params["b_dt"][0])

    A = -jnp.exp(params["a_log"])                               # (d_inner, n)
    dA = jnp.exp(delta[..., None] * A[None, None])              # (b, L, d_inner, n)
    dBu = (delta * xc)[..., None] * Bm[:, :, None, :]           # (b, L, d_inner, n)

    def step(state, inp):
        dA_l, dBu_l, C_l = inp
        state = dA_l * state + dBu_l
        return state, jnp.einsum("bdn,bn->bd", state, C_l)

    state0 = jnp.zeros((b, d_inner, n), jnp.float32)
    _, ys = lax.scan(step, state0,
                     (dA.transpose(1, 0, 2, 3), dBu.transpose(1, 0, 2, 3),
                      Cm.transpose(1, 0, 2)))
    y = ys.transpose(1, 0, 2)                                   # (b, L, d_inner)
    y = y + xc * params["d"][0]
    y = y * jax.nn.silu(res)
    out = jnp.einsum("bld,de->ble", bf(y), bf(params["w_out_t"]),
                     preferred_element_type=jnp.float32)

    mu = out.mean(-1, keepdims=True)
    var = ((out - mu) ** 2).mean(-1, keepdims=True)
    out = (out - mu) * lax.rsqrt(var + LN_EPS)
    out = out * params["ln_gamma"][0] + params["ln_beta"][0]
    return jnp.transpose(out.reshape(b, h, w, -1), (0, 3, 1, 2))


if __name__ == "__main__":
    batch, n_channels, hh, ww = 2, 16, 8, 8      # x: (2, 16, 8, 8) -> L = 64, d_model = 16
    out_channels = 32

    key = jax.random.PRNGKey(0)
    k_x, k_p = jax.random.split(key)
    x = jax.random.normal(k_x, (batch, n_channels, hh, ww), jnp.float32)
    params = init_params(k_p, n_channels, out_channels)

    out = jax.block_until_ready(ssm_cha_forward(x, params))
    ref = jax.block_until_ready(ssm_cha_reference(x, params))

    assert out.shape == (batch, out_channels, hh, ww), out.shape
    err = float(jnp.max(jnp.abs(out - ref)))
    assert err < 1e-2, f"max abs error vs reference: {err}"
    print("KERNEL_OK")
</pallas_src>

<mosaic_0001>
module attributes {stable_mosaic.version = 11 : i64} {
  func.func @_ssm_cha_kernel(%arg0: i32, %arg1: memref<2x64x16xf32, #tpu.memory_space<vmem>>, %arg2: memref<16x32xf32, #tpu.memory_space<vmem>>, %arg3: memref<4x16xf32, #tpu.memory_space<vmem>>, %arg4: memref<1x16xf32, #tpu.memory_space<vmem>>, %arg5: memref<16x20xf32, #tpu.memory_space<vmem>>, %arg6: memref<1x16xf32, #tpu.memory_space<vmem>>, %arg7: memref<2x16xf32, #tpu.memory_space<vmem>>, %arg8: memref<1x16xf32, #tpu.memory_space<vmem>>, %arg9: memref<16x32xf32, #tpu.memory_space<vmem>>, %arg10: memref<1x32xf32, #tpu.memory_space<vmem>>, %arg11: memref<1x32xf32, #tpu.memory_space<vmem>>, %arg12: memref<2x64x32xf32, #tpu.memory_space<vmem>>, %arg13: memref<2x64x16xf32, #tpu.memory_space<vmem>>, %arg14: memref<2x64x16xf32, #tpu.memory_space<vmem>>, %arg15: memref<2x64x16xf32, #tpu.memory_space<vmem>>, %arg16: memref<2x64x16xf32, #tpu.memory_space<vmem>>, %arg17: memref<2x64x16xf32, #tpu.memory_space<vmem>>, %arg18: memref<2x64x16xf32, #tpu.memory_space<vmem>>, %arg19: memref<2x64x16xf32, #tpu.memory_space<vmem>>, %arg20: memref<2x16xf32, #tpu.memory_space<vmem>>, %arg21: memref<2x16xf32, #tpu.memory_space<vmem>>) attributes {dimension_semantics = [#tpu.dimension_semantics<parallel>], iteration_bounds = array<i64: 1>, scalar_prefetch = 0 : i64, scratch_operands = 9 : i64, tpu.core_type = #tpu.core_type<tc>, window_params = [{transform_indices = @transform_0, window_bounds = array<i64: 2, 64, 16>}, {pipeline_mode = #tpu.pipeline_mode<synchronous>, transform_indices = @transform_1, window_bounds = array<i64: 16, 32>}, {pipeline_mode = #tpu.pipeline_mode<synchronous>, transform_indices = @transform_2, window_bounds = array<i64: 4, 16>}, {pipeline_mode = #tpu.pipeline_mode<synchronous>, transform_indices = @transform_3, window_bounds = array<i64: 1, 16>}, {pipeline_mode = #tpu.pipeline_mode<synchronous>, transform_indices = @transform_4, window_bounds = array<i64: 16, 20>}, {pipeline_mode = #tpu.pipeline_mode<synchronous>, transform_indices = @transform_5, window_bounds = array<i64: 1, 16>}, {pipeline_mode = #tpu.pipeline_mode<synchronous>, transform_indices = @transform_6, window_bounds = array<i64: 2, 16>}, {pipeline_mode = #tpu.pipeline_mode<synchronous>, transform_indices = @transform_7, window_bounds = array<i64: 1, 16>}, {pipeline_mode = #tpu.pipeline_mode<synchronous>, transform_indices = @transform_8, window_bounds = array<i64: 16, 32>}, {pipeline_mode = #tpu.pipeline_mode<synchronous>, transform_indices = @transform_9, window_bounds = array<i64: 1, 32>}, {pipeline_mode = #tpu.pipeline_mode<synchronous>, transform_indices = @transform_10, window_bounds = array<i64: 1, 32>}, {transform_indices = @transform_11, window_bounds = array<i64: 2, 64, 32>}]} {
    %c0 = arith.constant 0 : index
    %c0_0 = arith.constant 0 : index
    %c0_1 = arith.constant 0 : index
    %0 = vector.load %arg1[%c0, %c0_0, %c0_1] : memref<2x64x16xf32, #tpu.memory_space<vmem>>, vector<2x64x16xf32>
    %1 = vector.shape_cast %0 : vector<2x64x16xf32> to vector<128x16xf32>
    %2 = arith.truncf %1 : vector<128x16xf32> to vector<128x16xbf16>
    %c0_2 = arith.constant 0 : index
    %c0_3 = arith.constant 0 : index
    %3 = vector.load %arg2[%c0_2, %c0_3] : memref<16x32xf32, #tpu.memory_space<vmem>>, vector<16x32xf32>
    %4 = arith.truncf %3 : vector<16x32xf32> to vector<16x32xbf16>
    %cst = arith.constant dense<0.000000e+00> : vector<128x32xf32>
    %5 = tpu.matmul %2, %4, %cst {dimension_numbers = #tpu.dot_dimension_numbers<[1], [0], [0], [1], [0, 0, 1, 1], [], []>} : vector<128x16xbf16>, vector<16x32xbf16>, vector<128x32xf32> -> vector<128x32xf32>
    %6 = vector.extract_strided_slice %5 {offsets = [0, 0], sizes = [128, 16], strides = [1, 1]} : vector<128x32xf32> to vector<128x16xf32>
    %7 = vector.extract_strided_slice %5 {offsets = [0, 16], sizes = [128, 16], strides = [1, 1]} : vector<128x32xf32> to vector<128x16xf32>
    %8 = tpu.iota {dimensions = array<i32: 1>} : vector<2x64x16xi32>
    %9 = vector.shape_cast %8 : vector<2x64x16xi32> to vector<128x16xi32>
    %c0_4 = arith.constant 0 : index
    %c0_5 = arith.constant 0 : index
    %10 = vector.load %arg3[%c0_4, %c0_5] : memref<4x16xf32, #tpu.memory_space<vmem>>, vector<4x16xf32>
    %11 = vector.extract_strided_slice %10 {offsets = [3, 0], sizes = [1, 16], strides = [1, 1]} : vector<4x16xf32> to vector<1x16xf32>
    %12 = vector.shape_cast %11 : vector<1x16xf32> to vector<16xf32>
    %13 = vector.shape_cast %12 : vector<16xf32> to vector<1x16xf32>
    %14 = vector.broadcast %13 : vector<1x16xf32> to vector<128x16xf32>
    %15 = arith.mulf %14, %6 : vector<128x16xf32>
    %c3_i32 = arith.constant 3 : i32
    %16 = vector.broadcast %c3_i32 : i32 to vector<128x16xi32>
    %17 = arith.cmpi sge, %9, %16 : vector<128x16xi32>
    %c3_i32_6 = arith.constant 3 : i32
    %18 = tpu.dynamic_rotate %6 by %c3_i32_6 dim 0 : vector<128x16xf32>, i32 -> vector<128x16xf32>
    %cst_7 = arith.constant 0.000000e+00 : f32
    %19 = vector.broadcast %cst_7 : f32 to vector<128x16xf32>
    %20 = arith.select %17, %18, %19 : vector<128x16xi1>, vector<128x16xf32>
    %21 = vector.extract_strided_slice %10 {offsets = [0, 0], sizes = [1, 16], strides = [1, 1]} : vector<4x16xf32> to vector<1x16xf32>
    %22 = vector.shape_cast %21 : vector<1x16xf32> to vector<16xf32>
    %23 = vector.shape_cast %22 : vector<16xf32> to vector<1x16xf32>
    %24 = vector.broadcast %23 : vector<1x16xf32> to vector<128x16xf32>
    %25 = arith.mulf %24, %20 : vector<128x16xf32>
    %26 = arith.addf %15, %25 : vector<128x16xf32>
    %c2_i32 = arith.constant 2 : i32
    %27 = vector.broadcast %c2_i32 : i32 to vector<128x16xi32>
    %28 = arith.cmpi sge, %9, %27 : vector<128x16xi32>
    %c2_i32_8 = arith.constant 2 : i32
    %29 = tpu.dynamic_rotate %6 by %c2_i32_8 dim 0 : vector<128x16xf32>, i32 -> vector<128x16xf32>
    %cst_9 = arith.constant 0.000000e+00 : f32
    %30 = vector.broadcast %cst_9 : f32 to vector<128x16xf32>
    %31 = arith.select %28, %29, %30 : vector<128x16xi1>, vector<128x16xf32>
    %32 = vector.extract_strided_slice %10 {offsets = [1, 0], sizes = [1, 16], strides = [1, 1]} : vector<4x16xf32> to vector<1x16xf32>
    %33 = vector.shape_cast %32 : vector<1x16xf32> to vector<16xf32>
    %34 = vector.shape_cast %33 : vector<16xf32> to vector<1x16xf32>
    %35 = vector.broadcast %34 : vector<1x16xf32> to vector<128x16xf32>
    %36 = arith.mulf %35, %31 : vector<128x16xf32>
    %37 = arith.addf %26, %36 : vector<128x16xf32>
    %c1_i32 = arith.constant 1 : i32
    %38 = vector.broadcast %c1_i32 : i32 to vector<128x16xi32>
    %39 = arith.cmpi sge, %9, %38 : vector<128x16xi32>
    %c1_i32_10 = arith.constant 1 : i32
    %40 = tpu.dynamic_rotate %6 by %c1_i32_10 dim 0 : vector<128x16xf32>, i32 -> vector<128x16xf32>
    %cst_11 = arith.constant 0.000000e+00 : f32
    %41 = vector.broadcast %cst_11 : f32 to vector<128x16xf32>
    %42 = arith.select %39, %40, %41 : vector<128x16xi1>, vector<128x16xf32>
    %43 = vector.extract_strided_slice %10 {offsets = [2, 0], sizes = [1, 16], strides = [1, 1]} : vector<4x16xf32> to vector<1x16xf32>
    %44 = vector.shape_cast %43 : vector<1x16xf32> to vector<16xf32>
    %45 = vector.shape_cast %44 : vector<16xf32> to vector<1x16xf32>
    %46 = vector.broadcast %45 : vector<1x16xf32> to vector<128x16xf32>
    %47 = arith.mulf %46, %42 : vector<128x16xf32>
    %48 = arith.addf %37, %47 : vector<128x16xf32>
    %c0_12 = arith.constant 0 : index
    %c0_13 = arith.constant 0 : index
    %49 = vector.load %arg4[%c0_12, %c0_13] : memref<1x16xf32, #tpu.memory_space<vmem>>, vector<1x16xf32>
    %50 = vector.broadcast %49 : vector<1x16xf32> to vector<128x16xf32>
    %51 = arith.addf %48, %50 : vector<128x16xf32>
    %52 = arith.negf %51 : vector<128x16xf32>
    %53 = math.exp %52 : vector<128x16xf32>
    %cst_14 = arith.constant 1.000000e+00 : f32
    %54 = vector.broadcast %cst_14 : f32 to vector<128x16xf32>
    %55 = arith.addf %54, %53 : vector<128x16xf32>
    %56 = arith.divf %54, %55 : vector<128x16xf32>
    %57 = arith.mulf %51, %56 : vector<128x16xf32>
    %58 = arith.truncf %57 : vector<128x16xf32> to vector<128x16xbf16>
    %c0_15 = arith.constant 0 : index
    %c0_16 = arith.constant 0 : index
    %59 = vector.load %arg5[%c0_15, %c0_16] : memref<16x20xf32, #tpu.memory_space<vmem>>, vector<16x20xf32>
    %60 = arith.truncf %59 : vector<16x20xf32> to vector<16x20xbf16>
    %cst_17 = arith.constant dense<0.000000e+00> : vector<128x20xf32>
    %61 = tpu.matmul %58, %60, %cst_17 {dimension_numbers = #tpu.dot_dimension_numbers<[1], [0], [0], [1], [0, 0, 1, 1], [], []>} : vector<128x16xbf16>, vector<16x20xbf16>, vector<128x20xf32> -> vector<128x20xf32>
    %62 = vector.extract_strided_slice %61 {offsets = [0, 0], sizes = [128, 16], strides = [1, 1]} : vector<128x20xf32> to vector<128x16xf32>
    %c0_18 = arith.constant 0 : index
    %c0_19 = arith.constant 0 : index
    %63 = vector.load %arg6[%c0_18, %c0_19] : memref<1x16xf32, #tpu.memory_space<vmem>>, vector<1x16xf32>
    %64 = vector.broadcast %63 : vector<1x16xf32> to vector<128x16xf32>
    %65 = arith.addf %62, %64 : vector<128x16xf32>
    %cst_20 = arith.constant 0.000000e+00 : f32
    %66 = vector.broadcast %cst_20 : f32 to vector<128x16xf32>
    %67 = arith.maximumf %65, %66 : vector<128x16xf32>
    %68 = vector.broadcast %cst_20 : f32 to vector<128x16xf32>
    %69 = arith.subf %65, %68 : vector<128x16xf32>
    %70 = arith.cmpf one, %69, %69 : vector<128x16xf32>
    %71 = vector.broadcast %cst_20 : f32 to vector<128x16xf32>
    %72 = arith.addf %65, %71 : vector<128x16xf32>
    %73 = math.absf %69 : vector<128x16xf32>
    %cst_21 = arith.constant 0.000000e+00 : f32
    %74 = vector.broadcast %cst_21 : f32 to vector<128x16xf32>
    %75 = arith.subf %74, %73 : vector<128x16xf32>
    %76 = math.exp %75 : vector<128x16xf32>
    %77 = math.log1p %76 : vector<128x16xf32>
    %78 = arith.addf %67, %77 : vector<128x16xf32>
    %79 = arith.select %70, %72, %78 : vector<128x16xi1>, vector<128x16xf32>
    %80 = arith.mulf %79, %57 : vector<128x16xf32>
    %c0_22 = arith.constant 0 : index
    %c0_23 = arith.constant 0 : index
    %81 = vector.load %arg7[%c0_22, %c0_23] : memref<2x16xf32, #tpu.memory_space<vmem>>, vector<2x16xf32>
    %82 = math.exp %81 : vector<2x16xf32>
    %cst_24 = arith.constant 0.000000e+00 : f32
    %83 = vector.broadcast %cst_24 : f32 to vector<2x16xf32>
    %84 = arith.subf %83, %82 : vector<2x16xf32>
    %85 = vector.extract_strided_slice %84 {offsets = [0, 0], sizes = [1, 16], strides = [1, 1]} : vector<2x16xf32> to vector<1x16xf32>
    %86 = vector.shape_cast %85 : vector<1x16xf32> to vector<16xf32>
    %87 = vector.shape_cast %86 : vector<16xf32> to vector<1x16xf32>
    %88 = vector.broadcast %87 : vector<1x16xf32> to vector<128x16xf32>
    %89 = arith.mulf %79, %88 : vector<128x16xf32>
    %90 = math.exp %89 : vector<128x16xf32>
    %91 = vector.shape_cast %90 : vector<128x16xf32> to vector<2x64x16xf32>
    %c0_25 = arith.constant 0 : index
    %c0_26 = arith.constant 0 : index
    %c0_27 = arith.constant 0 : index
    %92 = vector.load %arg13[%c0_25, %c0_26, %c0_27] : memref<2x64x16xf32, #tpu.memory_space<vmem>>, vector<2x64x16xf32>
    tpu.vector_store %arg13[%c0_25, %c0_26, %c0_27], %91 {strides = array<i32>} : memref<2x64x16xf32, #tpu.memory_space<vmem>>, vector<2x64x16xf32>,
    %93 = vector.extract_strided_slice %84 {offsets = [1, 0], sizes = [1, 16], strides = [1, 1]} : vector<2x16xf32> to vector<1x16xf32>
    %94 = vector.shape_cast %93 : vector<1x16xf32> to vector<16xf32>
    %95 = vector.shape_cast %94 : vector<16xf32> to vector<1x16xf32>
    %96 = vector.broadcast %95 : vector<1x16xf32> to vector<128x16xf32>
    %97 = arith.mulf %79, %96 : vector<128x16xf32>
    %98 = math.exp %97 : vector<128x16xf32>
    %99 = vector.shape_cast %98 : vector<128x16xf32> to vector<2x64x16xf32>
    %c0_28 = arith.constant 0 : index
    %c0_29 = arith.constant 0 : index
    %c0_30 = arith.constant 0 : index
    %100 = vector.load %arg14[%c0_28, %c0_29, %c0_30] : memref<2x64x16xf32, #tpu.memory_space<vmem>>, vector<2x64x16xf32>
    tpu.vector_store %arg14[%c0_28, %c0_29, %c0_30], %99 {strides = array<i32>} : memref<2x64x16xf32, #tpu.memory_space<vmem>>, vector<2x64x16xf32>,
    %101 = vector.extract_strided_slice %61 {offsets = [0, 16], sizes = [128, 1], strides = [1, 1]} : vector<128x20xf32> to vector<128x1xf32>
    %102 = vector.broadcast %101 : vector<128x1xf32> to vector<128x16xf32>
    %103 = arith.mulf %80, %102 : vector<128x16xf32>
    %104 = vector.shape_cast %103 : vector<128x16xf32> to vector<2x64x16xf32>
    %c0_31 = arith.constant 0 : index
    %c0_32 = arith.constant 0 : index
    %c0_33 = arith.constant 0 : index
    %105 = vector.load %arg15[%c0_31, %c0_32, %c0_33] : memref<2x64x16xf32, #tpu.memory_space<vmem>>, vector<2x64x16xf32>
    tpu.vector_store %arg15[%c0_31, %c0_32, %c0_33], %104 {strides = array<i32>} : memref<2x64x16xf32, #tpu.memory_space<vmem>>, vector<2x64x16xf32>,
    %106 = vector.extract_strided_slice %61 {offsets = [0, 17], sizes = [128, 1], strides = [1, 1]} : vector<128x20xf32> to vector<128x1xf32>
    %107 = vector.broadcast %106 : vector<128x1xf32> to vector<128x16xf32>
    %108 = arith.mulf %80, %107 : vector<128x16xf32>
    %109 = vector.shape_cast %108 : vector<128x16xf32> to vector<2x64x16xf32>
    %c0_34 = arith.constant 0 : index
    %c0_35 = arith.constant 0 : index
    %c0_36 = arith.constant 0 : index
    %110 = vector.load %arg16[%c0_34, %c0_35, %c0_36] : memref<2x64x16xf32, #tpu.memory_space<vmem>>, vector<2x64x16xf32>
    tpu.vector_store %arg16[%c0_34, %c0_35, %c0_36], %109 {strides = array<i32>} : memref<2x64x16xf32, #tpu.memory_space<vmem>>, vector<2x64x16xf32>,
    %111 = vector.extract_strided_slice %61 {offsets = [0, 18], sizes = [128, 1], strides = [1, 1]} : vector<128x20xf32> to vector<128x1xf32>
    %112 = vector.shape_cast %111 : vector<128x1xf32> to vector<128x1xf32>
    %113 = vector.broadcast %112 : vector<128x1xf32> to vector<128x16xf32>
    %114 = vector.shape_cast %113 : vector<128x16xf32> to vector<2x64x16xf32>
    %c0_37 = arith.constant 0 : index
    %c0_38 = arith.constant 0 : index
    %c0_39 = arith.constant 0 : index
    %115 = vector.load %arg17[%c0_37, %c0_38, %c0_39] : memref<2x64x16xf32, #tpu.memory_space<vmem>>, vector<2x64x16xf32>
    tpu.vector_store %arg17[%c0_37, %c0_38, %c0_39], %114 {strides = array<i32>} : memref<2x64x16xf32, #tpu.memory_space<vmem>>, vector<2x64x16xf32>,
    %116 = vector.extract_strided_slice %61 {offsets = [0, 19], sizes = [128, 1], strides = [1, 1]} : vector<128x20xf32> to vector<128x1xf32>
    %117 = vector.shape_cast %116 : vector<128x1xf32> to vector<128x1xf32>
    %118 = vector.broadcast %117 : vector<128x1xf32> to vector<128x16xf32>
    %119 = vector.shape_cast %118 : vector<128x16xf32> to vector<2x64x16xf32>
    %c0_40 = arith.constant 0 : index
    %c0_41 = arith.constant 0 : index
    %c0_42 = arith.constant 0 : index
    %120 = vector.load %arg18[%c0_40, %c0_41, %c0_42] : memref<2x64x16xf32, #tpu.memory_space<vmem>>, vector<2x64x16xf32>
    tpu.vector_store %arg18[%c0_40, %c0_41, %c0_42], %119 {strides = array<i32>} : memref<2x64x16xf32, #tpu.memory_space<vmem>>, vector<2x64x16xf32>,
    %cst_43 = arith.constant 0.000000e+00 : f32
    %121 = vector.broadcast %cst_43 : f32 to vector<2x16xf32>
    %c0_44 = arith.constant 0 : index
    %c0_45 = arith.constant 0 : index
    %122 = vector.load %arg20[%c0_44, %c0_45] : memref<2x16xf32, #tpu.memory_space<vmem>>, vector<2x16xf32>
    tpu.vector_store %arg20[%c0_44, %c0_45], %121 {strides = array<i32>} : memref<2x16xf32, #tpu.memory_space<vmem>>, vector<2x16xf32>,
    %cst_46 = arith.constant 0.000000e+00 : f32
    %123 = vector.broadcast %cst_46 : f32 to vector<2x16xf32>
    %c0_47 = arith.constant 0 : index
    %c0_48 = arith.constant 0 : index
    %124 = vector.load %arg21[%c0_47, %c0_48] : memref<2x16xf32, #tpu.memory_space<vmem>>, vector<2x16xf32>
    tpu.vector_store %arg21[%c0_47, %c0_48], %123 {strides = array<i32>} : memref<2x16xf32, #tpu.memory_space<vmem>>, vector<2x16xf32>,
    %125 = tpu.iota {dimensions = array<i32: 1>} : vector<1x8x1xi32>
    %cst_49 = arith.constant 0.000000e+00 : f32
    %126 = vector.broadcast %cst_49 : f32 to vector<2x8x16xf32>
    %c0_i32 = arith.constant 0 : i32
    %c8_i32 = arith.constant 8 : i32
    %127 = arith.addi %c0_i32, %c8_i32 : i32
    %c1_i32_50 = arith.constant 1 : i32
    scf.for %arg22 = %c0_i32 to %127 step %c1_i32_50  : i32 {
      %c1_i32_73 = arith.constant 1 : i32
      %171 = arith.muli %arg22, %c1_i32_73 : i32
      %c0_i32_74 = arith.constant 0 : i32
      %172 = arith.addi %c0_i32_74, %171 : i32
      %c8_i32_75 = arith.constant 8 : i32
      %173 = arith.muli %172, %c8_i32_75 : i32
      %174 = tpu.assume_multiple %173, 8 : i32
      %c0_76 = arith.constant 0 : index
      %175 = arith.index_cast %174 : i32 to index
      %c0_77 = arith.constant 0 : index
      %176 = vector.load %arg13[%c0_76, %175, %c0_77] : memref<2x64x16xf32, #tpu.memory_space<vmem>>, vector<2x8x16xf32>
      %c0_78 = arith.constant 0 : index
      %177 = arith.index_cast %174 : i32 to index
      %c0_79 = arith.constant 0 : index
      %178 = vector.load %arg14[%c0_78, %177, %c0_79] : memref<2x64x16xf32, #tpu.memory_space<vmem>>, vector<2x8x16xf32>
      %c0_80 = arith.constant 0 : index
      %179 = arith.index_cast %174 : i32 to index
      %c0_81 = arith.constant 0 : index
      %180 = vector.load %arg15[%c0_80, %179, %c0_81] : memref<2x64x16xf32, #tpu.memory_space<vmem>>, vector<2x8x16xf32>
      %c0_82 = arith.constant 0 : index
      %181 = arith.index_cast %174 : i32 to index
      %c0_83 = arith.constant 0 : index
      %182 = vector.load %arg16[%c0_82, %181, %c0_83] : memref<2x64x16xf32, #tpu.memory_space<vmem>>, vector<2x8x16xf32>
      %c0_84 = arith.constant 0 : index
      %183 = arith.index_cast %174 : i32 to index
      %c0_85 = arith.constant 0 : index
      %184 = vector.load %arg17[%c0_84, %183, %c0_85] : memref<2x64x16xf32, #tpu.memory_space<vmem>>, vector<2x8x16xf32>
      %c0_86 = arith.constant 0 : index
      %185 = arith.index_cast %174 : i32 to index
      %c0_87 = arith.constant 0 : index
      %186 = vector.load %arg18[%c0_86, %185, %c0_87] : memref<2x64x16xf32, #tpu.memory_space<vmem>>, vector<2x8x16xf32>
      %c0_88 = arith.constant 0 : index
      %c0_89 = arith.constant 0 : index
      %187 = vector.load %arg20[%c0_88, %c0_89] : memref<2x16xf32, #tpu.memory_space<vmem>>, vector<2x16xf32>
      %c0_90 = arith.constant 0 : index
      %c0_91 = arith.constant 0 : index
      %188 = vector.load %arg21[%c0_90, %c0_91] : memref<2x16xf32, #tpu.memory_space<vmem>>, vector<2x16xf32>
      %189 = vector.extract_strided_slice %176 {offsets = [0, 0, 0], sizes = [2, 1, 16], strides = [1, 1, 1]} : vector<2x8x16xf32> to vector<2x1x16xf32>
      %190 = vector.shape_cast %189 : vector<2x1x16xf32> to vector<2x16xf32>
      %191 = arith.mulf %190, %187 : vector<2x16xf32>
      %192 = vector.extract_strided_slice %180 {offsets = [0, 0, 0], sizes = [2, 1, 16], strides = [1, 1, 1]} : vector<2x8x16xf32> to vector<2x1x16xf32>
      %193 = vector.shape_cast %192 : vector<2x1x16xf32> to vector<2x16xf32>
      %194 = arith.addf %191, %193 : vector<2x16xf32>
      %195 = vector.extract_strided_slice %178 {offsets = [0, 0, 0], sizes = [2, 1, 16], strides = [1, 1, 1]} : vector<2x8x16xf32> to vector<2x1x16xf32>
      %196 = vector.shape_cast %195 : vector<2x1x16xf32> to vector<2x16xf32>
      %197 = arith.mulf %196, %188 : vector<2x16xf32>
      %198 = vector.extract_strided_slice %182 {offsets = [0, 0, 0], sizes = [2, 1, 16], strides = [1, 1, 1]} : vector<2x8x16xf32> to vector<2x1x16xf32>
      %199 = vector.shape_cast %198 : vector<2x1x16xf32> to vector<2x16xf32>
      %200 = arith.addf %197, %199 : vector<2x16xf32>
      %201 = vector.extract_strided_slice %184 {offsets = [0, 0, 0], sizes = [2, 1, 16], strides = [1, 1, 1]} : vector<2x8x16xf32> to vector<2x1x16xf32>
      %202 = vector.shape_cast %201 : vector<2x1x16xf32> to vector<2x16xf32>
      %203 = arith.mulf %202, %194 : vector<2x16xf32>
      %204 = vector.extract_strided_slice %186 {offsets = [0, 0, 0], sizes = [2, 1, 16], strides = [1, 1, 1]} : vector<2x8x16xf32> to vector<2x1x16xf32>
      %205 = vector.shape_cast %204 : vector<2x1x16xf32> to vector<2x16xf32>
      %206 = arith.mulf %205, %200 : vector<2x16xf32>
      %207 = arith.addf %203, %206 : vector<2x16xf32>
      %c0_i32_92 = arith.constant 0 : i32
      %208 = vector.broadcast %c0_i32_92 : i32 to vector<1x8x1xi32>
      %209 = arith.cmpi eq, %125, %208 : vector<1x8x1xi32>
      %210 = vector.shape_cast %207 : vector<2x16xf32> to vector<2x1x16xf32>
      %211 = vector.shape_cast %209 : vector<1x8x1xi1> to vector<1x8x1xi1>
      %212 = vector.broadcast %211 : vector<1x8x1xi1> to vector<2x8x16xi1>
      %213 = vector.shape_cast %210 : vector<2x1x16xf32> to vector<2x1x16xf32>
      %214 = vector.broadcast %213 : vector<2x1x16xf32> to vector<2x8x16xf32>
      %215 = arith.select %212, %214, %126 : vector<2x8x16xi1>, vector<2x8x16xf32>
      %216 = vector.extract_strided_slice %176 {offsets = [0, 1, 0], sizes = [2, 1, 16], strides = [1, 1, 1]} : vector<2x8x16xf32> to vector<2x1x16xf32>
      %217 = vector.shape_cast %216 : vector<2x1x16xf32> to vector<2x16xf32>
      %218 = arith.mulf %217, %194 : vector<2x16xf32>
      %219 = vector.extract_strided_slice %180 {offsets = [0, 1, 0], sizes = [2, 1, 16], strides = [1, 1, 1]} : vector<2x8x16xf32> to vector<2x1x16xf32>
      %220 = vector.shape_cast %219 : vector<2x1x16xf32> to vector<2x16xf32>
      %221 = arith.addf %218, %220 : vector<2x16xf32>
      %222 = vector.extract_strided_slice %178 {offsets = [0, 1, 0], sizes = [2, 1, 16], strides = [1, 1, 1]} : vector<2x8x16xf32> to vector<2x1x16xf32>
      %223 = vector.shape_cast %222 : vector<2x1x16xf32> to vector<2x16xf32>
      %224 = arith.mulf %223, %200 : vector<2x16xf32>
      %225 = vector.extract_strided_slice %182 {offsets = [0, 1, 0], sizes = [2, 1, 16], strides = [1, 1, 1]} : vector<2x8x16xf32> to vector<2x1x16xf32>
      %226 = vector.shape_cast %225 : vector<2x1x16xf32> to vector<2x16xf32>
      %227 = arith.addf %224, %226 : vector<2x16xf32>
      %228 = vector.extract_strided_slice %184 {offsets = [0, 1, 0], sizes = [2, 1, 16], strides = [1, 1, 1]} : vector<2x8x16xf32> to vector<2x1x16xf32>
      %229 = vector.shape_cast %228 : vector<2x1x16xf32> to vector<2x16xf32>
      %230 = arith.mulf %229, %221 : vector<2x16xf32>
      %231 = vector.extract_strided_slice %186 {offsets = [0, 1, 0], sizes = [2, 1, 16], strides = [1, 1, 1]} : vector<2x8x16xf32> to vector<2x1x16xf32>
      %232 = vector.shape_cast %231 : vector<2x1x16xf32> to vector<2x16xf32>
      %233 = arith.mulf %232, %227 : vector<2x16xf32>
      %234 = arith.addf %230, %233 : vector<2x16xf32>
      %c1_i32_93 = arith.constant 1 : i32
      %235 = vector.broadcast %c1_i32_93 : i32 to vector<1x8x1xi32>
      %236 = arith.cmpi eq, %125, %235 : vector<1x8x1xi32>
      %237 = vector.shape_cast %234 : vector<2x16xf32> to vector<2x1x16xf32>
      %238 = vector.shape_cast %236 : vector<1x8x1xi1> to vector<1x8x1xi1>
      %239 = vector.broadcast %238 : vector<1x8x1xi1> to vector<2x8x16xi1>
      %240 = vector.shape_cast %237 : vector<2x1x16xf32> to vector<2x1x16xf32>
      %241 = vector.broadcast %240 : vector<2x1x16xf32> to vector<2x8x16xf32>
      %242 = arith.select %239, %241, %215 : vector<2x8x16xi1>, vector<2x8x16xf32>
      %243 = vector.extract_strided_slice %176 {offsets = [0, 2, 0], sizes = [2, 1, 16], strides = [1, 1, 1]} : vector<2x8x16xf32> to vector<2x1x16xf32>
      %244 = vector.shape_cast %243 : vector<2x1x16xf32> to vector<2x16xf32>
      %245 = arith.mulf %244, %221 : vector<2x16xf32>
      %246 = vector.extract_strided_slice %180 {offsets = [0, 2, 0], sizes = [2, 1, 16], strides = [1, 1, 1]} : vector<2x8x16xf32> to vector<2x1x16xf32>
      %247 = vector.shape_cast %246 : vector<2x1x16xf32> to vector<2x16xf32>
      %248 = arith.addf %245, %247 : vector<2x16xf32>
      %249 = vector.extract_strided_slice %178 {offsets = [0, 2, 0], sizes = [2, 1, 16], strides = [1, 1, 1]} : vector<2x8x16xf32> to vector<2x1x16xf32>
      %250 = vector.shape_cast %249 : vector<2x1x16xf32> to vector<2x16xf32>
      %251 = arith.mulf %250, %227 : vector<2x16xf32>
      %252 = vector.extract_strided_slice %182 {offsets = [0, 2, 0], sizes = [2, 1, 16], strides = [1, 1, 1]} : vector<2x8x16xf32> to vector<2x1x16xf32>
      %253 = vector.shape_cast %252 : vector<2x1x16xf32> to vector<2x16xf32>
      %254 = arith.addf %251, %253 : vector<2x16xf32>
      %255 = vector.extract_strided_slice %184 {offsets = [0, 2, 0], sizes = [2, 1, 16], strides = [1, 1, 1]} : vector<2x8x16xf32> to vector<2x1x16xf32>
      %256 = vector.shape_cast %255 : vector<2x1x16xf32> to vector<2x16xf32>
      %257 = arith.mulf %256, %248 : vector<2x16xf32>
      %258 = vector.extract_strided_slice %186 {offsets = [0, 2, 0], sizes = [2, 1, 16], strides = [1, 1, 1]} : vector<2x8x16xf32> to vector<2x1x16xf32>
      %259 = vector.shape_cast %258 : vector<2x1x16xf32> to vector<2x16xf32>
      %260 = arith.mulf %259, %254 : vector<2x16xf32>
      %261 = arith.addf %257, %260 : vector<2x16xf32>
      %c2_i32_94 = arith.constant 2 : i32
      %262 = vector.broadcast %c2_i32_94 : i32 to vector<1x8x1xi32>
      %263 = arith.cmpi eq, %125, %262 : vector<1x8x1xi32>
      %264 = vector.shape_cast %261 : vector<2x16xf32> to vector<2x1x16xf32>
      %265 = vector.shape_cast %263 : vector<1x8x1xi1> to vector<1x8x1xi1>
      %266 = vector.broadcast %265 : vector<1x8x1xi1> to vector<2x8x16xi1>
      %267 = vector.shape_cast %264 : vector<2x1x16xf32> to vector<2x1x16xf32>
      %268 = vector.broadcast %267 : vector<2x1x16xf32> to vector<2x8x16xf32>
      %269 = arith.select %266, %268, %242 : vector<2x8x16xi1>, vector<2x8x16xf32>
      %270 = vector.extract_strided_slice %176 {offsets = [0, 3, 0], sizes = [2, 1, 16], strides = [1, 1, 1]} : vector<2x8x16xf32> to vector<2x1x16xf32>
      %271 = vector.shape_cast %270 : vector<2x1x16xf32> to vector<2x16xf32>
      %272 = arith.mulf %271, %248 : vector<2x16xf32>
      %273 = vector.extract_strided_slice %180 {offsets = [0, 3, 0], sizes = [2, 1, 16], strides = [1, 1, 1]} : vector<2x8x16xf32> to vector<2x1x16xf32>
      %274 = vector.shape_cast %273 : vector<2x1x16xf32> to vector<2x16xf32>
      %275 = arith.addf %272, %274 : vector<2x16xf32>
      %276 = vector.extract_strided_slice %178 {offsets = [0, 3, 0], sizes = [2, 1, 16], strides = [1, 1, 1]} : vector<2x8x16xf32> to vector<2x1x16xf32>
      %277 = vector.shape_cast %276 : vector<2x1x16xf32> to vector<2x16xf32>
      %278 = arith.mulf %277, %254 : vector<2x16xf32>
      %279 = vector.extract_strided_slice %182 {offsets = [0, 3, 0], sizes = [2, 1, 16], strides = [1, 1, 1]} : vector<2x8x16xf32> to vector<2x1x16xf32>
      %280 = vector.shape_cast %279 : vector<2x1x16xf32> to vector<2x16xf32>
      %281 = arith.addf %278, %280 : vector<2x16xf32>
      %282 = vector.extract_strided_slice %184 {offsets = [0, 3, 0], sizes = [2, 1, 16], strides = [1, 1, 1]} : vector<2x8x16xf32> to vector<2x1x16xf32>
      %283 = vector.shape_cast %282 : vector<2x1x16xf32> to vector<2x16xf32>
      %284 = arith.mulf %283, %275 : vector<2x16xf32>
      %285 = vector.extract_strided_slice %186 {offsets = [0, 3, 0], sizes = [2, 1, 16], strides = [1, 1, 1]} : vector<2x8x16xf32> to vector<2x1x16xf32>
      %286 = vector.shape_cast %285 : vector<2x1x16xf32> to vector<2x16xf32>
      %287 = arith.mulf %286, %281 : vector<2x16xf32>
      %288 = arith.addf %284, %287 : vector<2x16xf32>
      %c3_i32_95 = arith.constant 3 : i32
      %289 = vector.broadcast %c3_i32_95 : i32 to vector<1x8x1xi32>
      %290 = arith.cmpi eq, %125, %289 : vector<1x8x1xi32>
      %291 = vector.shape_cast %288 : vector<2x16xf32> to vector<2x1x16xf32>
      %292 = vector.shape_cast %290 : vector<1x8x1xi1> to vector<1x8x1xi1>
      %293 = vector.broadcast %292 : vector<1x8x1xi1> to vector<2x8x16xi1>
      %294 = vector.shape_cast %291 : vector<2x1x16xf32> to vector<2x1x16xf32>
      %295 = vector.broadcast %294 : vector<2x1x16xf32> to vector<2x8x16xf32>
      %296 = arith.select %293, %295, %269 : vector<2x8x16xi1>, vector<2x8x16xf32>
      %297 = vector.extract_strided_slice %176 {offsets = [0, 4, 0], sizes = [2, 1, 16], strides = [1, 1, 1]} : vector<2x8x16xf32> to vector<2x1x16xf32>
      %298 = vector.shape_cast %297 : vector<2x1x16xf32> to vector<2x16xf32>
      %299 = arith.mulf %298, %275 : vector<2x16xf32>
      %300 = vector.extract_strided_slice %180 {offsets = [0, 4, 0], sizes = [2, 1, 16], strides = [1, 1, 1]} : vector<2x8x16xf32> to vector<2x1x16xf32>
      %301 = vector.shape_cast %300 : vector<2x1x16xf32> to vector<2x16xf32>
      %302 = arith.addf %299, %301 : vector<2x16xf32>
      %303 = vector.extract_strided_slice %178 {offsets = [0, 4, 0], sizes = [2, 1, 16], strides = [1, 1, 1]} : vector<2x8x16xf32> to vector<2x1x16xf32>
      %304 = vector.shape_cast %303 : vector<2x1x16xf32> to vector<2x16xf32>
      %305 = arith.mulf %304, %281 : vector<2x16xf32>
      %306 = vector.extract_strided_slice %182 {offsets = [0, 4, 0], sizes = [2, 1, 16], strides = [1, 1, 1]} : vector<2x8x16xf32> to vector<2x1x16xf32>
      %307 = vector.shape_cast %306 : vector<2x1x16xf32> to vector<2x16xf32>
      %308 = arith.addf %305, %307 : vector<2x16xf32>
      %309 = vector.extract_strided_slice %184 {offsets = [0, 4, 0], sizes = [2, 1, 16], strides = [1, 1, 1]} : vector<2x8x16xf32> to vector<2x1x16xf32>
      %310 = vector.shape_cast %309 : vector<2x1x16xf32> to vector<2x16xf32>
      %311 = arith.mulf %310, %302 : vector<2x16xf32>
      %312 = vector.extract_strided_slice %186 {offsets = [0, 4, 0], sizes = [2, 1, 16], strides = [1, 1, 1]} : vector<2x8x16xf32> to vector<2x1x16xf32>
      %313 = vector.shape_cast %312 : vector<2x1x16xf32> to vector<2x16xf32>
      %314 = arith.mulf %313, %308 : vector<2x16xf32>
      %315 = arith.addf %311, %314 : vector<2x16xf32>
      %c4_i32 = arith.constant 4 : i32
      %316 = vector.broadcast %c4_i32 : i32 to vector<1x8x1xi32>
      %317 = arith.cmpi eq, %125, %316 : vector<1x8x1xi32>
      %318 = vector.shape_cast %315 : vector<2x16xf32> to vector<2x1x16xf32>
      %319 = vector.shape_cast %317 : vector<1x8x1xi1> to vector<1x8x1xi1>
      %320 = vector.broadcast %319 : vector<1x8x1xi1> to vector<2x8x16xi1>
      %321 = vector.shape_cast %318 : vector<2x1x16xf32> to vector<2x1x16xf32>
      %322 = vector.broadcast %321 : vector<2x1x16xf32> to vector<2x8x16xf32>
      %323 = arith.select %320, %322, %296 : vector<2x8x16xi1>, vector<2x8x16xf32>
      %324 = vector.extract_strided_slice %176 {offsets = [0, 5, 0], sizes = [2, 1, 16], strides = [1, 1, 1]} : vector<2x8x16xf32> to vector<2x1x16xf32>
      %325 = vector.shape_cast %324 : vector<2x1x16xf32> to vector<2x16xf32>
      %326 = arith.mulf %325, %302 : vector<2x16xf32>
      %327 = vector.extract_strided_slice %180 {offsets = [0, 5, 0], sizes = [2, 1, 16], strides = [1, 1, 1]} : vector<2x8x16xf32> to vector<2x1x16xf32>
      %328 = vector.shape_cast %327 : vector<2x1x16xf32> to vector<2x16xf32>
      %329 = arith.addf %326, %328 : vector<2x16xf32>
      %330 = vector.extract_strided_slice %178 {offsets = [0, 5, 0], sizes = [2, 1, 16], strides = [1, 1, 1]} : vector<2x8x16xf32> to vector<2x1x16xf32>
      %331 = vector.shape_cast %330 : vector<2x1x16xf32> to vector<2x16xf32>
      %332 = arith.mulf %331, %308 : vector<2x16xf32>
      %333 = vector.extract_strided_slice %182 {offsets = [0, 5, 0], sizes = [2, 1, 16], strides = [1, 1, 1]} : vector<2x8x16xf32> to vector<2x1x16xf32>
      %334 = vector.shape_cast %333 : vector<2x1x16xf32> to vector<2x16xf32>
      %335 = arith.addf %332, %334 : vector<2x16xf32>
      %336 = vector.extract_strided_slice %184 {offsets = [0, 5, 0], sizes = [2, 1, 16], strides = [1, 1, 1]} : vector<2x8x16xf32> to vector<2x1x16xf32>
      %337 = vector.shape_cast %336 : vector<2x1x16xf32> to vector<2x16xf32>
      %338 = arith.mulf %337, %329 : vector<2x16xf32>
      %339 = vector.extract_strided_slice %186 {offsets = [0, 5, 0], sizes = [2, 1, 16], strides = [1, 1, 1]} : vector<2x8x16xf32> to vector<2x1x16xf32>
      %340 = vector.shape_cast %339 : vector<2x1x16xf32> to vector<2x16xf32>
      %341 = arith.mulf %340, %335 : vector<2x16xf32>
      %342 = arith.addf %338, %341 : vector<2x16xf32>
      %c5_i32 = arith.constant 5 : i32
      %343 = vector.broadcast %c5_i32 : i32 to vector<1x8x1xi32>
      %344 = arith.cmpi eq, %125, %343 : vector<1x8x1xi32>
      %345 = vector.shape_cast %342 : vector<2x16xf32> to vector<2x1x16xf32>
      %346 = vector.shape_cast %344 : vector<1x8x1xi1> to vector<1x8x1xi1>
      %347 = vector.broadcast %346 : vector<1x8x1xi1> to vector<2x8x16xi1>
      %348 = vector.shape_cast %345 : vector<2x1x16xf32> to vector<2x1x16xf32>
      %349 = vector.broadcast %348 : vector<2x1x16xf32> to vector<2x8x16xf32>
      %350 = arith.select %347, %349, %323 : vector<2x8x16xi1>, vector<2x8x16xf32>
      %351 = vector.extract_strided_slice %176 {offsets = [0, 6, 0], sizes = [2, 1, 16], strides = [1, 1, 1]} : vector<2x8x16xf32> to vector<2x1x16xf32>
      %352 = vector.shape_cast %351 : vector<2x1x16xf32> to vector<2x16xf32>
      %353 = arith.mulf %352, %329 : vector<2x16xf32>
      %354 = vector.extract_strided_slice %180 {offsets = [0, 6, 0], sizes = [2, 1, 16], strides = [1, 1, 1]} : vector<2x8x16xf32> to vector<2x1x16xf32>
      %355 = vector.shape_cast %354 : vector<2x1x16xf32> to vector<2x16xf32>
      %356 = arith.addf %353, %355 : vector<2x16xf32>
      %357 = vector.extract_strided_slice %178 {offsets = [0, 6, 0], sizes = [2, 1, 16], strides = [1, 1, 1]} : vector<2x8x16xf32> to vector<2x1x16xf32>
      %358 = vector.shape_cast %357 : vector<2x1x16xf32> to vector<2x16xf32>
      %359 = arith.mulf %358, %335 : vector<2x16xf32>
      %360 = vector.extract_strided_slice %182 {offsets = [0, 6, 0], sizes = [2, 1, 16], strides = [1, 1, 1]} : vector<2x8x16xf32> to vector<2x1x16xf32>
      %361 = vector.shape_cast %360 : vector<2x1x16xf32> to vector<2x16xf32>
      %362 = arith.addf %359, %361 : vector<2x16xf32>
      %363 = vector.extract_strided_slice %184 {offsets = [0, 6, 0], sizes = [2, 1, 16], strides = [1, 1, 1]} : vector<2x8x16xf32> to vector<2x1x16xf32>
      %364 = vector.shape_cast %363 : vector<2x1x16xf32> to vector<2x16xf32>
      %365 = arith.mulf %364, %356 : vector<2x16xf32>
      %366 = vector.extract_strided_slice %186 {offsets = [0, 6, 0], sizes = [2, 1, 16], strides = [1, 1, 1]} : vector<2x8x16xf32> to vector<2x1x16xf32>
      %367 = vector.shape_cast %366 : vector<2x1x16xf32> to vector<2x16xf32>
      %368 = arith.mulf %367, %362 : vector<2x16xf32>
      %369 = arith.addf %365, %368 : vector<2x16xf32>
      %c6_i32 = arith.constant 6 : i32
      %370 = vector.broadcast %c6_i32 : i32 to vector<1x8x1xi32>
      %371 = arith.cmpi eq, %125, %370 : vector<1x8x1xi32>
      %372 = vector.shape_cast %369 : vector<2x16xf32> to vector<2x1x16xf32>
      %373 = vector.shape_cast %371 : vector<1x8x1xi1> to vector<1x8x1xi1>
      %374 = vector.broadcast %373 : vector<1x8x1xi1> to vector<2x8x16xi1>
      %375 = vector.shape_cast %372 : vector<2x1x16xf32> to vector<2x1x16xf32>
      %376 = vector.broadcast %375 : vector<2x1x16xf32> to vector<2x8x16xf32>
      %377 = arith.select %374, %376, %350 : vector<2x8x16xi1>, vector<2x8x16xf32>
      %378 = vector.extract_strided_slice %176 {offsets = [0, 7, 0], sizes = [2, 1, 16], strides = [1, 1, 1]} : vector<2x8x16xf32> to vector<2x1x16xf32>
      %379 = vector.shape_cast %378 : vector<2x1x16xf32> to vector<2x16xf32>
      %380 = arith.mulf %379, %356 : vector<2x16xf32>
      %381 = vector.extract_strided_slice %180 {offsets = [0, 7, 0], sizes = [2, 1, 16], strides = [1, 1, 1]} : vector<2x8x16xf32> to vector<2x1x16xf32>
      %382 = vector.shape_cast %381 : vector<2x1x16xf32> to vector<2x16xf32>
      %383 = arith.addf %380, %382 : vector<2x16xf32>
      %384 = vector.extract_strided_slice %178 {offsets = [0, 7, 0], sizes = [2, 1, 16], strides = [1, 1, 1]} : vector<2x8x16xf32> to vector<2x1x16xf32>
      %385 = vector.shape_cast %384 : vector<2x1x16xf32> to vector<2x16xf32>
      %386 = arith.mulf %385, %362 : vector<2x16xf32>
      %387 = vector.extract_strided_slice %182 {offsets = [0, 7, 0], sizes = [2, 1, 16], strides = [1, 1, 1]} : vector<2x8x16xf32> to vector<2x1x16xf32>
      %388 = vector.shape_cast %387 : vector<2x1x16xf32> to vector<2x16xf32>
      %389 = arith.addf %386, %388 : vector<2x16xf32>
      %390 = vector.extract_strided_slice %184 {offsets = [0, 7, 0], sizes = [2, 1, 16], strides = [1, 1, 1]} : vector<2x8x16xf32> to vector<2x1x16xf32>
      %391 = vector.shape_cast %390 : vector<2x1x16xf32> to vector<2x16xf32>
      %392 = arith.mulf %391, %383 : vector<2x16xf32>
      %393 = vector.extract_strided_slice %186 {offsets = [0, 7, 0], sizes = [2, 1, 16], strides = [1, 1, 1]} : vector<2x8x16xf32> to vector<2x1x16xf32>
      %394 = vector.shape_cast %393 : vector<2x1x16xf32> to vector<2x16xf32>
      %395 = arith.mulf %394, %389 : vector<2x16xf32>
      %396 = arith.addf %392, %395 : vector<2x16xf32>
      %c7_i32 = arith.constant 7 : i32
      %397 = vector.broadcast %c7_i32 : i32 to vector<1x8x1xi32>
      %398 = arith.cmpi eq, %125, %397 : vector<1x8x1xi32>
      %399 = vector.shape_cast %396 : vector<2x16xf32> to vector<2x1x16xf32>
      %400 = vector.shape_cast %398 : vector<1x8x1xi1> to vector<1x8x1xi1>
      %401 = vector.broadcast %400 : vector<1x8x1xi1> to vector<2x8x16xi1>
      %402 = vector.shape_cast %399 : vector<2x1x16xf32> to vector<2x1x16xf32>
      %403 = vector.broadcast %402 : vector<2x1x16xf32> to vector<2x8x16xf32>
      %404 = arith.select %401, %403, %377 : vector<2x8x16xi1>, vector<2x8x16xf32>
      %c0_96 = arith.constant 0 : index
      %c0_97 = arith.constant 0 : index
      %405 = vector.load %arg20[%c0_96, %c0_97] : memref<2x16xf32, #tpu.memory_space<vmem>>, vector<2x16xf32>
      tpu.vector_store %arg20[%c0_96, %c0_97], %383 {strides = array<i32>} : memref<2x16xf32, #tpu.memory_space<vmem>>, vector<2x16xf32>,
      %c0_98 = arith.constant 0 : index
      %c0_99 = arith.constant 0 : index
      %406 = vector.load %arg21[%c0_98, %c0_99] : memref<2x16xf32, #tpu.memory_space<vmem>>, vector<2x16xf32>
      tpu.vector_store %arg21[%c0_98, %c0_99], %389 {strides = array<i32>} : memref<2x16xf32, #tpu.memory_space<vmem>>, vector<2x16xf32>,
      %c0_100 = arith.constant 0 : index
      %407 = arith.index_cast %174 : i32 to index
      %c0_101 = arith.constant 0 : index
      %408 = vector.load %arg19[%c0_100, %407, %c0_101] : memref<2x64x16xf32, #tpu.memory_space<vmem>>, vector<2x8x16xf32>
      tpu.vector_store %arg19[%c0_100, %407, %c0_101], %404 {strides = array<i32>} : memref<2x64x16xf32, #tpu.memory_space<vmem>>, vector<2x8x16xf32>,
    }
    %c8_i32_51 = arith.constant 8 : i32
    %c0_52 = arith.constant 0 : index
    %c0_53 = arith.constant 0 : index
    %c0_54 = arith.constant 0 : index
    %128 = vector.load %arg19[%c0_52, %c0_53, %c0_54] : memref<2x64x16xf32, #tpu.memory_space<vmem>>, vector<2x64x16xf32>
    %129 = vector.shape_cast %128 : vector<2x64x16xf32> to vector<128x16xf32>
    %c0_55 = arith.constant 0 : index
    %c0_56 = arith.constant 0 : index
    %130 = vector.load %arg8[%c0_55, %c0_56] : memref<1x16xf32, #tpu.memory_space<vmem>>, vector<1x16xf32>
    %131 = vector.broadcast %130 : vector<1x16xf32> to vector<128x16xf32>
    %132 = arith.mulf %57, %131 : vector<128x16xf32>
    %133 = arith.addf %129, %132 : vector<128x16xf32>
    %134 = arith.negf %7 : vector<128x16xf32>
    %135 = math.exp %134 : vector<128x16xf32>
    %cst_57 = arith.constant 1.000000e+00 : f32
    %136 = vector.broadcast %cst_57 : f32 to vector<128x16xf32>
    %137 = arith.addf %136, %135 : vector<128x16xf32>
    %138 = arith.divf %136, %137 : vector<128x16xf32>
    %139 = arith.mulf %7, %138 : vector<128x16xf32>
    %140 = arith.mulf %133, %139 : vector<128x16xf32>
    %141 = arith.truncf %140 : vector<128x16xf32> to vector<128x16xbf16>
    %c0_58 = arith.constant 0 : index
    %c0_59 = arith.constant 0 : index
    %142 = vector.load %arg9[%c0_58, %c0_59] : memref<16x32xf32, #tpu.memory_space<vmem>>, vector<16x32xf32>
    %143 = arith.truncf %142 : vector<16x32xf32> to vector<16x32xbf16>
    %cst_60 = arith.constant dense<0.000000e+00> : vector<128x32xf32>
    %144 = tpu.matmul %141, %143, %cst_60 {dimension_numbers = #tpu.dot_dimension_numbers<[1], [0], [0], [1], [0, 0, 1, 1], [], []>} : vector<128x16xbf16>, vector<16x32xbf16>, vector<128x32xf32> -> vector<128x32xf32>
    %cst_61 = arith.constant dense<0.000000e+00> : vector<128xf32>
    %145 = vector.multi_reduction <add>, %144, %cst_61 [1] : vector<128x32xf32> to vector<128xf32>
    %146 = vector.shape_cast %145 : vector<128xf32> to vector<128x1xf32>
    %cst_62 = arith.constant 3.200000e+01 : f32
    %147 = vector.broadcast %cst_62 : f32 to vector<128x1xf32>
    %148 = arith.divf %146, %147 : vector<128x1xf32>
    %149 = vector.broadcast %148 : vector<128x1xf32> to vector<128x32xf32>
    %150 = arith.subf %144, %149 : vector<128x32xf32>
    %151 = arith.mulf %150, %150 : vector<128x32xf32>
    %cst_63 = arith.constant dense<0.000000e+00> : vector<128xf32>
    %152 = vector.multi_reduction <add>, %151, %cst_63 [1] : vector<128x32xf32> to vector<128xf32>
    %153 = vector.shape_cast %152 : vector<128xf32> to vector<128x1xf32>
    %cst_64 = arith.constant 3.200000e+01 : f32
    %154 = vector.broadcast %cst_64 : f32 to vector<128x1xf32>
    %155 = arith.divf %153, %154 : vector<128x1xf32>
    %156 = vector.broadcast %148 : vector<128x1xf32> to vector<128x32xf32>
    %157 = arith.subf %144, %156 : vector<128x32xf32>
    %cst_65 = arith.constant 9.99999974E-6 : f32
    %158 = vector.broadcast %cst_65 : f32 to vector<128x1xf32>
    %159 = arith.addf %155, %158 : vector<128x1xf32>
    %160 = math.rsqrt %159 : vector<128x1xf32>
    %161 = vector.broadcast %160 : vector<128x1xf32> to vector<128x32xf32>
    %162 = arith.mulf %157, %161 : vector<128x32xf32>
    %c0_66 = arith.constant 0 : index
    %c0_67 = arith.constant 0 : index
    %163 = vector.load %arg10[%c0_66, %c0_67] : memref<1x32xf32, #tpu.memory_space<vmem>>, vector<1x32xf32>
    %164 = vector.broadcast %163 : vector<1x32xf32> to vector<128x32xf32>
    %165 = arith.mulf %162, %164 : vector<128x32xf32>
    %c0_68 = arith.constant 0 : index
    %c0_69 = arith.constant 0 : index
    %166 = vector.load %arg11[%c0_68, %c0_69] : memref<1x32xf32, #tpu.memory_space<vmem>>, vector<1x32xf32>
    %167 = vector.broadcast %166 : vector<1x32xf32> to vector<128x32xf32>
    %168 = arith.addf %165, %167 : vector<128x32xf32>
    %169 = vector.shape_cast %168 : vector<128x32xf32> to vector<2x64x32xf32>
    %c0_70 = arith.constant 0 : index
    %c0_71 = arith.constant 0 : index
    %c0_72 = arith.constant 0 : index
    %170 = vector.load %arg12[%c0_70, %c0_71, %c0_72] : memref<2x64x32xf32, #tpu.memory_space<vmem>>, vector<2x64x32xf32>
    tpu.vector_store %arg12[%c0_70, %c0_71, %c0_72], %169 {strides = array<i32>} : memref<2x64x32xf32, #tpu.memory_space<vmem>>, vector<2x64x32xf32>,
    return
  }
  func.func @transform_0(%arg0: i32) -> (i32, i32, i32) {
    %c0_i32 = arith.constant 0 : i32
    %c0_i32_0 = arith.constant 0 : i32
    %c0_i32_1 = arith.constant 0 : i32
    return %arg0, %c0_i32, %c0_i32_0 : i32, i32, i32
  }
  func.func @transform_1(%arg0: i32) -> (i32, i32) {
    %c0_i32 = arith.constant 0 : i32
    %c0_i32_0 = arith.constant 0 : i32
    %c0_i32_1 = arith.constant 0 : i32
    return %c0_i32, %c0_i32_0 : i32, i32
  }
  func.func @transform_2(%arg0: i32) -> (i32, i32) {
    %c0_i32 = arith.constant 0 : i32
    %c0_i32_0 = arith.constant 0 : i32
    %c0_i32_1 = arith.constant 0 : i32
    return %c0_i32, %c0_i32_0 : i32, i32
  }
  func.func @transform_3(%arg0: i32) -> (i32, i32) {
    %c0_i32 = arith.constant 0 : i32
    %c0_i32_0 = arith.constant 0 : i32
    %c0_i32_1 = arith.constant 0 : i32
    return %c0_i32, %c0_i32_0 : i32, i32
  }
  func.func @transform_4(%arg0: i32) -> (i32, i32) {
    %c0_i32 = arith.constant 0 : i32
    %c0_i32_0 = arith.constant 0 : i32
    %c0_i32_1 = arith.constant 0 : i32
    return %c0_i32, %c0_i32_0 : i32, i32
  }
  func.func @transform_5(%arg0: i32) -> (i32, i32) {
    %c0_i32 = arith.constant 0 : i32
    %c0_i32_0 = arith.constant 0 : i32
    %c0_i32_1 = arith.constant 0 : i32
    return %c0_i32, %c0_i32_0 : i32, i32
  }
  func.func @transform_6(%arg0: i32) -> (i32, i32) {
    %c0_i32 = arith.constant 0 : i32
    %c0_i32_0 = arith.constant 0 : i32
    %c0_i32_1 = arith.constant 0 : i32
    return %c0_i32, %c0_i32_0 : i32, i32
  }
  func.func @transform_7(%arg0: i32) -> (i32, i32) {
    %c0_i32 = arith.constant 0 : i32
    %c0_i32_0 = arith.constant 0 : i32
    %c0_i32_1 = arith.constant 0 : i32
    return %c0_i32, %c0_i32_0 : i32, i32
  }
  func.func @transform_8(%arg0: i32) -> (i32, i32) {
    %c0_i32 = arith.constant 0 : i32
    %c0_i32_0 = arith.constant 0 : i32
    %c0_i32_1 = arith.constant 0 : i32
    return %c0_i32, %c0_i32_0 : i32, i32
  }
  func.func @transform_9(%arg0: i32) -> (i32, i32) {
    %c0_i32 = arith.constant 0 : i32
    %c0_i32_0 = arith.constant 0 : i32
    %c0_i32_1 = arith.constant 0 : i32
    return %c0_i32, %c0_i32_0 : i32, i32
  }
  func.func @transform_10(%arg0: i32) -> (i32, i32) {
    %c0_i32 = arith.constant 0 : i32
    %c0_i32_0 = arith.constant 0 : i32
    %c0_i32_1 = arith.constant 0 : i32
    return %c0_i32, %c0_i32_0 : i32, i32
  }
  func.func @transform_11(%arg0: i32) -> (i32, i32, i32) {
    %c0_i32 = arith.constant 0 : i32
    %c0_i32_0 = arith.constant 0 : i32
    %c0_i32_1 = arith.constant 0 : i32
    return %arg0, %c0_i32, %c0_i32_0 : i32, i32, i32
  }
}

</mosaic_0001>

<llo_original>
// kernel: tpu_custom_call.1
$region0: #{tpu_custom_call.1}
  #allocation0 [shape = 'u32[]', space=smem, size = 0x4, offset = 0x4, fixed_abs, tag = 'smem constant byte address 0x4 - core index']
  #allocation1 [shape = 'u32[144,128]{1,0:T(1,128)}', space=vmem, size = 0x12000, scoped, tag = 'internal scratch']
  #allocation2 [shape = 'f32[2,64,16]{2,1,0:T(8,128)}', space=vmem, size = 0x10000, scoped, tag = 'scratch operand']
  #allocation3 [shape = 'f32[2,64,16]{2,1,0:T(8,128)}', space=vmem, size = 0x10000, scoped, tag = 'scratch operand']
  #allocation4 [shape = 'f32[2,64,16]{2,1,0:T(8,128)}', space=vmem, size = 0x10000, scoped, tag = 'scratch operand']
  #allocation5 [shape = 'f32[2,64,16]{2,1,0:T(8,128)}', space=vmem, size = 0x10000, scoped, tag = 'scratch operand']
  #allocation6 [shape = 'f32[2,64,16]{2,1,0:T(8,128)}', space=vmem, size = 0x10000, scoped, tag = 'scratch operand']
  #allocation7 [shape = 'f32[2,64,16]{2,1,0:T(8,128)}', space=vmem, size = 0x10000, scoped, tag = 'scratch operand']
  #allocation8 [shape = 'f32[2,64,16]{2,1,0:T(8,128)}', space=vmem, size = 0x10000, scoped, tag = 'scratch operand']
  #allocation9 [shape = 'f32[2,16]{1,0:T(2,128)}', space=vmem, size = 0x400, scoped, tag = 'scratch operand']
  #allocation10 [shape = 'f32[2,16]{1,0:T(2,128)}', space=vmem, size = 0x400, scoped, tag = 'scratch operand']
  %s0 = inlined_call_operand.vmem [shape: f32[2,64,16], index: 0, kind: input, shape index: {}]
  %s1 = inlined_call_operand.vmem [shape: f32[16,32], index: 1, kind: input, shape index: {}]
  %s2 = inlined_call_operand.vmem [shape: f32[4,16], index: 2, kind: input, shape index: {}]
  %s3 = inlined_call_operand.vmem [shape: f32[1,16], index: 3, kind: input, shape index: {}]
  %s4 = inlined_call_operand.vmem [shape: f32[16,20], index: 4, kind: input, shape index: {}]
  %s5 = inlined_call_operand.vmem [shape: f32[1,16], index: 5, kind: input, shape index: {}]
  %s6 = inlined_call_operand.vmem [shape: f32[2,16], index: 6, kind: input, shape index: {}]
  %s7 = inlined_call_operand.vmem [shape: f32[1,16], index: 7, kind: input, shape index: {}]
  %s8 = inlined_call_operand.vmem [shape: f32[16,32], index: 8, kind: input, shape index: {}]
  %s9 = inlined_call_operand.vmem [shape: f32[1,32], index: 9, kind: input, shape index: {}]
  %s10 = inlined_call_operand.vmem [shape: f32[1,32], index: 10, kind: input, shape index: {}]
  %s11 = inlined_call_operand.vmem [shape: f32[2,64,32], index: 11, kind: output, shape index: {}]
  %s12 = sld [smem:[#allocation0]]
  $region61: #{tpu_custom_call.1} parent=0
    _
  %s14 = ssub.s32 1, %s12
  %s15 = scalar_select 0, %s14, %s12
  // Predicated region
  $region2: #{tpu_custom_call.1} parent=0 // pred_check
    _
  $region3: #{tpu_custom_call.1} parent=0 // pred_check_branch
    %17 = sbr.rel (0) target = $region5
  $region4: #{tpu_custom_call.1} parent=0 // pred_region
    _
  $region5: #{tpu_custom_call.1} parent=0 // pred_fallthru
    _
  // Predicated region
  $region6: #{tpu_custom_call.1} parent=0 // pred_check
    _
  $region7: #{tpu_custom_call.1} parent=0 // pred_check_branch
    %19 = sbr.rel (0) target = $region9
  $region8: #{tpu_custom_call.1} parent=0 // pred_region
    _
  $region9: #{tpu_custom_call.1} parent=0 // pred_fallthru
    _
  // Predicated region
  $region10: #{tpu_custom_call.1} parent=0 // pred_check
    _
  $region11: #{tpu_custom_call.1} parent=0 // pred_check_branch
    %21 = sbr.rel (0) target = $region13
  $region12: #{tpu_custom_call.1} parent=0 // pred_region
    _
  $region13: #{tpu_custom_call.1} parent=0 // pred_fallthru
    _
  // Predicated region
  $region14: #{tpu_custom_call.1} parent=0 // pred_check
    _
  $region15: #{tpu_custom_call.1} parent=0 // pred_check_branch
    %23 = sbr.rel (0) target = $region17
  $region16: #{tpu_custom_call.1} parent=0 // pred_region
    _
  $region17: #{tpu_custom_call.1} parent=0 // pred_fallthru
    _
  // Predicated region
  $region18: #{tpu_custom_call.1} parent=0 // pred_check
    _
  $region19: #{tpu_custom_call.1} parent=0 // pred_check_branch
    %25 = sbr.rel (0) target = $region21
  $region20: #{tpu_custom_call.1} parent=0 // pred_region
    _
  $region21: #{tpu_custom_call.1} parent=0 // pred_fallthru
    _
  // Predicated region
  $region22: #{tpu_custom_call.1} parent=0 // pred_check
    _
  $region23: #{tpu_custom_call.1} parent=0 // pred_check_branch
    %27 = sbr.rel (0) target = $region25
  $region24: #{tpu_custom_call.1} parent=0 // pred_region
    _
  $region25: #{tpu_custom_call.1} parent=0 // pred_fallthru
    _
  // Predicated region
  $region26: #{tpu_custom_call.1} parent=0 // pred_check
    _
  $region27: #{tpu_custom_call.1} parent=0 // pred_check_branch
    %29 = sbr.rel (0) target = $region29
  $region28: #{tpu_custom_call.1} parent=0 // pred_region
    _
  $region29: #{tpu_custom_call.1} parent=0 // pred_fallthru
    _
  // Predicated region
  $region30: #{tpu_custom_call.1} parent=0 // pred_check
    _
  $region31: #{tpu_custom_call.1} parent=0 // pred_check_branch
    %31 = sbr.rel (0) target = $region33
  $region32: #{tpu_custom_call.1} parent=0 // pred_region
    _
  $region33: #{tpu_custom_call.1} parent=0 // pred_fallthru
    _
  // Predicated region
  $region34: #{tpu_custom_call.1} parent=0 // pred_check
    _
  $region35: #{tpu_custom_call.1} parent=0 // pred_check_branch
    %33 = sbr.rel (0) target = $region37
  $region36: #{tpu_custom_call.1} parent=0 // pred_region
    _
  $region37: #{tpu_custom_call.1} parent=0 // pred_fallthru
    _
  // Predicated region
  $region38: #{tpu_custom_call.1} parent=0 // pred_check
    _
  $region39: #{tpu_custom_call.1} parent=0 // pred_check_branch
    %35 = sbr.rel (0) target = $region41
  $region40: #{tpu_custom_call.1} parent=0 // pred_region
    _
  $region41: #{tpu_custom_call.1} parent=0 // pred_fallthru
    _
  // Predicated region
  $region42: #{tpu_custom_call.1} parent=0 // pred_check
    _
  $region43: #{tpu_custom_call.1} parent=0 // pred_check_branch
    %37 = sbr.rel (0) target = $region45
  $region44: #{tpu_custom_call.1} parent=0 // pred_region
    _
  $region45: #{tpu_custom_call.1} parent=0 // pred_fallthru
    _
  %v39 = vld [vmem:[%s0] sm:$0xff]
  %v40 = vld [vmem:[%s0 + $0x8] sm:$0xff]
  %v41 = vld [vmem:[%s0 + $0x10] sm:$0xff]
  %v42 = vld [vmem:[%s0 + $0x18] sm:$0xff]
  %v43 = vld [vmem:[%s0 + $0x20] sm:$0xff]
  %v44 = vld [vmem:[%s0 + $0x28] sm:$0xff]
  %v45 = vld [vmem:[%s0 + $0x30] sm:$0xff]
  %v46 = vld [vmem:[%s0 + $0x38] sm:$0xff]
  %v47 = vld [vmem:[%s0 + $0x40] sm:$0xff]
  %v48 = vld [vmem:[%s0 + $0x48] sm:$0xff]
  %v49 = vld [vmem:[%s0 + $0x50] sm:$0xff]
  %v50 = vld [vmem:[%s0 + $0x58] sm:$0xff]
  %v51 = vld [vmem:[%s0 + $0x60] sm:$0xff]
  %v52 = vld [vmem:[%s0 + $0x68] sm:$0xff]
  %v53 = vld [vmem:[%s0 + $0x70] sm:$0xff]
  %v54 = vld [vmem:[%s0 + $0x78] sm:$0xff]
  %v55 = vpack.c.bf16 %v40, %v39
  %v56 = vpack.c.bf16 %v42, %v41
  %v57 = vpack.c.bf16 %v44, %v43
  %v58 = vpack.c.bf16 %v46, %v45
  %v59 = vpack.c.bf16 %v48, %v47
  %v60 = vpack.c.bf16 %v50, %v49
  %v61 = vpack.c.bf16 %v52, %v51
  %v62 = vpack.c.bf16 %v54, %v53
  %v63 = vld [vmem:[%s1] sm:$0xff]
  %v64 = vld [vmem:[%s1 + $0x8] sm:$0xff]
  %v65 = vpack.c.bf16 %v64, %v63
  %vm66 = vcmask 130048
  %v68 = vsel %vm66, %v55, 0
  %v71 = vsel %vm66, %v56, 0
  %v74 = vsel %vm66, %v57, 0
  %v77 = vsel %vm66, %v58, 0
  %v80 = vsel %vm66, %v59, 0
  %v83 = vsel %vm66, %v60, 0
  %v86 = vsel %vm66, %v61, 0
  %v89 = vsel %vm66, %v62, 0
  %91 = vmatprep.subr.bf16.mxu0 0
  %92 = vmatpush1.bf16.msra.mxu0 %v65
  %93 = vmatprep.subr.bf16.mxu0 0
  %94 = vmatpush1.bf16.msra.mxu0 0
  %95 = vmatprep.subr.bf16.mxu0 0
  %96 = vmatpush1.bf16.msra.mxu0 0
  %97 = vmatprep.subr.bf16.mxu0 0
  %98 = vmatpush1.bf16.msra.mxu0 0
  %99 = vmatprep.subr.bf16.mxu0 0
  %100 = vmatpush1.bf16.msra.mxu0 0
  %101 = vmatprep.subr.bf16.mxu0 0
  %102 = vmatpush1.bf16.msra.mxu0 0
  %103 = vmatprep.subr.bf16.mxu0 0
  %104 = vmatpush1.bf16.msra.mxu0 0
  %105 = vmatprep.subr.bf16.mxu0 0
  %106 = vmatpush1.bf16.msra.mxu0 0
  %107 = vmatprep.subr.bf16.mxu0 0
  %108 = vmatpush1.bf16.msra.mxu0 0
  %109 = vmatprep.subr.bf16.mxu0 0
  %110 = vmatpush1.bf16.msra.mxu0 0
  %111 = vmatprep.subr.bf16.mxu0 0
  %112 = vmatpush1.bf16.msra.mxu0 0
  %113 = vmatprep.subr.bf16.mxu0 0
  %114 = vmatpush1.bf16.msra.mxu0 0
  %115 = vmatprep.subr.bf16.mxu0 0
  %116 = vmatpush1.bf16.msra.mxu0 0
  %117 = vmatprep.subr.bf16.mxu0 0
  %118 = vmatpush1.bf16.msra.mxu0 0
  %119 = vmatprep.subr.bf16.mxu0 0
  %120 = vmatpush1.bf16.msra.mxu0 0
  %121 = vmatprep.subr.bf16.mxu0 0
  %122 = vmatpush1.bf16.msra.mxu0 0
  %123 = vmatprep.mubr.bf16.mxu0 0
  %124 = vmatmul.mubr.bf16.gmra.mrb[0].mxu0 %v68
  %v125 = vpop.f32.mrb[0].mxu0
  %v126 = vadd.f32 0.0, %v125
  %v127 = vpop.f32.mrb[0].mxu0
  %v128 = vpop.f32.mrb[0].mxu0
  %v129 = vadd.f32 0.0, %v128
  %v130 = vpop.f32.mrb[0].mxu0
  %131 = vmatprep.mubr.bf16.mxu0 0
  %132 = vmatmul.mubr.bf16.gmra.mrb[0].mxu0 %v71
  %v133 = vpop.f32.mrb[0].mxu0
  %v134 = vadd.f32 0.0, %v133
  %v135 = vpop.f32.mrb[0].mxu0
  %v136 = vpop.f32.mrb[0].mxu0
  %v137 = vadd.f32 0.0, %v136
  %v138 = vpop.f32.mrb[0].mxu0
  %139 = vmatprep.mubr.bf16.mxu0 0
  %140 = vmatmul.mubr.bf16.gmra.mrb[0].mxu0 %v74
  %v141 = vpop.f32.mrb[0].mxu0
  %v142 = vadd.f32 0.0, %v141
  %v143 = vpop.f32.mrb[0].mxu0
  %v144 = vpop.f32.mrb[0].mxu0
  %v145 = vadd.f32 0.0, %v144
  %v146 = vpop.f32.mrb[0].mxu0
  %147 = vmatprep.mubr.bf16.mxu0 0
  %148 = vmatmul.mubr.bf16.gmra.mrb[0].mxu0 %v77
  %v149 = vpop.f32.mrb[0].mxu0
  %v150 = vadd.f32 0.0, %v149
  %v151 = vpop.f32.mrb[0].mxu0
  %v152 = vpop.f32.mrb[0].mxu0
  %v153 = vadd.f32 0.0, %v152
  %v154 = vpop.f32.mrb[0].mxu0
  %155 = vmatprep.mubr.bf16.mxu0 0
  %156 = vmatmul.mubr.bf16.gmra.mrb[0].mxu0 %v80
  %v157 = vpop.f32.mrb[0].mxu0
  %v158 = vadd.f32 0.0, %v157
  %v159 = vpop.f32.mrb[0].mxu0
  %v160 = vpop.f32.mrb[0].mxu0
  %v161 = vadd.f32 0.0, %v160
  %v162 = vpop.f32.mrb[0].mxu0
  %163 = vmatprep.mubr.bf16.mxu0 0
  %164 = vmatmul.mubr.bf16.gmra.mrb[0].mxu0 %v83
  %v165 = vpop.f32.mrb[0].mxu0
  %v166 = vadd.f32 0.0, %v165
  %v167 = vpop.f32.mrb[0].mxu0
  %v168 = vpop.f32.mrb[0].mxu0
  %v169 = vadd.f32 0.0, %v168
  %v170 = vpop.f32.mrb[0].mxu0
  %171 = vmatprep.mubr.bf16.mxu0 0
  %172 = vmatmul.mubr.bf16.gmra.mrb[0].mxu0 %v86
  %v173 = vpop.f32.mrb[0].mxu0
  %v174 = vadd.f32 0.0, %v173
  %v175 = vpop.f32.mrb[0].mxu0
  %v176 = vpop.f32.mrb[0].mxu0
  %v177 = vadd.f32 0.0, %v176
  %v178 = vpop.f32.mrb[0].mxu0
  %179 = vmatprep.mubr.bf16.mxu0 0
  %180 = vmatmul.mubr.bf16.gmra.mrb[0].mxu0 %v89
  %v181 = vpop.f32.mrb[0].mxu0
  %v182 = vadd.f32 0.0, %v181
  %v183 = vpop.f32.mrb[0].mxu0
  %v184 = vpop.f32.mrb[0].mxu0
  %v185 = vadd.f32 0.0, %v184
  %v186 = vpop.f32.mrb[0].mxu0
  %187 = vdwg.mxu0
  %v188 = vlaneseq
  %v189 = vshrl.u32 %v188, 7
  %v190 = vadd.s32 %v189, 8
  %v191 = vadd.s32 %v189, 16
  %v192 = vadd.s32 %v189, 24
  %v193 = vadd.s32 %v189, 32
  %v194 = vadd.s32 %v189, 40
  %v195 = vadd.s32 %v189, 48
  %v196 = vadd.s32 %v189, 56
  %v197 = vld [vmem:[%s2] sm:$0xf]
  %v198 = vlaneseq
  %v199 = vshrl.u32 %v198, 7
  %v200 = vsub.s32 3, %v199
  %v201 = vrot.slane %v197, %v200
  %v202 = vmul.f32 %v201, %v126
  %v203 = vmul.f32 %v201, %v129
  %v204 = vmul.f32 %v201, %v134
  %v205 = vmul.f32 %v201, %v137
  %v206 = vmul.f32 %v201, %v142
  %v207 = vmul.f32 %v201, %v145
  %v208 = vmul.f32 %v201, %v150
  %v209 = vmul.f32 %v201, %v153
  %v210 = vmul.f32 %v201, %v158
  %v211 = vmul.f32 %v201, %v161
  %v212 = vmul.f32 %v201, %v166
  %v213 = vmul.f32 %v201, %v169
  %v214 = vmul.f32 %v201, %v174
  %v215 = vmul.f32 %v201, %v177
  %v216 = vmul.f32 %v201, %v182
  %v217 = vmul.f32 %v201, %v185
  %vm218 = vcmp.ge.s32.totalorder %v189, 3
  %vm219 = vcmp.ge.s32.totalorder %v190, 3
  %vm220 = vcmp.ge.s32.totalorder %v191, 3
  %vm221 = vcmp.ge.s32.totalorder %v192, 3
  %vm222 = vcmp.ge.s32.totalorder %v193, 3
  %vm223 = vcmp.ge.s32.totalorder %v194, 3
  %vm224 = vcmp.ge.s32.totalorder %v195, 3
  %vm225 = vcmp.ge.s32.totalorder %v196, 3
  %v226 = vrot.slane %v126, 5
  %v227 = vrot.slane %v129, 5
  %v228 = vrot.slane %v134, 5
  %v229 = vrot.slane %v137, 5
  %v230 = vrot.slane %v142, 5
  %v231 = vrot.slane %v145, 5
  %v232 = vrot.slane %v150, 5
  %v233 = vrot.slane %v153, 5
  %v234 = vrot.slane %v158, 5
  %v235 = vrot.slane %v161, 5
  %v236 = vrot.slane %v166, 5
  %v237 = vrot.slane %v169, 5
  %v238 = vrot.slane %v174, 5
  %v239 = vrot.slane %v177, 5
  %v240 = vrot.slane %v182, 5
  %v241 = vrot.slane %v185, 5
  %vm242 = vcmp.lt.s32.totalorder %v189, 3
  %v243 = vsel %vm242, %v240, %v241
  %v244 = vsel %vm242, %v239, %v240
  %v245 = vsel %vm242, %v238, %v239
  %v246 = vsel %vm242, %v237, %v238
  %v247 = vsel %vm242, %v236, %v237
  %v248 = vsel %vm242, %v235, %v236
  %v249 = vsel %vm242, %v234, %v235
  %v250 = vsel %vm242, %v233, %v234
  %v251 = vsel %vm242, %v232, %v233
  %v252 = vsel %vm242, %v231, %v232
  %v253 = vsel %vm242, %v230, %v231
  %v254 = vsel %vm242, %v229, %v230
  %v255 = vsel %vm242, %v228, %v229
  %v256 = vsel %vm242, %v227, %v228
  %v257 = vsel %vm242, %v226, %v227
  %v258 = vsel %vm242, %v241, %v226
  %v259 = vsel %vm218, %v258, 0.0
  %v260 = vsel %vm219, %v257, 0.0
  %v261 = vsel %vm220, %v256, 0.0
  %v262 = vsel %vm221, %v255, 0.0
  %v263 = vsel %vm222, %v254, 0.0
  %v264 = vsel %vm223, %v253, 0.0
  %v265 = vsel %vm224, %v252, 0.0
  %v266 = vsel %vm225, %v251, 0.0
  %v267 = vsel %vm218, %v250, 0.0
  %v268 = vsel %vm219, %v249, 0.0
  %v269 = vsel %vm220, %v248, 0.0
  %v270 = vsel %vm221, %v247, 0.0
  %v271 = vsel %vm222, %v246, 0.0
  %v272 = vsel %vm223, %v245, 0.0
  %v273 = vsel %vm224, %v244, 0.0
  %v274 = vsel %vm225, %v243, 0.0
  %v275 = vlaneseq
  %v276 = vshrl.u32 %v275, 7
  %v277 = vsub.s32 0, %v276
  %v278 = vrot.slane %v197, %v277
  %v279 = vmul.f32 %v278, %v259
  %v280 = vmul.f32 %v278, %v260
  %v281 = vmul.f32 %v278, %v261
  %v282 = vmul.f32 %v278, %v262
  %v283 = vmul.f32 %v278, %v263
  %v284 = vmul.f32 %v278, %v264
  %v285 = vmul.f32 %v278, %v265
  %v286 = vmul.f32 %v278, %v266
  %v287 = vmul.f32 %v278, %v267
  %v288 = vmul.f32 %v278, %v268
  %v289 = vmul.f32 %v278, %v269
  %v290 = vmul.f32 %v278, %v270
  %v291 = vmul.f32 %v278, %v271
  %v292 = vmul.f32 %v278, %v272
  %v293 = vmul.f32 %v278, %v273
  %v294 = vmul.f32 %v278, %v274
  %v295 = vadd.f32 %v202, %v279
  %v296 = vadd.f32 %v203, %v280
  %v297 = vadd.f32 %v204, %v281
  %v298 = vadd.f32 %v205, %v282
  %v299 = vadd.f32 %v206, %v283
  %v300 = vadd.f32 %v207, %v284
  %v301 = vadd.f32 %v208, %v285
  %v302 = vadd.f32 %v209, %v286
  %v303 = vadd.f32 %v210, %v287
  %v304 = vadd.f32 %v211, %v288
  %v305 = vadd.f32 %v212, %v289
  %v306 = vadd.f32 %v213, %v290
  %v307 = vadd.f32 %v214, %v291
  %v308 = vadd.f32 %v215, %v292
  %v309 = vadd.f32 %v216, %v293
  %v310 = vadd.f32 %v217, %v294
  %vm311 = vcmp.ge.s32.totalorder %v189, 2
  %vm312 = vcmp.ge.s32.totalorder %v190, 2
  %vm313 = vcmp.ge.s32.totalorder %v191, 2
  %vm314 = vcmp.ge.s32.totalorder %v192, 2
  %vm315 = vcmp.ge.s32.totalorder %v193, 2
  %vm316 = vcmp.ge.s32.totalorder %v194, 2
  %vm317 = vcmp.ge.s32.totalorder %v195, 2
  %vm318 = vcmp.ge.s32.totalorder %v196, 2
  %v319 = vrot.slane %v126, 6
  %v320 = vrot.slane %v129, 6
  %v321 = vrot.slane %v134, 6
  %v322 = vrot.slane %v137, 6
  %v323 = vrot.slane %v142, 6
  %v324 = vrot.slane %v145, 6
  %v325 = vrot.slane %v150, 6
  %v326 = vrot.slane %v153, 6
  %v327 = vrot.slane %v158, 6
  %v328 = vrot.slane %v161, 6
  %v329 = vrot.slane %v166, 6
  %v330 = vrot.slane %v169, 6
  %v331 = vrot.slane %v174, 6
  %v332 = vrot.slane %v177, 6
  %v333 = vrot.slane %v182, 6
  %v334 = vrot.slane %v185, 6
  %vm335 = vcmp.lt.s32.totalorder %v189, 2
  %v336 = vsel %vm335, %v333, %v334
  %v337 = vsel %vm335, %v332, %v333
  %v338 = vsel %vm335, %v331, %v332
  %v339 = vsel %vm335, %v330, %v331
  %v340 = vsel %vm335, %v329, %v330
  %v341 = vsel %vm335, %v328, %v329
  %v342 = vsel %vm335, %v327, %v328
  %v343 = vsel %vm335, %v326, %v327
  %v344 = vsel %vm335, %v325, %v326
  %v345 = vsel %vm335, %v324, %v325
  %v346 = vsel %vm335, %v323, %v324
  %v347 = vsel %vm335, %v322, %v323
  %v348 = vsel %vm335, %v321, %v322
  %v349 = vsel %vm335, %v320, %v321
  %v350 = vsel %vm335, %v319, %v320
  %v351 = vsel %vm335, %v334, %v319
  %v352 = vsel %vm311, %v351, 0.0
  %v353 = vsel %vm312, %v350, 0.0
  %v354 = vsel %vm313, %v349, 0.0
  %v355 = vsel %vm314, %v348, 0.0
  %v356 = vsel %vm315, %v347, 0.0
  %v357 = vsel %vm316, %v346, 0.0
  %v358 = vsel %vm317, %v345, 0.0
  %v359 = vsel %vm318, %v344, 0.0
  %v360 = vsel %vm311, %v343, 0.0
  %v361 = vsel %vm312, %v342, 0.0
  %v362 = vsel %vm313, %v341, 0.0
  %v363 = vsel %vm314, %v340, 0.0
  %v364 = vsel %vm315, %v339, 0.0
  %v365 = vsel %vm316, %v338, 0.0
  %v366 = vsel %vm317, %v337, 0.0
  %v367 = vsel %vm318, %v336, 0.0
  %v368 = vlaneseq
  %v369 = vshrl.u32 %v368, 7
  %v370 = vsub.s32 1, %v369
  %v371 = vrot.slane %v197, %v370
  %v372 = vmul.f32 %v371, %v352
  %v373 = vmul.f32 %v371, %v353
  %v374 = vmul.f32 %v371, %v354
  %v375 = vmul.f32 %v371, %v355
  %v376 = vmul.f32 %v371, %v356
  %v377 = vmul.f32 %v371, %v357
  %v378 = vmul.f32 %v371, %v358
  %v379 = vmul.f32 %v371, %v359
  %v380 = vmul.f32 %v371, %v360
  %v381 = vmul.f32 %v371, %v361
  %v382 = vmul.f32 %v371, %v362
  %v383 = vmul.f32 %v371, %v363
  %v384 = vmul.f32 %v371, %v364
  %v385 = vmul.f32 %v371, %v365
  %v386 = vmul.f32 %v371, %v366
  %v387 = vmul.f32 %v371, %v367
  %v388 = vadd.f32 %v295, %v372
  %v389 = vadd.f32 %v296, %v373
  %v390 = vadd.f32 %v297, %v374
  %v391 = vadd.f32 %v298, %v375
  %v392 = vadd.f32 %v299, %v376
  %v393 = vadd.f32 %v300, %v377
  %v394 = vadd.f32 %v301, %v378
  %v395 = vadd.f32 %v302, %v379
  %v396 = vadd.f32 %v303, %v380
  %v397 = vadd.f32 %v304, %v381
  %v398 = vadd.f32 %v305, %v382
  %v399 = vadd.f32 %v306, %v383
  %v400 = vadd.f32 %v307, %v384
  %v401 = vadd.f32 %v308, %v385
  %v402 = vadd.f32 %v309, %v386
  %v403 = vadd.f32 %v310, %v387
  %vm404 = vcmp.ge.s32.totalorder %v189, 1
  %vm405 = vcmp.ge.s32.totalorder %v190, 1
  %vm406 = vcmp.ge.s32.totalorder %v191, 1
  %vm407 = vcmp.ge.s32.totalorder %v192, 1
  %vm408 = vcmp.ge.s32.totalorder %v193, 1
  %vm409 = vcmp.ge.s32.totalorder %v194, 1
  %vm410 = vcmp.ge.s32.totalorder %v195, 1
  %vm411 = vcmp.ge.s32.totalorder %v196, 1
  %v412 = vrot.slane %v126, 7
  %v413 = vrot.slane %v129, 7
  %v414 = vrot.slane %v134, 7
  %v415 = vrot.slane %v137, 7
  %v416 = vrot.slane %v142, 7
  %v417 = vrot.slane %v145, 7
  %v418 = vrot.slane %v150, 7
  %v419 = vrot.slane %v153, 7
  %v420 = vrot.slane %v158, 7
  %v421 = vrot.slane %v161, 7
  %v422 = vrot.slane %v166, 7
  %v423 = vrot.slane %v169, 7
  %v424 = vrot.slane %v174, 7
  %v425 = vrot.slane %v177, 7
  %v426 = vrot.slane %v182, 7
  %v427 = vrot.slane %v185, 7
  %vm428 = vcmp.lt.s32.totalorder %v189, 1
  %v429 = vsel %vm428, %v426, %v427
  %v430 = vsel %vm428, %v425, %v426
  %v431 = vsel %vm428, %v424, %v425
  %v432 = vsel %vm428, %v423, %v424
  %v433 = vsel %vm428, %v422, %v423
  %v434 = vsel %vm428, %v421, %v422
  %v435 = vsel %vm428, %v420, %v421
  %v436 = vsel %vm428, %v419, %v420
  %v437 = vsel %vm428, %v418, %v419
  %v438 = vsel %vm428, %v417, %v418
  %v439 = vsel %vm428, %v416, %v417
  %v440 = vsel %vm428, %v415, %v416
  %v441 = vsel %vm428, %v414, %v415
  %v442 = vsel %vm428, %v413, %v414
  %v443 = vsel %vm428, %v412, %v413
  %v444 = vsel %vm428, %v427, %v412
  %v445 = vsel %vm404, %v444, 0.0
  %v446 = vsel %vm405, %v443, 0.0
  %v447 = vsel %vm406, %v442, 0.0
  %v448 = vsel %vm407, %v441, 0.0
  %v449 = vsel %vm408, %v440, 0.0
  %v450 = vsel %vm409, %v439, 0.0
  %v451 = vsel %vm410, %v438, 0.0
  %v452 = vsel %vm411, %v437, 0.0
  %v453 = vsel %vm404, %v436, 0.0
  %v454 = vsel %vm405, %v435, 0.0
  %v455 = vsel %vm406, %v434, 0.0
  %v456 = vsel %vm407, %v433, 0.0
  %v457 = vsel %vm408, %v432, 0.0
  %v458 = vsel %vm409, %v431, 0.0
  %v459 = vsel %vm410, %v430, 0.0
  %v460 = vsel %vm411, %v429, 0.0
  %v461 = vlaneseq
  %v462 = vshrl.u32 %v461, 7
  %v463 = vsub.s32 2, %v462
  %v464 = vrot.slane %v197, %v463
  %v465 = vmul.f32 %v464, %v445
  %v466 = vmul.f32 %v464, %v446
  %v467 = vmul.f32 %v464, %v447
  %v468 = vmul.f32 %v464, %v448
  %v469 = vmul.f32 %v464, %v449
  %v470 = vmul.f32 %v464, %v450
  %v471 = vmul.f32 %v464, %v451
  %v472 = vmul.f32 %v464, %v452
  %v473 = vmul.f32 %v464, %v453
  %v474 = vmul.f32 %v464, %v454
  %v475 = vmul.f32 %v464, %v455
  %v476 = vmul.f32 %v464, %v456
  %v477 = vmul.f32 %v464, %v457
  %v478 = vmul.f32 %v464, %v458
  %v479 = vmul.f32 %v464, %v459
  %v480 = vmul.f32 %v464, %v460
  %v481 = vadd.f32 %v388, %v465
  %v482 = vadd.f32 %v389, %v466
  %v483 = vadd.f32 %v390, %v467
  %v484 = vadd.f32 %v391, %v468
  %v485 = vadd.f32 %v392, %v469
  %v486 = vadd.f32 %v393, %v470
  %v487 = vadd.f32 %v394, %v471
  %v488 = vadd.f32 %v395, %v472
  %v489 = vadd.f32 %v396, %v473
  %v490 = vadd.f32 %v397, %v474
  %v491 = vadd.f32 %v398, %v475
  %v492 = vadd.f32 %v399, %v476
  %v493 = vadd.f32 %v400, %v477
  %v494 = vadd.f32 %v401, %v478
  %v495 = vadd.f32 %v402, %v479
  %v496 = vadd.f32 %v403, %v480
  %v497 = vld [vmem:[%s3] sm:$0x1]
  %v499 = vlaneseq
  %v500 = vshrl.u32 %v499, 7
  %v501 = vsub.s32 0, %v500
  %v502 = vrot.slane %v497, %v501
  %v504 = vadd.f32 %v481, %v502
  %v505 = vadd.f32 %v482, %v502
  %v506 = vadd.f32 %v483, %v502
  %v507 = vadd.f32 %v484, %v502
  %v508 = vadd.f32 %v485, %v502
  %v509 = vadd.f32 %v486, %v502
  %v510 = vadd.f32 %v487, %v502
  %v511 = vadd.f32 %v488, %v502
  %v512 = vadd.f32 %v489, %v502
  %v513 = vadd.f32 %v490, %v502
  %v514 = vadd.f32 %v491, %v502
  %v515 = vadd.f32 %v492, %v502
  %v516 = vadd.f32 %v493, %v502
  %v517 = vadd.f32 %v494, %v502
  %v518 = vadd.f32 %v495, %v502
  %v519 = vadd.f32 %v496, %v502
  %v520 = vxor.u32 %v504, 2147483648
  %v521 = vxor.u32 %v505, 2147483648
  %v522 = vxor.u32 %v506, 2147483648
  %v523 = vxor.u32 %v507, 2147483648
  %v524 = vxor.u32 %v508, 2147483648
  %v525 = vxor.u32 %v509, 2147483648
  %v526 = vxor.u32 %v510, 2147483648
  %v527 = vxor.u32 %v511, 2147483648
  %v528 = vxor.u32 %v512, 2147483648
  %v529 = vxor.u32 %v513, 2147483648
  %v530 = vxor.u32 %v514, 2147483648
  %v531 = vxor.u32 %v515, 2147483648
  %v532 = vxor.u32 %v516, 2147483648
  %v533 = vxor.u32 %v517, 2147483648
  %v534 = vxor.u32 %v518, 2147483648
  %v535 = vxor.u32 %v519, 2147483648
  %v536 = vmul.f32 %v520, 1.442695
  %v537 = vpow.pop %v536
  %v538 = vmul.f32 %v521, 1.442695
  %v539 = vpow.pop %v538
  %v540 = vmul.f32 %v522, 1.442695
  %v541 = vpow.pop %v540
  %v542 = vmul.f32 %v523, 1.442695
  %v543 = vpow.pop %v542
  %v544 = vmul.f32 %v524, 1.442695
  %v545 = vpow.pop %v544
  %v546 = vmul.f32 %v525, 1.442695
  %v547 = vpow.pop %v546
  %v548 = vmul.f32 %v526, 1.442695
  %v549 = vpow.pop %v548
  %v550 = vmul.f32 %v527, 1.442695
  %v551 = vpow.pop %v550
  %v552 = vmul.f32 %v528, 1.442695
  %v553 = vpow.pop %v552
  %v554 = vmul.f32 %v529, 1.442695
  %v555 = vpow.pop %v554
  %v556 = vmul.f32 %v530, 1.442695
  %v557 = vpow.pop %v556
  %v558 = vmul.f32 %v531, 1.442695
  %v559 = vpow.pop %v558
  %v560 = vmul.f32 %v532, 1.442695
  %v561 = vpow.pop %v560
  %v562 = vmul.f32 %v533, 1.442695
  %v563 = vpow.pop %v562
  %v564 = vmul.f32 %v534, 1.442695
  %v565 = vpow.pop %v564
  %v566 = vmul.f32 %v535, 1.442695
  %v567 = vpow.pop %v566
  %v568 = vadd.f32 %v537, 1.0
  %v569 = vadd.f32 %v539, 1.0
  %v570 = vadd.f32 %v541, 1.0
  %v571 = vadd.f32 %v543, 1.0
  %v572 = vadd.f32 %v545, 1.0
  %v573 = vadd.f32 %v547, 1.0
  %v574 = vadd.f32 %v549, 1.0
  %v575 = vadd.f32 %v551, 1.0
  %v576 = vadd.f32 %v553, 1.0
  %v577 = vadd.f32 %v555, 1.0
  %v578 = vadd.f32 %v557, 1.0
  %v579 = vadd.f32 %v559, 1.0
  %v580 = vadd.f32 %v561, 1.0
  %v581 = vadd.f32 %v563, 1.0
  %v582 = vadd.f32 %v565, 1.0
  %v583 = vadd.f32 %v567, 1.0
  %v584 = vrcp.pop %v568
  %v585 = vmul.f32 1.0, %v584
  %v586 = vrcp.pop %v569
  %v587 = vmul.f32 1.0, %v586
  %v588 = vrcp.pop %v570
  %v589 = vmul.f32 1.0, %v588
  %v590 = vrcp.pop %v571
  %v591 = vmul.f32 1.0, %v590
  %v592 = vrcp.pop %v572
  %v593 = vmul.f32 1.0, %v592
  %v594 = vrcp.pop %v573
  %v595 = vmul.f32 1.0, %v594
  %v596 = vrcp.pop %v574
  %v597 = vmul.f32 1.0, %v596
  %v598 = vrcp.pop %v575
  %v599 = vmul.f32 1.0, %v598
  %v600 = vrcp.pop %v576
  %v601 = vmul.f32 1.0, %v600
  %v602 = vrcp.pop %v577
  %v603 = vmul.f32 1.0, %v602
  %v604 = vrcp.pop %v578
  %v605 = vmul.f32 1.0, %v604
  %v606 = vrcp.pop %v579
  %v607 = vmul.f32 1.0, %v606
  %v608 = vrcp.pop %v580
  %v609 = vmul.f32 1.0, %v608
  %v610 = vrcp.pop %v581
  %v611 = vmul.f32 1.0, %v610
  %v612 = vrcp.pop %v582
  %v613 = vmul.f32 1.0, %v612
  %v614 = vrcp.pop %v583
  %v615 = vmul.f32 1.0, %v614
  %v616 = vmul.f32 %v504, %v585
  %v617 = vmul.f32 %v505, %v587
  %v618 = vmul.f32 %v506, %v589
  %v619 = vmul.f32 %v507, %v591
  %v620 = vmul.f32 %v508, %v593
  %v621 = vmul.f32 %v509, %v595
  %v622 = vmul.f32 %v510, %v597
  %v623 = vmul.f32 %v511, %v599
  %v624 = vmul.f32 %v512, %v601
  %v625 = vmul.f32 %v513, %v603
  %v626 = vmul.f32 %v514, %v605
  %v627 = vmul.f32 %v515, %v607
  %v628 = vmul.f32 %v516, %v609
  %v629 = vmul.f32 %v517, %v611
  %v630 = vmul.f32 %v518, %v613
  %v631 = vmul.f32 %v519, %v615
  %v632 = vpack.c.bf16 %v617, %v616
  %v633 = vpack.c.bf16 %v619, %v618
  %v634 = vpack.c.bf16 %v621, %v620
  %v635 = vpack.c.bf16 %v623, %v622
  %v636 = vpack.c.bf16 %v625, %v624
  %v637 = vpack.c.bf16 %v627, %v626
  %v638 = vpack.c.bf16 %v629, %v628
  %v639 = vpack.c.bf16 %v631, %v630
  %v640 = vld [vmem:[%s4] sm:$0xff]
  %v641 = vld [vmem:[%s4 + $0x8] sm:$0xff]
  %v642 = vpack.c.bf16 %v641, %v640
  %v644 = vsel %vm66, %v632, 0
  %v647 = vsel %vm66, %v633, 0
  %v650 = vsel %vm66, %v634, 0
  %v653 = vsel %vm66, %v635, 0
  %v656 = vsel %vm66, %v636, 0
  %v659 = vsel %vm66, %v637, 0
  %v662 = vsel %vm66, %v638, 0
  %v665 = vsel %vm66, %v639, 0
  %667 = vmatprep.subr.bf16.mxu0 0
  %668 = vmatpush1.bf16.msra.mxu0 %v642
  %669 = vmatprep.subr.bf16.mxu0 0
  %670 = vmatpush1.bf16.msra.mxu0 0
  %671 = vmatprep.subr.bf16.mxu0 0
  %672 = vmatpush1.bf16.msra.mxu0 0
  %673 = vmatprep.subr.bf16.mxu0 0
  %674 = vmatpush1.bf16.msra.mxu0 0
  %675 = vmatprep.subr.bf16.mxu0 0
  %676 = vmatpush1.bf16.msra.mxu0 0
  %677 = vmatprep.subr.bf16.mxu0 0
  %678 = vmatpush1.bf16.msra.mxu0 0
  %679 = vmatprep.subr.bf16.mxu0 0
  %680 = vmatpush1.bf16.msra.mxu0 0
  %681 = vmatprep.subr.bf16.mxu0 0
  %682 = vmatpush1.bf16.msra.mxu0 0
  %683 = vmatprep.subr.bf16.mxu0 0
  %684 = vmatpush1.bf16.msra.mxu0 0
  %685 = vmatprep.subr.bf16.mxu0 0
  %686 = vmatpush1.bf16.msra.mxu0 0
  %687 = vmatprep.subr.bf16.mxu0 0
  %688 = vmatpush1.bf16.msra.mxu0 0
  %689 = vmatprep.subr.bf16.mxu0 0
  %690 = vmatpush1.bf16.msra.mxu0 0
  %691 = vmatprep.subr.bf16.mxu0 0
  %692 = vmatpush1.bf16.msra.mxu0 0
  %693 = vmatprep.subr.bf16.mxu0 0
  %694 = vmatpush1.bf16.msra.mxu0 0
  %695 = vmatprep.subr.bf16.mxu0 0
  %696 = vmatpush1.bf16.msra.mxu0 0
  %697 = vmatprep.subr.bf16.mxu0 0
  %698 = vmatpush1.bf16.msra.mxu0 0
  %699 = vmatprep.mubr.bf16.mxu0 0
  %700 = vmatmul.mubr.bf16.gmra.mrb[0].mxu0 %v644
  %v701 = vpop.f32.mrb[0].mxu0
  %v702 = vadd.f32 0.0, %v701
  %v703 = vpop.f32.mrb[0].mxu0
  %v704 = vpop.f32.mrb[0].mxu0
  %v705 = vadd.f32 0.0, %v704
  %v706 = vpop.f32.mrb[0].mxu0
  %707 = vmatprep.mubr.bf16.mxu0 0
  %708 = vmatmul.mubr.bf16.gmra.mrb[0].mxu0 %v647
  %v709 = vpop.f32.mrb[0].mxu0
  %v710 = vadd.f32 0.0, %v709
  %v711 = vpop.f32.mrb[0].mxu0
  %v712 = vpop.f32.mrb[0].mxu0
  %v713 = vadd.f32 0.0, %v712
  %v714 = vpop.f32.mrb[0].mxu0
  %715 = vmatprep.mubr.bf16.mxu0 0
  %716 = vmatmul.mubr.bf16.gmra.mrb[0].mxu0 %v650
  %v717 = vpop.f32.mrb[0].mxu0
  %v718 = vadd.f32 0.0, %v717
  %v719 = vpop.f32.mrb[0].mxu0
  %v720 = vpop.f32.mrb[0].mxu0
  %v721 = vadd.f32 0.0, %v720
  %v722 = vpop.f32.mrb[0].mxu0
  %723 = vmatprep.mubr.bf16.mxu0 0
  %724 = vmatmul.mubr.bf16.gmra.mrb[0].mxu0 %v653
  %v725 = vpop.f32.mrb[0].mxu0
  %v726 = vadd.f32 0.0, %v725
  %v727 = vpop.f32.mrb[0].mxu0
  %v728 = vpop.f32.mrb[0].mxu0
  %v729 = vadd.f32 0.0, %v728
  %v730 = vpop.f32.mrb[0].mxu0
  %731 = vmatprep.mubr.bf16.mxu0 0
  %732 = vmatmul.mubr.bf16.gmra.mrb[0].mxu0 %v656
  %v733 = vpop.f32.mrb[0].mxu0
  %v734 = vadd.f32 0.0, %v733
  %v735 = vpop.f32.mrb[0].mxu0
  %v736 = vpop.f32.mrb[0].mxu0
  %v737 = vadd.f32 0.0, %v736
  %v738 = vpop.f32.mrb[0].mxu0
  %739 = vmatprep.mubr.bf16.mxu0 0
  %740 = vmatmul.mubr.bf16.gmra.mrb[0].mxu0 %v659
  %v741 = vpop.f32.mrb[0].mxu0
  %v742 = vadd.f32 0.0, %v741
  %v743 = vpop.f32.mrb[0].mxu0
  %v744 = vpop.f32.mrb[0].mxu0
  %v745 = vadd.f32 0.0, %v744
  %v746 = vpop.f32.mrb[0].mxu0
  %747 = vmatprep.mubr.bf16.mxu0 0
  %748 = vmatmul.mubr.bf16.gmra.mrb[0].mxu0 %v662
  %v749 = vpop.f32.mrb[0].mxu0
  %v750 = vadd.f32 0.0, %v749
  %v751 = vpop.f32.mrb[0].mxu0
  %v752 = vpop.f32.mrb[0].mxu0
  %v753 = vadd.f32 0.0, %v752
  %v754 = vpop.f32.mrb[0].mxu0
  %755 = vmatprep.mubr.bf16.mxu0 0
  %756 = vmatmul.mubr.bf16.gmra.mrb[0].mxu0 %v665
  %v757 = vpop.f32.mrb[0].mxu0
  %v758 = vadd.f32 0.0, %v757
  %v759 = vpop.f32.mrb[0].mxu0
  %v760 = vpop.f32.mrb[0].mxu0
  %v761 = vadd.f32 0.0, %v760
  %v762 = vpop.f32.mrb[0].mxu0
  %763 = vdwg.mxu0
  %v764 = vld [vmem:[%s5] sm:$0x1]
  %v766 = vlaneseq
  %v767 = vshrl.u32 %v766, 7
  %v768 = vsub.s32 0, %v767
  %v769 = vrot.slane %v764, %v768
  %v771 = vadd.f32 %v702, %v769
  %v772 = vadd.f32 %v705, %v769
  %v773 = vadd.f32 %v710, %v769
  %v774 = vadd.f32 %v713, %v769
  %v775 = vadd.f32 %v718, %v769
  %v776 = vadd.f32 %v721, %v769
  %v777 = vadd.f32 %v726, %v769
  %v778 = vadd.f32 %v729, %v769
  %v779 = vadd.f32 %v734, %v769
  %v780 = vadd.f32 %v737, %v769
  %v781 = vadd.f32 %v742, %v769
  %v782 = vadd.f32 %v745, %v769
  %v783 = vadd.f32 %v750, %v769
  %v784 = vadd.f32 %v753, %v769
  %v785 = vadd.f32 %v758, %v769
  %v786 = vadd.f32 %v761, %v769
  %v787 = vmax.f32 %v771, 0.0
  %v788 = vmax.f32 %v772, 0.0
  %v789 = vmax.f32 %v773, 0.0
  %v790 = vmax.f32 %v774, 0.0
  %v791 = vmax.f32 %v775, 0.0
  %v792 = vmax.f32 %v776, 0.0
  %v793 = vmax.f32 %v777, 0.0
  %v794 = vmax.f32 %v778, 0.0
  %v795 = vmax.f32 %v779, 0.0
  %v796 = vmax.f32 %v780, 0.0
  %v797 = vmax.f32 %v781, 0.0
  %v798 = vmax.f32 %v782, 0.0
  %v799 = vmax.f32 %v783, 0.0
  %v800 = vmax.f32 %v784, 0.0
  %v801 = vmax.f32 %v785, 0.0
  %v802 = vmax.f32 %v786, 0.0
  %vm803 = vcmp.ne.f32.partialorder %v771, %v771
  %vm804 = vcmp.ne.f32.partialorder %v772, %v772
  %vm805 = vcmp.ne.f32.partialorder %v773, %v773
  %vm806 = vcmp.ne.f32.partialorder %v774, %v774
  %vm807 = vcmp.ne.f32.partialorder %v775, %v775
  %vm808 = vcmp.ne.f32.partialorder %v776, %v776
  %vm809 = vcmp.ne.f32.partialorder %v777, %v777
  %vm810 = vcmp.ne.f32.partialorder %v778, %v778
  %vm811 = vcmp.ne.f32.partialorder %v779, %v779
  %vm812 = vcmp.ne.f32.partialorder %v780, %v780
  %vm813 = vcmp.ne.f32.partialorder %v781, %v781
  %vm814 = vcmp.ne.f32.partialorder %v782, %v782
  %vm815 = vcmp.ne.f32.partialorder %v783, %v783
  %vm816 = vcmp.ne.f32.partialorder %v784, %v784
  %vm817 = vcmp.ne.f32.partialorder %v785, %v785
  %vm818 = vcmp.ne.f32.partialorder %v786, %v786
  %v819 = vadd.f32 %v771, 0.0
  %v820 = vadd.f32 %v772, 0.0
  %v821 = vadd.f32 %v773, 0.0
  %v822 = vadd.f32 %v774, 0.0
  %v823 = vadd.f32 %v775, 0.0
  %v824 = vadd.f32 %v776, 0.0
  %v825 = vadd.f32 %v777, 0.0
  %v826 = vadd.f32 %v778, 0.0
  %v827 = vadd.f32 %v779, 0.0
  %v828 = vadd.f32 %v780, 0.0
  %v829 = vadd.f32 %v781, 0.0
  %v830 = vadd.f32 %v782, 0.0
  %v831 = vadd.f32 %v783, 0.0
  %v832 = vadd.f32 %v784, 0.0
  %v833 = vadd.f32 %v785, 0.0
  %v834 = vadd.f32 %v786, 0.0
  %v835 = vand.u32 2147483647, %v771
  %v836 = vand.u32 2147483647, %v772
  %v837 = vand.u32 2147483647, %v773
  %v838 = vand.u32 2147483647, %v774
  %v839 = vand.u32 2147483647, %v775
  %v840 = vand.u32 2147483647, %v776
  %v841 = vand.u32 2147483647, %v777
  %v842 = vand.u32 2147483647, %v778
  %v843 = vand.u32 2147483647, %v779
  %v844 = vand.u32 2147483647, %v780
  %v845 = vand.u32 2147483647, %v781
  %v846 = vand.u32 2147483647, %v782
  %v847 = vand.u32 2147483647, %v783
  %v848 = vand.u32 2147483647, %v784
  %v849 = vand.u32 2147483647, %v785
  %v850 = vand.u32 2147483647, %v786
  %v851 = vsub.f32 0.0, %v835
  %v852 = vsub.f32 0.0, %v836
  %v853 = vsub.f32 0.0, %v837
  %v854 = vsub.f32 0.0, %v838
  %v855 = vsub.f32 0.0, %v839
  %v856 = vsub.f32 0.0, %v840
  %v857 = vsub.f32 0.0, %v841
  %v858 = vsub.f32 0.0, %v842
  %v859 = vsub.f32 0.0, %v843
  %v860 = vsub.f32 0.0, %v844
  %v861 = vsub.f32 0.0, %v845
  %v862 = vsub.f32 0.0, %v846
  %v863 = vsub.f32 0.0, %v847
  %v864 = vsub.f32 0.0, %v848
  %v865 = vsub.f32 0.0, %v849
  %v866 = vsub.f32 0.0, %v850
  %v867 = vmul.f32 %v851, 1.442695
  %v868 = vpow.pop %v867
  %v869 = vmul.f32 %v852, 1.442695
  %v870 = vpow.pop %v869
  %v871 = vmul.f32 %v853, 1.442695
  %v872 = vpow.pop %v871
  %v873 = vmul.f32 %v854, 1.442695
  %v874 = vpow.pop %v873
  %v875 = vmul.f32 %v855, 1.442695
  %v876 = vpow.pop %v875
  %v877 = vmul.f32 %v856, 1.442695
  %v878 = vpow.pop %v877
  %v879 = vmul.f32 %v857, 1.442695
  %v880 = vpow.pop %v879
  %v881 = vmul.f32 %v858, 1.442695
  %v882 = vpow.pop %v881
  %v883 = vmul.f32 %v859, 1.442695
  %v884 = vpow.pop %v883
  %v885 = vmul.f32 %v860, 1.442695
  %v886 = vpow.pop %v885
  %v887 = vmul.f32 %v861, 1.442695
  %v888 = vpow.pop %v887
  %v889 = vmul.f32 %v862, 1.442695
  %v890 = vpow.pop %v889
  %v891 = vmul.f32 %v863, 1.442695
  %v892 = vpow.pop %v891
  %v893 = vmul.f32 %v864, 1.442695
  %v894 = vpow.pop %v893
  %v895 = vmul.f32 %v865, 1.442695
  %v896 = vpow.pop %v895
  %v897 = vmul.f32 %v866, 1.442695
  %v898 = vpow.pop %v897
  %v899 = vadd.f32 %v868, 1.0
  %v900 = vlog2.pop %v899
  %v901 = vmul.f32 %v900, 0.6931472
  %v902 = vmul.f32 -0.5, %v868
  %v903 = vadd.f32 %v902, 1.0
  %v904 = vmul.f32 %v903, %v868
  %v905 = vand.u32 2147483647, %v868
  %vm906 = vcmp.lt.f32.partialorder %v905, 0.0004427343
  %v907 = vsel %vm906, %v904, %v901
  %v908 = vadd.f32 %v870, 1.0
  %v909 = vlog2.pop %v908
  %v910 = vmul.f32 %v909, 0.6931472
  %v911 = vmul.f32 -0.5, %v870
  %v912 = vadd.f32 %v911, 1.0
  %v913 = vmul.f32 %v912, %v870
  %v914 = vand.u32 2147483647, %v870
  %vm915 = vcmp.lt.f32.partialorder %v914, 0.0004427343
  %v916 = vsel %vm915, %v913, %v910
  %v917 = vadd.f32 %v872, 1.0
  %v918 = vlog2.pop %v917
  %v919 = vmul.f32 %v918, 0.6931472
  %v920 = vmul.f32 -0.5, %v872
  %v921 = vadd.f32 %v920, 1.0
  %v922 = vmul.f32 %v921, %v872
  %v923 = vand.u32 2147483647, %v872
  %vm924 = vcmp.lt.f32.partialorder %v923, 0.0004427343
  %v925 = vsel %vm924, %v922, %v919
  %v926 = vadd.f32 %v874, 1.0
  %v927 = vlog2.pop %v926
  %v928 = vmul.f32 %v927, 0.6931472
  %v929 = vmul.f32 -0.5, %v874
  %v930 = vadd.f32 %v929, 1.0
  %v931 = vmul.f32 %v930, %v874
  %v932 = vand.u32 2147483647, %v874
  %vm933 = vcmp.lt.f32.partialorder %v932, 0.0004427343
  %v934 = vsel %vm933, %v931, %v928
  %v935 = vadd.f32 %v876, 1.0
  %v936 = vlog2.pop %v935
  %v937 = vmul.f32 %v936, 0.6931472
  %v938 = vmul.f32 -0.5, %v876
  %v939 = vadd.f32 %v938, 1.0
  %v940 = vmul.f32 %v939, %v876
  %v941 = vand.u32 2147483647, %v876
  %vm942 = vcmp.lt.f32.partialorder %v941, 0.0004427343
  %v943 = vsel %vm942, %v940, %v937
  %v944 = vadd.f32 %v878, 1.0
  %v945 = vlog2.pop %v944
  %v946 = vmul.f32 %v945, 0.6931472
  %v947 = vmul.f32 -0.5, %v878
  %v948 = vadd.f32 %v947, 1.0
  %v949 = vmul.f32 %v948, %v878
  %v950 = vand.u32 2147483647, %v878
  %vm951 = vcmp.lt.f32.partialorder %v950, 0.0004427343
  %v952 = vsel %vm951, %v949, %v946
  %v953 = vadd.f32 %v880, 1.0
  %v954 = vlog2.pop %v953
  %v955 = vmul.f32 %v954, 0.6931472
  %v956 = vmul.f32 -0.5, %v880
  %v957 = vadd.f32 %v956, 1.0
  %v958 = vmul.f32 %v957, %v880
  %v959 = vand.u32 2147483647, %v880
  %vm960 = vcmp.lt.f32.partialorder %v959, 0.0004427343
  %v961 = vsel %vm960, %v958, %v955
  %v962 = vadd.f32 %v882, 1.0
  %v963 = vlog2.pop %v962
  %v964 = vmul.f32 %v963, 0.6931472
  %v965 = vmul.f32 -0.5, %v882
  %v966 = vadd.f32 %v965, 1.0
  %v967 = vmul.f32 %v966, %v882
  %v968 = vand.u32 2147483647, %v882
  %vm969 = vcmp.lt.f32.partialorder %v968, 0.0004427343
  %v970 = vsel %vm969, %v967, %v964
  %v971 = vadd.f32 %v884, 1.0
  %v972 = vlog2.pop %v971
  %v973 = vmul.f32 %v972, 0.6931472
  %v974 = vmul.f32 -0.5, %v884
  %v975 = vadd.f32 %v974, 1.0
  %v976 = vmul.f32 %v975, %v884
  %v977 = vand.u32 2147483647, %v884
  %vm978 = vcmp.lt.f32.partialorder %v977, 0.0004427343
  %v979 = vsel %vm978, %v976, %v973
  %v980 = vadd.f32 %v886, 1.0
  %v981 = vlog2.pop %v980
  %v982 = vmul.f32 %v981, 0.6931472
  %v983 = vmul.f32 -0.5, %v886
  %v984 = vadd.f32 %v983, 1.0
  %v985 = vmul.f32 %v984, %v886
  %v986 = vand.u32 2147483647, %v886
  %vm987 = vcmp.lt.f32.partialorder %v986, 0.0004427343
  %v988 = vsel %vm987, %v985, %v982
  %v989 = vadd.f32 %v888, 1.0
  %v990 = vlog2.pop %v989
  %v991 = vmul.f32 %v990, 0.6931472
  %v992 = vmul.f32 -0.5, %v888
  %v993 = vadd.f32 %v992, 1.0
  %v994 = vmul.f32 %v993, %v888
  %v995 = vand.u32 2147483647, %v888
  %vm996 = vcmp.lt.f32.partialorder %v995, 0.0004427343
  %v997 = vsel %vm996, %v994, %v991
  %v998 = vadd.f32 %v890, 1.0
  %v999 = vlog2.pop %v998
  %v1000 = vmul.f32 %v999, 0.6931472
  %v1001 = vmul.f32 -0.5, %v890
  %v1002 = vadd.f32 %v1001, 1.0
  %v1003 = vmul.f32 %v1002, %v890
  %v1004 = vand.u32 2147483647, %v890
  %vm1005 = vcmp.lt.f32.partialorder %v1004, 0.0004427343
  %v1006 = vsel %vm1005, %v1003, %v1000
  %v1007 = vadd.f32 %v892, 1.0
  %v1008 = vlog2.pop %v1007
  %v1009 = vmul.f32 %v1008, 0.6931472
  %v1010 = vmul.f32 -0.5, %v892
  %v1011 = vadd.f32 %v1010, 1.0
  %v1012 = vmul.f32 %v1011, %v892
  %v1013 = vand.u32 2147483647, %v892
  %vm1014 = vcmp.lt.f32.partialorder %v1013, 0.0004427343
  %v1015 = vsel %vm1014, %v1012, %v1009
  %v1016 = vadd.f32 %v894, 1.0
  %v1017 = vlog2.pop %v1016
  %v1018 = vmul.f32 %v1017, 0.6931472
  %v1019 = vmul.f32 -0.5, %v894
  %v1020 = vadd.f32 %v1019, 1.0
  %v1021 = vmul.f32 %v1020, %v894
  %v1022 = vand.u32 2147483647, %v894
  %vm1023 = vcmp.lt.f32.partialorder %v1022, 0.0004427343
  %v1024 = vsel %vm1023, %v1021, %v1018
  %v1025 = vadd.f32 %v896, 1.0
  %v1026 = vlog2.pop %v1025
  %v1027 = vmul.f32 %v1026, 0.6931472
  %v1028 = vmul.f32 -0.5, %v896
  %v1029 = vadd.f32 %v1028, 1.0
  %v1030 = vmul.f32 %v1029, %v896
  %v1031 = vand.u32 2147483647, %v896
  %vm1032 = vcmp.lt.f32.partialorder %v1031, 0.0004427343
  %v1033 = vsel %vm1032, %v1030, %v1027
  %v1034 = vadd.f32 %v898, 1.0
  %v1035 = vlog2.pop %v1034
  %v1036 = vmul.f32 %v1035, 0.6931472
  %v1037 = vmul.f32 -0.5, %v898
  %v1038 = vadd.f32 %v1037, 1.0
  %v1039 = vmul.f32 %v1038, %v898
  %v1040 = vand.u32 2147483647, %v898
  %vm1041 = vcmp.lt.f32.partialorder %v1040, 0.0004427343
  %v1042 = vsel %vm1041, %v1039, %v1036
  %v1043 = vadd.f32 %v787, %v907
  %v1044 = vadd.f32 %v788, %v916
  %v1045 = vadd.f32 %v789, %v925
  %v1046 = vadd.f32 %v790, %v934
  %v1047 = vadd.f32 %v791, %v943
  %v1048 = vadd.f32 %v792, %v952
  %v1049 = vadd.f32 %v793, %v961
  %v1050 = vadd.f32 %v794, %v970
  %v1051 = vadd.f32 %v795, %v979
  %v1052 = vadd.f32 %v796, %v988
  %v1053 = vadd.f32 %v797, %v997
  %v1054 = vadd.f32 %v798, %v1006
  %v1055 = vadd.f32 %v799, %v1015
  %v1056 = vadd.f32 %v800, %v1024
  %v1057 = vadd.f32 %v801, %v1033
  %v1058 = vadd.f32 %v802, %v1042
  %v1059 = vsel %vm803, %v819, %v1043
  %v1060 = vsel %vm804, %v820, %v1044
  %v1061 = vsel %vm805, %v821, %v1045
  %v1062 = vsel %vm806, %v822, %v1046
  %v1063 = vsel %vm807, %v823, %v1047
  %v1064 = vsel %vm808, %v824, %v1048
  %v1065 = vsel %vm809, %v825, %v1049
  %v1066 = vsel %vm810, %v826, %v1050
  %v1067 = vsel %vm811, %v827, %v1051
  %v1068 = vsel %vm812, %v828, %v1052
  %v1069 = vsel %vm813, %v829, %v1053
  %v1070 = vsel %vm814, %v830, %v1054
  %v1071 = vsel %vm815, %v831, %v1055
  %v1072 = vsel %vm816, %v832, %v1056
  %v1073 = vsel %vm817, %v833, %v1057
  %v1074 = vsel %vm818, %v834, %v1058
  %v1075 = vmul.f32 %v1059, %v616
  %v1076 = vmul.f32 %v1060, %v617
  %v1077 = vmul.f32 %v1061, %v618
  %v1078 = vmul.f32 %v1062, %v619
  %v1079 = vmul.f32 %v1063, %v620
  %v1080 = vmul.f32 %v1064, %v621
  %v1081 = vmul.f32 %v1065, %v622
  %v1082 = vmul.f32 %v1066, %v623
  %v1083 = vmul.f32 %v1067, %v624
  %v1084 = vmul.f32 %v1068, %v625
  %v1085 = vmul.f32 %v1069, %v626
  %v1086 = vmul.f32 %v1070, %v627
  %v1087 = vmul.f32 %v1071, %v628
  %v1088 = vmul.f32 %v1072, %v629
  %v1089 = vmul.f32 %v1073, %v630
  %v1090 = vmul.f32 %v1074, %v631
  %v1091 = vld [vmem:[%s6] sm:$0x3]
  %v1092 = vmul.f32 %v1091, 1.442695
  %v1093 = vpow.pop %v1092
  %v1094 = vsub.f32 0.0, %v1093
  %v1095 = vlaneseq
  %v1096 = vshrl.u32 %v1095, 7
  %v1097 = vsub.s32 0, %v1096
  %v1098 = vrot.slane %v1094, %v1097
  %v1099 = vmul.f32 %v1059, %v1098
  %v1100 = vmul.f32 %v1060, %v1098
  %v1101 = vmul.f32 %v1061, %v1098
  %v1102 = vmul.f32 %v1062, %v1098
  %v1103 = vmul.f32 %v1063, %v1098
  %v1104 = vmul.f32 %v1064, %v1098
  %v1105 = vmul.f32 %v1065, %v1098
  %v1106 = vmul.f32 %v1066, %v1098
  %v1107 = vmul.f32 %v1067, %v1098
  %v1108 = vmul.f32 %v1068, %v1098
  %v1109 = vmul.f32 %v1069, %v1098
  %v1110 = vmul.f32 %v1070, %v1098
  %v1111 = vmul.f32 %v1071, %v1098
  %v1112 = vmul.f32 %v1072, %v1098
  %v1113 = vmul.f32 %v1073, %v1098
  %v1114 = vmul.f32 %v1074, %v1098
  %v1115 = vmul.f32 %v1099, 1.442695
  %v1116 = vpow.pop %v1115
  %v1117 = vmul.f32 %v1100, 1.442695
  %v1118 = vpow.pop %v1117
  %v1119 = vmul.f32 %v1101, 1.442695
  %v1120 = vpow.pop %v1119
  %v1121 = vmul.f32 %v1102, 1.442695
  %v1122 = vpow.pop %v1121
  %v1123 = vmul.f32 %v1103, 1.442695
  %v1124 = vpow.pop %v1123
  %v1125 = vmul.f32 %v1104, 1.442695
  %v1126 = vpow.pop %v1125
  %v1127 = vmul.f32 %v1105, 1.442695
  %v1128 = vpow.pop %v1127
  %v1129 = vmul.f32 %v1106, 1.442695
  %v1130 = vpow.pop %v1129
  %v1131 = vmul.f32 %v1107, 1.442695
  %v1132 = vpow.pop %v1131
  %v1133 = vmul.f32 %v1108, 1.442695
  %v1134 = vpow.pop %v1133
  %v1135 = vmul.f32 %v1109, 1.442695
  %v1136 = vpow.pop %v1135
  %v1137 = vmul.f32 %v1110, 1.442695
  %v1138 = vpow.pop %v1137
  %v1139 = vmul.f32 %v1111, 1.442695
  %v1140 = vpow.pop %v1139
  %v1141 = vmul.f32 %v1112, 1.442695
  %v1142 = vpow.pop %v1141
  %v1143 = vmul.f32 %v1113, 1.442695
  %v1144 = vpow.pop %v1143
  %v1145 = vmul.f32 %v1114, 1.442695
  %v1146 = vpow.pop %v1145
  %1147 = vst.msk [vmem:[#allocation2] sm:$0xff] %vm66, %v1116
  %1148 = vst.msk [vmem:[#allocation2 + $0x8] sm:$0xff] %vm66, %v1118
  %1149 = vst.msk [vmem:[#allocation2 + $0x10] sm:$0xff] %vm66, %v1120
  %1150 = vst.msk [vmem:[#allocation2 + $0x18] sm:$0xff] %vm66, %v1122
  %1151 = vst.msk [vmem:[#allocation2 + $0x20] sm:$0xff] %vm66, %v1124
  %1152 = vst.msk [vmem:[#allocation2 + $0x28] sm:$0xff] %vm66, %v1126
  %1153 = vst.msk [vmem:[#allocation2 + $0x30] sm:$0xff] %vm66, %v1128
  %1154 = vst.msk [vmem:[#allocation2 + $0x38] sm:$0xff] %vm66, %v1130
  %1155 = vst.msk [vmem:[#allocation2 + $0x40] sm:$0xff] %vm66, %v1132
  %1156 = vst.msk [vmem:[#allocation2 + $0x48] sm:$0xff] %vm66, %v1134
  %1157 = vst.msk [vmem:[#allocation2 + $0x50] sm:$0xff] %vm66, %v1136
  %1158 = vst.msk [vmem:[#allocation2 + $0x58] sm:$0xff] %vm66, %v1138
  %1159 = vst.msk [vmem:[#allocation2 + $0x60] sm:$0xff] %vm66, %v1140
  %1160 = vst.msk [vmem:[#allocation2 + $0x68] sm:$0xff] %vm66, %v1142
  %1161 = vst.msk [vmem:[#allocation2 + $0x70] sm:$0xff] %vm66, %v1144
  %1162 = vst.msk [vmem:[#allocation2 + $0x78] sm:$0xff] %vm66, %v1146
  %v1163 = vlaneseq
  %v1164 = vshrl.u32 %v1163, 7
  %v1165 = vsub.s32 1, %v1164
  %v1166 = vrot.slane %v1094, %v1165
  %v1167 = vmul.f32 %v1059, %v1166
  %v1168 = vmul.f32 %v1060, %v1166
  %v1169 = vmul.f32 %v1061, %v1166
  %v1170 = vmul.f32 %v1062, %v1166
  %v1171 = vmul.f32 %v1063, %v1166
  %v1172 = vmul.f32 %v1064, %v1166
  %v1173 = vmul.f32 %v1065, %v1166
  %v1174 = vmul.f32 %v1066, %v1166
  %v1175 = vmul.f32 %v1067, %v1166
  %v1176 = vmul.f32 %v1068, %v1166
  %v1177 = vmul.f32 %v1069, %v1166
  %v1178 = vmul.f32 %v1070, %v1166
  %v1179 = vmul.f32 %v1071, %v1166
  %v1180 = vmul.f32 %v1072, %v1166
  %v1181 = vmul.f32 %v1073, %v1166
  %v1182 = vmul.f32 %v1074, %v1166
  %v1183 = vmul.f32 %v1167, 1.442695
  %v1184 = vpow.pop %v1183
  %v1185 = vmul.f32 %v1168, 1.442695
  %v1186 = vpow.pop %v1185
  %v1187 = vmul.f32 %v1169, 1.442695
  %v1188 = vpow.pop %v1187
  %v1189 = vmul.f32 %v1170, 1.442695
  %v1190 = vpow.pop %v1189
  %v1191 = vmul.f32 %v1171, 1.442695
  %v1192 = vpow.pop %v1191
  %v1193 = vmul.f32 %v1172, 1.442695
  %v1194 = vpow.pop %v1193
  %v1195 = vmul.f32 %v1173, 1.442695
  %v1196 = vpow.pop %v1195
  %v1197 = vmul.f32 %v1174, 1.442695
  %v1198 = vpow.pop %v1197
  %v1199 = vmul.f32 %v1175, 1.442695
  %v1200 = vpow.pop %v1199
  %v1201 = vmul.f32 %v1176, 1.442695
  %v1202 = vpow.pop %v1201
  %v1203 = vmul.f32 %v1177, 1.442695
  %v1204 = vpow.pop %v1203
  %v1205 = vmul.f32 %v1178, 1.442695
  %v1206 = vpow.pop %v1205
  %v1207 = vmul.f32 %v1179, 1.442695
  %v1208 = vpow.pop %v1207
  %v1209 = vmul.f32 %v1180, 1.442695
  %v1210 = vpow.pop %v1209
  %v1211 = vmul.f32 %v1181, 1.442695
  %v1212 = vpow.pop %v1211
  %v1213 = vmul.f32 %v1182, 1.442695
  %v1214 = vpow.pop %v1213
  %1215 = vst.msk [vmem:[#allocation3] sm:$0xff] %vm66, %v1184
  %1216 = vst.msk [vmem:[#allocation3 + $0x8] sm:$0xff] %vm66, %v1186
  %1217 = vst.msk [vmem:[#allocation3 + $0x10] sm:$0xff] %vm66, %v1188
  %1218 = vst.msk [vmem:[#allocation3 + $0x18] sm:$0xff] %vm66, %v1190
  %1219 = vst.msk [vmem:[#allocation3 + $0x20] sm:$0xff] %vm66, %v1192
  %1220 = vst.msk [vmem:[#allocation3 + $0x28] sm:$0xff] %vm66, %v1194
  %1221 = vst.msk [vmem:[#allocation3 + $0x30] sm:$0xff] %vm66, %v1196
  %1222 = vst.msk [vmem:[#allocation3 + $0x38] sm:$0xff] %vm66, %v1198
  %1223 = vst.msk [vmem:[#allocation3 + $0x40] sm:$0xff] %vm66, %v1200
  %1224 = vst.msk [vmem:[#allocation3 + $0x48] sm:$0xff] %vm66, %v1202
  %1225 = vst.msk [vmem:[#allocation3 + $0x50] sm:$0xff] %vm66, %v1204
  %1226 = vst.msk [vmem:[#allocation3 + $0x58] sm:$0xff] %vm66, %v1206
  %1227 = vst.msk [vmem:[#allocation3 + $0x60] sm:$0xff] %vm66, %v1208
  %1228 = vst.msk [vmem:[#allocation3 + $0x68] sm:$0xff] %vm66, %v1210
  %1229 = vst.msk [vmem:[#allocation3 + $0x70] sm:$0xff] %vm66, %v1212
  %1230 = vst.msk [vmem:[#allocation3 + $0x78] sm:$0xff] %vm66, %v1214
  %1232 = vset.pattern.permute.xlu0 16
  %1233 = vperm.xlu0 %1232, %v702
  %v1234 = vpop.permute.xlu0 %1233
  %1237 = vset.pattern.permute.xlu0 16
  %1238 = vperm.xlu0 %1237, %v705
  %v1239 = vpop.permute.xlu0 %1238
  %1242 = vset.pattern.permute.xlu0 16
  %1243 = vperm.xlu0 %1242, %v710
  %v1244 = vpop.permute.xlu0 %1243
  %1247 = vset.pattern.permute.xlu0 16
  %1248 = vperm.xlu0 %1247, %v713
  %v1249 = vpop.permute.xlu0 %1248
  %1252 = vset.pattern.permute.xlu0 16
  %1253 = vperm.xlu0 %1252, %v718
  %v1254 = vpop.permute.xlu0 %1253
  %1257 = vset.pattern.permute.xlu0 16
  %1258 = vperm.xlu0 %1257, %v721
  %v1259 = vpop.permute.xlu0 %1258
  %1262 = vset.pattern.permute.xlu0 16
  %1263 = vperm.xlu0 %1262, %v726
  %v1264 = vpop.permute.xlu0 %1263
  %1267 = vset.pattern.permute.xlu0 16
  %1268 = vperm.xlu0 %1267, %v729
  %v1269 = vpop.permute.xlu0 %1268
  %1272 = vset.pattern.permute.xlu0 16
  %1273 = vperm.xlu0 %1272, %v734
  %v1274 = vpop.permute.xlu0 %1273
  %1277 = vset.pattern.permute.xlu0 16
  %1278 = vperm.xlu0 %1277, %v737
  %v1279 = vpop.permute.xlu0 %1278
  %1282 = vset.pattern.permute.xlu0 16
  %1283 = vperm.xlu0 %1282, %v742
  %v1284 = vpop.permute.xlu0 %1283
  %1287 = vset.pattern.permute.xlu0 16
  %1288 = vperm.xlu0 %1287, %v745
  %v1289 = vpop.permute.xlu0 %1288
  %1292 = vset.pattern.permute.xlu0 16
  %1293 = vperm.xlu0 %1292, %v750
  %v1294 = vpop.permute.xlu0 %1293
  %1297 = vset.pattern.permute.xlu0 16
  %1298 = vperm.xlu0 %1297, %v753
  %v1299 = vpop.permute.xlu0 %1298
  %1302 = vset.pattern.permute.xlu0 16
  %1303 = vperm.xlu0 %1302, %v758
  %v1304 = vpop.permute.xlu0 %1303
  %1307 = vset.pattern.permute.xlu0 16
  %1308 = vperm.xlu0 %1307, %v761
  %v1309 = vpop.permute.xlu0 %1308
  %v1311 = vmul.f32 %v1075, %v1234
  %v1312 = vmul.f32 %v1076, %v1239
  %v1313 = vmul.f32 %v1077, %v1244
  %v1314 = vmul.f32 %v1078, %v1249
  %v1315 = vmul.f32 %v1079, %v1254
  %v1316 = vmul.f32 %v1080, %v1259
  %v1317 = vmul.f32 %v1081, %v1264
  %v1318 = vmul.f32 %v1082, %v1269
  %v1319 = vmul.f32 %v1083, %v1274
  %v1320 = vmul.f32 %v1084, %v1279
  %v1321 = vmul.f32 %v1085, %v1284
  %v1322 = vmul.f32 %v1086, %v1289
  %v1323 = vmul.f32 %v1087, %v1294
  %v1324 = vmul.f32 %v1088, %v1299
  %v1325 = vmul.f32 %v1089, %v1304
  %v1326 = vmul.f32 %v1090, %v1309
  %1327 = vst.msk [vmem:[#allocation4] sm:$0xff] %vm66, %v1311
  %1328 = vst.msk [vmem:[#allocation4 + $0x8] sm:$0xff] %vm66, %v1312
  %1329 = vst.msk [vmem:[#allocation4 + $0x10] sm:$0xff] %vm66, %v1313
  %1330 = vst.msk [vmem:[#allocation4 + $0x18] sm:$0xff] %vm66, %v1314
  %1331 = vst.msk [vmem:[#allocation4 + $0x20] sm:$0xff] %vm66, %v1315
  %1332 = vst.msk [vmem:[#allocation4 + $0x28] sm:$0xff] %vm66, %v1316
  %1333 = vst.msk [vmem:[#allocation4 + $0x30] sm:$0xff] %vm66, %v1317
  %1334 = vst.msk [vmem:[#allocation4 + $0x38] sm:$0xff] %vm66, %v1318
  %1335 = vst.msk [vmem:[#allocation4 + $0x40] sm:$0xff] %vm66, %v1319
  %1336 = vst.msk [vmem:[#allocation4 + $0x48] sm:$0xff] %vm66, %v1320
  %1337 = vst.msk [vmem:[#allocation4 + $0x50] sm:$0xff] %vm66, %v1321
  %1338 = vst.msk [vmem:[#allocation4 + $0x58] sm:$0xff] %vm66, %v1322
  %1339 = vst.msk [vmem:[#allocation4 + $0x60] sm:$0xff] %vm66, %v1323
  %1340 = vst.msk [vmem:[#allocation4 + $0x68] sm:$0xff] %vm66, %v1324
  %1341 = vst.msk [vmem:[#allocation4 + $0x70] sm:$0xff] %vm66, %v1325
  %1342 = vst.msk [vmem:[#allocation4 + $0x78] sm:$0xff] %vm66, %v1326
  %1343 = vset.pattern.permute.xlu0 17
  %1344 = vperm.xlu0 %1343, %v702
  %v1345 = vpop.permute.xlu0 %1344
  %1347 = vset.pattern.permute.xlu0 17
  %1348 = vperm.xlu0 %1347, %v705
  %v1349 = vpop.permute.xlu0 %1348
  %1351 = vset.pattern.permute.xlu0 17
  %1352 = vperm.xlu0 %1351, %v710
  %v1353 = vpop.permute.xlu0 %1352
  %1355 = vset.pattern.permute.xlu0 17
  %1356 = vperm.xlu0 %1355, %v713
  %v1357 = vpop.permute.xlu0 %1356
  %1359 = vset.pattern.permute.xlu0 17
  %1360 = vperm.xlu0 %1359, %v718
  %v1361 = vpop.permute.xlu0 %1360
  %1363 = vset.pattern.permute.xlu0 17
  %1364 = vperm.xlu0 %1363, %v721
  %v1365 = vpop.permute.xlu0 %1364
  %1367 = vset.pattern.permute.xlu0 17
  %1368 = vperm.xlu0 %1367, %v726
  %v1369 = vpop.permute.xlu0 %1368
  %1371 = vset.pattern.permute.xlu0 17
  %1372 = vperm.xlu0 %1371, %v729
  %v1373 = vpop.permute.xlu0 %1372
  %1375 = vset.pattern.permute.xlu0 17
  %1376 = vperm.xlu0 %1375, %v734
  %v1377 = vpop.permute.xlu0 %1376
  %1379 = vset.pattern.permute.xlu0 17
  %1380 = vperm.xlu0 %1379, %v737
  %v1381 = vpop.permute.xlu0 %1380
  %1383 = vset.pattern.permute.xlu0 17
  %1384 = vperm.xlu0 %1383, %v742
  %v1385 = vpop.permute.xlu0 %1384
  %1387 = vset.pattern.permute.xlu0 17
  %1388 = vperm.xlu0 %1387, %v745
  %v1389 = vpop.permute.xlu0 %1388
  %1391 = vset.pattern.permute.xlu0 17
  %1392 = vperm.xlu0 %1391, %v750
  %v1393 = vpop.permute.xlu0 %1392
  %1395 = vset.pattern.permute.xlu0 17
  %1396 = vperm.xlu0 %1395, %v753
  %v1397 = vpop.permute.xlu0 %1396
  %1399 = vset.pattern.permute.xlu0 17
  %1400 = vperm.xlu0 %1399, %v758
  %v1401 = vpop.permute.xlu0 %1400
  %1403 = vset.pattern.permute.xlu0 17
  %1404 = vperm.xlu0 %1403, %v761
  %v1405 = vpop.permute.xlu0 %1404
  %v1407 = vmul.f32 %v1075, %v1345
  %v1408 = vmul.f32 %v1076, %v1349
  %v1409 = vmul.f32 %v1077, %v1353
  %v1410 = vmul.f32 %v1078, %v1357
  %v1411 = vmul.f32 %v1079, %v1361
  %v1412 = vmul.f32 %v1080, %v1365
  %v1413 = vmul.f32 %v1081, %v1369
  %v1414 = vmul.f32 %v1082, %v1373
  %v1415 = vmul.f32 %v1083, %v1377
  %v1416 = vmul.f32 %v1084, %v1381
  %v1417 = vmul.f32 %v1085, %v1385
  %v1418 = vmul.f32 %v1086, %v1389
  %v1419 = vmul.f32 %v1087, %v1393
  %v1420 = vmul.f32 %v1088, %v1397
  %v1421 = vmul.f32 %v1089, %v1401
  %v1422 = vmul.f32 %v1090, %v1405
  %1423 = vst.msk [vmem:[#allocation5] sm:$0xff] %vm66, %v1407
  %1424 = vst.msk [vmem:[#allocation5 + $0x8] sm:$0xff] %vm66, %v1408
  %1425 = vst.msk [vmem:[#allocation5 + $0x10] sm:$0xff] %vm66, %v1409
  %1426 = vst.msk [vmem:[#allocation5 + $0x18] sm:$0xff] %vm66, %v1410
  %1427 = vst.msk [vmem:[#allocation5 + $0x20] sm:$0xff] %vm66, %v1411
  %1428 = vst.msk [vmem:[#allocation5 + $0x28] sm:$0xff] %vm66, %v1412
  %1429 = vst.msk [vmem:[#allocation5 + $0x30] sm:$0xff] %vm66, %v1413
  %1430 = vst.msk [vmem:[#allocation5 + $0x38] sm:$0xff] %vm66, %v1414
  %1431 = vst.msk [vmem:[#allocation5 + $0x40] sm:$0xff] %vm66, %v1415
  %1432 = vst.msk [vmem:[#allocation5 + $0x48] sm:$0xff] %vm66, %v1416
  %1433 = vst.msk [vmem:[#allocation5 + $0x50] sm:$0xff] %vm66, %v1417
  %1434 = vst.msk [vmem:[#allocation5 + $0x58] sm:$0xff] %vm66, %v1418
  %1435 = vst.msk [vmem:[#allocation5 + $0x60] sm:$0xff] %vm66, %v1419
  %1436 = vst.msk [vmem:[#allocation5 + $0x68] sm:$0xff] %vm66, %v1420
  %1437 = vst.msk [vmem:[#allocation5 + $0x70] sm:$0xff] %vm66, %v1421
  %1438 = vst.msk [vmem:[#allocation5 + $0x78] sm:$0xff] %vm66, %v1422
  %1439 = vset.pattern.permute.xlu0 18
  %1440 = vperm.xlu0 %1439, %v702
  %v1441 = vpop.permute.xlu0 %1440
  %1443 = vset.pattern.permute.xlu0 18
  %1444 = vperm.xlu0 %1443, %v705
  %v1445 = vpop.permute.xlu0 %1444
  %1447 = vset.pattern.permute.xlu0 18
  %1448 = vperm.xlu0 %1447, %v710
  %v1449 = vpop.permute.xlu0 %1448
  %1451 = vset.pattern.permute.xlu0 18
  %1452 = vperm.xlu0 %1451, %v713
  %v1453 = vpop.permute.xlu0 %1452
  %1455 = vset.pattern.permute.xlu0 18
  %1456 = vperm.xlu0 %1455, %v718
  %v1457 = vpop.permute.xlu0 %1456
  %1459 = vset.pattern.permute.xlu0 18
  %1460 = vperm.xlu0 %1459, %v721
  %v1461 = vpop.permute.xlu0 %1460
  %1463 = vset.pattern.permute.xlu0 18
  %1464 = vperm.xlu0 %1463, %v726
  %v1465 = vpop.permute.xlu0 %1464
  %1467 = vset.pattern.permute.xlu0 18
  %1468 = vperm.xlu0 %1467, %v729
  %v1469 = vpop.permute.xlu0 %1468
  %1471 = vset.pattern.permute.xlu0 18
  %1472 = vperm.xlu0 %1471, %v734
  %v1473 = vpop.permute.xlu0 %1472
  %1475 = vset.pattern.permute.xlu0 18
  %1476 = vperm.xlu0 %1475, %v737
  %v1477 = vpop.permute.xlu0 %1476
  %1479 = vset.pattern.permute.xlu0 18
  %1480 = vperm.xlu0 %1479, %v742
  %v1481 = vpop.permute.xlu0 %1480
  %1483 = vset.pattern.permute.xlu0 18
  %1484 = vperm.xlu0 %1483, %v745
  %v1485 = vpop.permute.xlu0 %1484
  %1487 = vset.pattern.permute.xlu0 18
  %1488 = vperm.xlu0 %1487, %v750
  %v1489 = vpop.permute.xlu0 %1488
  %1491 = vset.pattern.permute.xlu0 18
  %1492 = vperm.xlu0 %1491, %v753
  %v1493 = vpop.permute.xlu0 %1492
  %1495 = vset.pattern.permute.xlu0 18
  %1496 = vperm.xlu0 %1495, %v758
  %v1497 = vpop.permute.xlu0 %1496
  %1499 = vset.pattern.permute.xlu0 18
  %1500 = vperm.xlu0 %1499, %v761
  %v1501 = vpop.permute.xlu0 %1500
  %1503 = vst.msk [vmem:[#allocation6] sm:$0xff] %vm66, %v1441
  %1504 = vst.msk [vmem:[#allocation6 + $0x8] sm:$0xff] %vm66, %v1445
  %1505 = vst.msk [vmem:[#allocation6 + $0x10] sm:$0xff] %vm66, %v1449
  %1506 = vst.msk [vmem:[#allocation6 + $0x18] sm:$0xff] %vm66, %v1453
  %1507 = vst.msk [vmem:[#allocation6 + $0x20] sm:$0xff] %vm66, %v1457
  %1508 = vst.msk [vmem:[#allocation6 + $0x28] sm:$0xff] %vm66, %v1461
  %1509 = vst.msk [vmem:[#allocation6 + $0x30] sm:$0xff] %vm66, %v1465
  %1510 = vst.msk [vmem:[#allocation6 + $0x38] sm:$0xff] %vm66, %v1469
  %1511 = vst.msk [vmem:[#allocation6 + $0x40] sm:$0xff] %vm66, %v1473
  %1512 = vst.msk [vmem:[#allocation6 + $0x48] sm:$0xff] %vm66, %v1477
  %1513 = vst.msk [vmem:[#allocation6 + $0x50] sm:$0xff] %vm66, %v1481
  %1514 = vst.msk [vmem:[#allocation6 + $0x58] sm:$0xff] %vm66, %v1485
  %1515 = vst.msk [vmem:[#allocation6 + $0x60] sm:$0xff] %vm66, %v1489
  %1516 = vst.msk [vmem:[#allocation6 + $0x68] sm:$0xff] %vm66, %v1493
  %1517 = vst.msk [vmem:[#allocation6 + $0x70] sm:$0xff] %vm66, %v1497
  %1518 = vst.msk [vmem:[#allocation6 + $0x78] sm:$0xff] %vm66, %v1501
  %1519 = vset.pattern.permute.xlu0 19
  %1520 = vperm.xlu0 %1519, %v702
  %v1521 = vpop.permute.xlu0 %1520
  %1523 = vset.pattern.permute.xlu0 19
  %1524 = vperm.xlu0 %1523, %v705
  %v1525 = vpop.permute.xlu0 %1524
  %1527 = vset.pattern.permute.xlu0 19
  %1528 = vperm.xlu0 %1527, %v710
  %v1529 = vpop.permute.xlu0 %1528
  %1531 = vset.pattern.permute.xlu0 19
  %1532 = vperm.xlu0 %1531, %v713
  %v1533 = vpop.permute.xlu0 %1532
  %1535 = vset.pattern.permute.xlu0 19
  %1536 = vperm.xlu0 %1535, %v718
  %v1537 = vpop.permute.xlu0 %1536
  %1539 = vset.pattern.permute.xlu0 19
  %1540 = vperm.xlu0 %1539, %v721
  %v1541 = vpop.permute.xlu0 %1540
  %1543 = vset.pattern.permute.xlu0 19
  %1544 = vperm.xlu0 %1543, %v726
  %v1545 = vpop.permute.xlu0 %1544
  %1547 = vset.pattern.permute.xlu0 19
  %1548 = vperm.xlu0 %1547, %v729
  %v1549 = vpop.permute.xlu0 %1548
  %1551 = vset.pattern.permute.xlu0 19
  %1552 = vperm.xlu0 %1551, %v734
  %v1553 = vpop.permute.xlu0 %1552
  %1555 = vset.pattern.permute.xlu0 19
  %1556 = vperm.xlu0 %1555, %v737
  %v1557 = vpop.permute.xlu0 %1556
  %1559 = vset.pattern.permute.xlu0 19
  %1560 = vperm.xlu0 %1559, %v742
  %v1561 = vpop.permute.xlu0 %1560
  %1563 = vset.pattern.permute.xlu0 19
  %1564 = vperm.xlu0 %1563, %v745
  %v1565 = vpop.permute.xlu0 %1564
  %1567 = vset.pattern.permute.xlu0 19
  %1568 = vperm.xlu0 %1567, %v750
  %v1569 = vpop.permute.xlu0 %1568
  %1571 = vset.pattern.permute.xlu0 19
  %1572 = vperm.xlu0 %1571, %v753
  %v1573 = vpop.permute.xlu0 %1572
  %1575 = vset.pattern.permute.xlu0 19
  %1576 = vperm.xlu0 %1575, %v758
  %v1577 = vpop.permute.xlu0 %1576
  %1579 = vset.pattern.permute.xlu0 19
  %1580 = vperm.xlu0 %1579, %v761
  %v1581 = vpop.permute.xlu0 %1580
  %1583 = vst.msk [vmem:[#allocation7] sm:$0xff] %vm66, %v1521
  %1584 = vst.msk [vmem:[#allocation7 + $0x8] sm:$0xff] %vm66, %v1525
  %1585 = vst.msk [vmem:[#allocation7 + $0x10] sm:$0xff] %vm66, %v1529
  %1586 = vst.msk [vmem:[#allocation7 + $0x18] sm:$0xff] %vm66, %v1533
  %1587 = vst.msk [vmem:[#allocation7 + $0x20] sm:$0xff] %vm66, %v1537
  %1588 = vst.msk [vmem:[#allocation7 + $0x28] sm:$0xff] %vm66, %v1541
  %1589 = vst.msk [vmem:[#allocation7 + $0x30] sm:$0xff] %vm66, %v1545
  %1590 = vst.msk [vmem:[#allocation7 + $0x38] sm:$0xff] %vm66, %v1549
  %1591 = vst.msk [vmem:[#allocation7 + $0x40] sm:$0xff] %vm66, %v1553
  %1592 = vst.msk [vmem:[#allocation7 + $0x48] sm:$0xff] %vm66, %v1557
  %1593 = vst.msk [vmem:[#allocation7 + $0x50] sm:$0xff] %vm66, %v1561
  %1594 = vst.msk [vmem:[#allocation7 + $0x58] sm:$0xff] %vm66, %v1565
  %1595 = vst.msk [vmem:[#allocation7 + $0x60] sm:$0xff] %vm66, %v1569
  %1596 = vst.msk [vmem:[#allocation7 + $0x68] sm:$0xff] %vm66, %v1573
  %1597 = vst.msk [vmem:[#allocation7 + $0x70] sm:$0xff] %vm66, %v1577
  %1598 = vst.msk [vmem:[#allocation7 + $0x78] sm:$0xff] %vm66, %v1581
  %vm1599 = vcmask 123904
  %1600 = vst.msk [vmem:[#allocation9] sm:$0x3] %vm1599, 0.0
  %1601 = vst.msk [vmem:[#allocation10] sm:$0x3] %vm1599, 0.0
  loop: start=0, step=1, limit=8
  $region46: #{tpu_custom_call.1} parent=0 // loop_pre_header
    _
  $region47: #{tpu_custom_call.1} parent=0 // loop_header
    %s1603 = sphi 0, %s1607
    %p1604 = scmp.ge.s32.totalorder %s1603, 8
  $region48: #{tpu_custom_call.1} parent=0 // loop_header_branch
    %1606 = sbr.rel (%p1604) target = $region52
  $region49: #{tpu_custom_call.1} parent=0 // loop_body
    %s1608 = smul.u32 %s1603, 8
    %s1609 = scalar_lea.vmem [#allocation2], %s1608
    %v1610 = vld [vmem:[%s1609] sm:$0xff]
    %v1611 = vld [vmem:[%s1609 + $0x40] sm:$0xff]
    %s1612 = scalar_lea.vmem [#allocation3], %s1608
    %v1613 = vld [vmem:[%s1612] sm:$0xff]
    %v1614 = vld [vmem:[%s1612 + $0x40] sm:$0xff]
    %s1615 = scalar_lea.vmem [#allocation4], %s1608
    %v1616 = vld [vmem:[%s1615] sm:$0xff]
    %v1617 = vld [vmem:[%s1615 + $0x40] sm:$0xff]
    %s1618 = scalar_lea.vmem [#allocation5], %s1608
    %v1619 = vld [vmem:[%s1618] sm:$0xff]
    %v1620 = vld [vmem:[%s1618 + $0x40] sm:$0xff]
    %s1621 = scalar_lea.vmem [#allocation6], %s1608
    %v1622 = vld [vmem:[%s1621] sm:$0xff]
    %v1623 = vld [vmem:[%s1621 + $0x40] sm:$0xff]
    %s1624 = scalar_lea.vmem [#allocation7], %s1608
    %v1625 = vld [vmem:[%s1624] sm:$0xff]
    %v1626 = vld [vmem:[%s1624 + $0x40] sm:$0xff]
    %v1627 = vld [vmem:[#allocation9] sm:$0x3]
    %v1628 = vld [vmem:[#allocation10] sm:$0x3]
    %v1630 = vrot.slane %v1627, 1
    %v1633 = vmul.f32 %v1610, %v1627
    %v1634 = vmul.f32 %v1611, %v1630
    %v1635 = vadd.f32 %v1633, %v1616
    %v1636 = vadd.f32 %v1634, %v1617
    %v1638 = vrot.slane %v1628, 1
    %v1641 = vmul.f32 %v1613, %v1628
    %v1642 = vmul.f32 %v1614, %v1638
    %v1643 = vadd.f32 %v1641, %v1619
    %v1644 = vadd.f32 %v1642, %v1620
    %v1645 = vmul.f32 %v1622, %v1635
    %v1646 = vmul.f32 %v1623, %v1636
    %v1647 = vmul.f32 %v1625, %v1643
    %v1648 = vmul.f32 %v1626, %v1644
    %v1649 = vadd.f32 %v1645, %v1647
    %v1650 = vadd.f32 %v1646, %v1648
    %vm1651 = vcmp.eq.s32.totalorder %v189, 0
    %v1652 = vsel %vm1651, 1, 0
    %vm1653 = vcmp.eq.s32.totalorder %v1652, 1
    %v1654 = vlaneseq
    %v1655 = vshrl.u32 %v1654, 7
    %v1656 = vsub.s32 0, %v1655
    %v1657 = vrot.slane %v1649, %v1656
    %v1658 = vlaneseq
    %v1659 = vshrl.u32 %v1658, 7
    %v1660 = vsub.s32 0, %v1659
    %v1661 = vrot.slane %v1650, %v1660
    %v1662 = vsel %vm1653, %v1657, 0.0
    %v1663 = vsel %vm1653, %v1661, 0.0
    %v1666 = vrot.slane %v1635, 7
    %v1667 = vrot.slane %v1636, 7
    %v1670 = vmul.f32 %v1610, %v1666
    %v1671 = vmul.f32 %v1611, %v1667
    %v1672 = vadd.f32 %v1670, %v1616
    %v1673 = vadd.f32 %v1671, %v1617
    %v1676 = vrot.slane %v1643, 7
    %v1677 = vrot.slane %v1644, 7
    %v1680 = vmul.f32 %v1613, %v1676
    %v1681 = vmul.f32 %v1614, %v1677
    %v1682 = vadd.f32 %v1680, %v1619
    %v1683 = vadd.f32 %v1681, %v1620
    %v1684 = vmul.f32 %v1622, %v1672
    %v1685 = vmul.f32 %v1623, %v1673
    %v1686 = vmul.f32 %v1625, %v1682
    %v1687 = vmul.f32 %v1626, %v1683
    %v1688 = vadd.f32 %v1684, %v1686
    %v1689 = vadd.f32 %v1685, %v1687
    %vm1690 = vcmp.eq.s32.totalorder %v189, 1
    %v1691 = vsel %vm1690, 1, 0
    %vm1692 = vcmp.eq.s32.totalorder %v1691, 1
    %v1693 = vlaneseq
    %v1694 = vshrl.u32 %v1693, 7
    %v1695 = vsub.s32 1, %v1694
    %v1696 = vrot.slane %v1688, %v1695
    %v1697 = vlaneseq
    %v1698 = vshrl.u32 %v1697, 7
    %v1699 = vsub.s32 1, %v1698
    %v1700 = vrot.slane %v1689, %v1699
    %v1701 = vsel %vm1692, %v1696, %v1662
    %v1702 = vsel %vm1692, %v1700, %v1663
    %v1705 = vrot.slane %v1672, 7
    %v1706 = vrot.slane %v1673, 7
    %v1709 = vmul.f32 %v1610, %v1705
    %v1710 = vmul.f32 %v1611, %v1706
    %v1711 = vadd.f32 %v1709, %v1616
    %v1712 = vadd.f32 %v1710, %v1617
    %v1715 = vrot.slane %v1682, 7
    %v1716 = vrot.slane %v1683, 7
    %v1719 = vmul.f32 %v1613, %v1715
    %v1720 = vmul.f32 %v1614, %v1716
    %v1721 = vadd.f32 %v1719, %v1619
    %v1722 = vadd.f32 %v1720, %v1620
    %v1723 = vmul.f32 %v1622, %v1711
    %v1724 = vmul.f32 %v1623, %v1712
    %v1725 = vmul.f32 %v1625, %v1721
    %v1726 = vmul.f32 %v1626, %v1722
    %v1727 = vadd.f32 %v1723, %v1725
    %v1728 = vadd.f32 %v1724, %v1726
    %vm1729 = vcmp.eq.s32.totalorder %v189, 2
    %v1730 = vsel %vm1729, 1, 0
    %vm1731 = vcmp.eq.s32.totalorder %v1730, 1
    %v1732 = vlaneseq
    %v1733 = vshrl.u32 %v1732, 7
    %v1734 = vsub.s32 2, %v1733
    %v1735 = vrot.slane %v1727, %v1734
    %v1736 = vlaneseq
    %v1737 = vshrl.u32 %v1736, 7
    %v1738 = vsub.s32 2, %v1737
    %v1739 = vrot.slane %v1728, %v1738
    %v1740 = vsel %vm1731, %v1735, %v1701
    %v1741 = vsel %vm1731, %v1739, %v1702
    %v1744 = vrot.slane %v1711, 7
    %v1745 = vrot.slane %v1712, 7
    %v1748 = vmul.f32 %v1610, %v1744
    %v1749 = vmul.f32 %v1611, %v1745
    %v1750 = vadd.f32 %v1748, %v1616
    %v1751 = vadd.f32 %v1749, %v1617
    %v1754 = vrot.slane %v1721, 7
    %v1755 = vrot.slane %v1722, 7
    %v1758 = vmul.f32 %v1613, %v1754
    %v1759 = vmul.f32 %v1614, %v1755
    %v1760 = vadd.f32 %v1758, %v1619
    %v1761 = vadd.f32 %v1759, %v1620
    %v1762 = vmul.f32 %v1622, %v1750
    %v1763 = vmul.f32 %v1623, %v1751
    %v1764 = vmul.f32 %v1625, %v1760
    %v1765 = vmul.f32 %v1626, %v1761
    %v1766 = vadd.f32 %v1762, %v1764
    %v1767 = vadd.f32 %v1763, %v1765
    %vm1768 = vcmp.eq.s32.totalorder %v189, 3
    %v1769 = vsel %vm1768, 1, 0
    %vm1770 = vcmp.eq.s32.totalorder %v1769, 1
    %v1771 = vlaneseq
    %v1772 = vshrl.u32 %v1771, 7
    %v1773 = vsub.s32 3, %v1772
    %v1774 = vrot.slane %v1766, %v1773
    %v1775 = vlaneseq
    %v1776 = vshrl.u32 %v1775, 7
    %v1777 = vsub.s32 3, %v1776
    %v1778 = vrot.slane %v1767, %v1777
    %v1779 = vsel %vm1770, %v1774, %v1740
    %v1780 = vsel %vm1770, %v1778, %v1741
    %v1783 = vrot.slane %v1750, 7
    %v1784 = vrot.slane %v1751, 7
    %v1787 = vmul.f32 %v1610, %v1783
    %v1788 = vmul.f32 %v1611, %v1784
    %v1789 = vadd.f32 %v1787, %v1616
    %v1790 = vadd.f32 %v1788, %v1617
    %v1793 = vrot.slane %v1760, 7
    %v1794 = vrot.slane %v1761, 7
    %v1797 = vmul.f32 %v1613, %v1793
    %v1798 = vmul.f32 %v1614, %v1794
    %v1799 = vadd.f32 %v1797, %v1619
    %v1800 = vadd.f32 %v1798, %v1620
    %v1801 = vmul.f32 %v1622, %v1789
    %v1802 = vmul.f32 %v1623, %v1790
    %v1803 = vmul.f32 %v1625, %v1799
    %v1804 = vmul.f32 %v1626, %v1800
    %v1805 = vadd.f32 %v1801, %v1803
    %v1806 = vadd.f32 %v1802, %v1804
    %vm1807 = vcmp.eq.s32.totalorder %v189, 4
    %v1808 = vsel %vm1807, 1, 0
    %vm1809 = vcmp.eq.s32.totalorder %v1808, 1
    %v1810 = vlaneseq
    %v1811 = vshrl.u32 %v1810, 7
    %v1812 = vsub.s32 4, %v1811
    %v1813 = vrot.slane %v1805, %v1812
    %v1814 = vlaneseq
    %v1815 = vshrl.u32 %v1814, 7
    %v1816 = vsub.s32 4, %v1815
    %v1817 = vrot.slane %v1806, %v1816
    %v1818 = vsel %vm1809, %v1813, %v1779
    %v1819 = vsel %vm1809, %v1817, %v1780
    %v1822 = vrot.slane %v1789, 7
    %v1823 = vrot.slane %v1790, 7
    %v1826 = vmul.f32 %v1610, %v1822
    %v1827 = vmul.f32 %v1611, %v1823
    %v1828 = vadd.f32 %v1826, %v1616
    %v1829 = vadd.f32 %v1827, %v1617
    %v1832 = vrot.slane %v1799, 7
    %v1833 = vrot.slane %v1800, 7
    %v1836 = vmul.f32 %v1613, %v1832
    %v1837 = vmul.f32 %v1614, %v1833
    %v1838 = vadd.f32 %v1836, %v1619
    %v1839 = vadd.f32 %v1837, %v1620
    %v1840 = vmul.f32 %v1622, %v1828
    %v1841 = vmul.f32 %v1623, %v1829
    %v1842 = vmul.f32 %v1625, %v1838
    %v1843 = vmul.f32 %v1626, %v1839
    %v1844 = vadd.f32 %v1840, %v1842
    %v1845 = vadd.f32 %v1841, %v1843
    %vm1846 = vcmp.eq.s32.totalorder %v189, 5
    %v1847 = vsel %vm1846, 1, 0
    %vm1848 = vcmp.eq.s32.totalorder %v1847, 1
    %v1849 = vlaneseq
    %v1850 = vshrl.u32 %v1849, 7
    %v1851 = vsub.s32 5, %v1850
    %v1852 = vrot.slane %v1844, %v1851
    %v1853 = vlaneseq
    %v1854 = vshrl.u32 %v1853, 7
    %v1855 = vsub.s32 5, %v1854
    %v1856 = vrot.slane %v1845, %v1855
    %v1857 = vsel %vm1848, %v1852, %v1818
    %v1858 = vsel %vm1848, %v1856, %v1819
    %v1861 = vrot.slane %v1828, 7
    %v1862 = vrot.slane %v1829, 7
    %v1865 = vmul.f32 %v1610, %v1861
    %v1866 = vmul.f32 %v1611, %v1862
    %v1867 = vadd.f32 %v1865, %v1616
    %v1868 = vadd.f32 %v1866, %v1617
    %v1871 = vrot.slane %v1838, 7
    %v1872 = vrot.slane %v1839, 7
    %v1875 = vmul.f32 %v1613, %v1871
    %v1876 = vmul.f32 %v1614, %v1872
    %v1877 = vadd.f32 %v1875, %v1619
    %v1878 = vadd.f32 %v1876, %v1620
    %v1879 = vmul.f32 %v1622, %v1867
    %v1880 = vmul.f32 %v1623, %v1868
    %v1881 = vmul.f32 %v1625, %v1877
    %v1882 = vmul.f32 %v1626, %v1878
    %v1883 = vadd.f32 %v1879, %v1881
    %v1884 = vadd.f32 %v1880, %v1882
    %vm1885 = vcmp.eq.s32.totalorder %v189, 6
    %v1886 = vsel %vm1885, 1, 0
    %vm1887 = vcmp.eq.s32.totalorder %v1886, 1
    %v1888 = vlaneseq
    %v1889 = vshrl.u32 %v1888, 7
    %v1890 = vsub.s32 6, %v1889
    %v1891 = vrot.slane %v1883, %v1890
    %v1892 = vlaneseq
    %v1893 = vshrl.u32 %v1892, 7
    %v1894 = vsub.s32 6, %v1893
    %v1895 = vrot.slane %v1884, %v1894
    %v1896 = vsel %vm1887, %v1891, %v1857
    %v1897 = vsel %vm1887, %v1895, %v1858
    %v1900 = vrot.slane %v1867, 7
    %v1901 = vrot.slane %v1868, 7
    %v1904 = vmul.f32 %v1610, %v1900
    %v1905 = vmul.f32 %v1611, %v1901
    %v1906 = vadd.f32 %v1904, %v1616
    %v1907 = vadd.f32 %v1905, %v1617
    %v1910 = vrot.slane %v1877, 7
    %v1911 = vrot.slane %v1878, 7
    %v1914 = vmul.f32 %v1613, %v1910
    %v1915 = vmul.f32 %v1614, %v1911
    %v1916 = vadd.f32 %v1914, %v1619
    %v1917 = vadd.f32 %v1915, %v1620
    %v1918 = vmul.f32 %v1622, %v1906
    %v1919 = vmul.f32 %v1623, %v1907
    %v1920 = vmul.f32 %v1625, %v1916
    %v1921 = vmul.f32 %v1626, %v1917
    %v1922 = vadd.f32 %v1918, %v1920
    %v1923 = vadd.f32 %v1919, %v1921
    %vm1924 = vcmp.eq.s32.totalorder %v189, 7
    %v1925 = vsel %vm1924, 1, 0
    %vm1926 = vcmp.eq.s32.totalorder %v1925, 1
    %v1927 = vlaneseq
    %v1928 = vshrl.u32 %v1927, 7
    %v1929 = vsub.s32 7, %v1928
    %v1930 = vrot.slane %v1922, %v1929
    %v1931 = vlaneseq
    %v1932 = vshrl.u32 %v1931, 7
    %v1933 = vsub.s32 7, %v1932
    %v1934 = vrot.slane %v1923, %v1933
    %v1935 = vsel %vm1926, %v1930, %v1896
    %v1936 = vsel %vm1926, %v1934, %v1897
    %v1939 = vrot.slane %v1907, 7
    %vm1942 = vcmask 130055
    %1943 = vst.msk [vmem:[#allocation9 - $0x7] sm:$0x80] %vm1942, %v1906
    %vm1944 = vcmask 122880
    %1945 = vst.msk [vmem:[#allocation9 + $0x1] sm:$0x1] %vm1944, %v1939
    %v1948 = vrot.slane %v1917, 7
    %1951 = vst.msk [vmem:[#allocation10 - $0x7] sm:$0x80] %vm1942, %v1916
    %1952 = vst.msk [vmem:[#allocation10 + $0x1] sm:$0x1] %vm1944, %v1948
    %s1953 = scalar_lea.vmem [#allocation8], %s1608
    %1954 = vst.msk [vmem:[%s1953] sm:$0xff] %vm66, %v1935
    %1955 = vst.msk [vmem:[%s1953 + $0x40] sm:$0xff] %vm66, %v1936
  $region50: #{tpu_custom_call.1} parent=0 // loop_footer
    %s1607 = sadd.s32 1, %s1603
  $region51: #{tpu_custom_call.1} parent=0 // loop_footer_branch
    %1602 = sbr.rel target = $region47
  $region52: #{tpu_custom_call.1} parent=0 // loop_exit
    _
  %v1956 = vld [vmem:[#allocation8] sm:$0xff]
  %v1957 = vld [vmem:[#allocation8 + $0x8] sm:$0xff]
  %v1958 = vld [vmem:[#allocation8 + $0x10] sm:$0xff]
  %v1959 = vld [vmem:[#allocation8 + $0x18] sm:$0xff]
  %v1960 = vld [vmem:[#allocation8 + $0x20] sm:$0xff]
  %v1961 = vld [vmem:[#allocation8 + $0x28] sm:$0xff]
  %v1962 = vld [vmem:[#allocation8 + $0x30] sm:$0xff]
  %v1963 = vld [vmem:[#allocation8 + $0x38] sm:$0xff]
  %v1964 = vld [vmem:[#allocation8 + $0x40] sm:$0xff]
  %v1965 = vld [vmem:[#allocation8 + $0x48] sm:$0xff]
  %v1966 = vld [vmem:[#allocation8 + $0x50] sm:$0xff]
  %v1967 = vld [vmem:[#allocation8 + $0x58] sm:$0xff]
  %v1968 = vld [vmem:[#allocation8 + $0x60] sm:$0xff]
  %v1969 = vld [vmem:[#allocation8 + $0x68] sm:$0xff]
  %v1970 = vld [vmem:[#allocation8 + $0x70] sm:$0xff]
  %v1971 = vld [vmem:[#allocation8 + $0x78] sm:$0xff]
  %v1972 = vld [vmem:[%s7] sm:$0x1]
  %v1974 = vlaneseq
  %v1975 = vshrl.u32 %v1974, 7
  %v1976 = vsub.s32 0, %v1975
  %v1977 = vrot.slane %v1972, %v1976
  %v1979 = vmul.f32 %v616, %v1977
  %v1980 = vmul.f32 %v617, %v1977
  %v1981 = vmul.f32 %v618, %v1977
  %v1982 = vmul.f32 %v619, %v1977
  %v1983 = vmul.f32 %v620, %v1977
  %v1984 = vmul.f32 %v621, %v1977
  %v1985 = vmul.f32 %v622, %v1977
  %v1986 = vmul.f32 %v623, %v1977
  %v1987 = vmul.f32 %v624, %v1977
  %v1988 = vmul.f32 %v625, %v1977
  %v1989 = vmul.f32 %v626, %v1977
  %v1990 = vmul.f32 %v627, %v1977
  %v1991 = vmul.f32 %v628, %v1977
  %v1992 = vmul.f32 %v629, %v1977
  %v1993 = vmul.f32 %v630, %v1977
  %v1994 = vmul.f32 %v631, %v1977
  %v1995 = vadd.f32 %v1956, %v1979
  %v1996 = vadd.f32 %v1957, %v1980
  %v1997 = vadd.f32 %v1958, %v1981
  %v1998 = vadd.f32 %v1959, %v1982
  %v1999 = vadd.f32 %v1960, %v1983
  %v2000 = vadd.f32 %v1961, %v1984
  %v2001 = vadd.f32 %v1962, %v1985
  %v2002 = vadd.f32 %v1963, %v1986
  %v2003 = vadd.f32 %v1964, %v1987
  %v2004 = vadd.f32 %v1965, %v1988
  %v2005 = vadd.f32 %v1966, %v1989
  %v2006 = vadd.f32 %v1967, %v1990
  %v2007 = vadd.f32 %v1968, %v1991
  %v2008 = vadd.f32 %v1969, %v1992
  %v2009 = vadd.f32 %v1970, %v1993
  %v2010 = vadd.f32 %v1971, %v1994
  %v2011 = vxor.u32 %v126, 2147483648
  %v2012 = vxor.u32 %v129, 2147483648
  %v2013 = vxor.u32 %v134, 2147483648
  %v2014 = vxor.u32 %v137, 2147483648
  %v2015 = vxor.u32 %v142, 2147483648
  %v2016 = vxor.u32 %v145, 2147483648
  %v2017 = vxor.u32 %v150, 2147483648
  %v2018 = vxor.u32 %v153, 2147483648
  %v2019 = vxor.u32 %v158, 2147483648
  %v2020 = vxor.u32 %v161, 2147483648
  %v2021 = vxor.u32 %v166, 2147483648
  %v2022 = vxor.u32 %v169, 2147483648
  %v2023 = vxor.u32 %v174, 2147483648
  %v2024 = vxor.u32 %v177, 2147483648
  %v2025 = vxor.u32 %v182, 2147483648
  %v2026 = vxor.u32 %v185, 2147483648
  %v2027 = vmul.f32 %v2011, 1.442695
  %v2028 = vpow.pop %v2027
  %v2029 = vmul.f32 %v2012, 1.442695
  %v2030 = vpow.pop %v2029
  %v2031 = vmul.f32 %v2013, 1.442695
  %v2032 = vpow.pop %v2031
  %v2033 = vmul.f32 %v2014, 1.442695
  %v2034 = vpow.pop %v2033
  %v2035 = vmul.f32 %v2015, 1.442695
  %v2036 = vpow.pop %v2035
  %v2037 = vmul.f32 %v2016, 1.442695
  %v2038 = vpow.pop %v2037
  %v2039 = vmul.f32 %v2017, 1.442695
  %v2040 = vpow.pop %v2039
  %v2041 = vmul.f32 %v2018, 1.442695
  %v2042 = vpow.pop %v2041
  %v2043 = vmul.f32 %v2019, 1.442695
  %v2044 = vpow.pop %v2043
  %v2045 = vmul.f32 %v2020, 1.442695
  %v2046 = vpow.pop %v2045
  %v2047 = vmul.f32 %v2021, 1.442695
  %v2048 = vpow.pop %v2047
  %v2049 = vmul.f32 %v2022, 1.442695
  %v2050 = vpow.pop %v2049
  %v2051 = vmul.f32 %v2023, 1.442695
  %v2052 = vpow.pop %v2051
  %v2053 = vmul.f32 %v2024, 1.442695
  %v2054 = vpow.pop %v2053
  %v2055 = vmul.f32 %v2025, 1.442695
  %v2056 = vpow.pop %v2055
  %v2057 = vmul.f32 %v2026, 1.442695
  %v2058 = vpow.pop %v2057
  %v2059 = vadd.f32 %v2028, 1.0
  %v2060 = vadd.f32 %v2030, 1.0
  %v2061 = vadd.f32 %v2032, 1.0
  %v2062 = vadd.f32 %v2034, 1.0
  %v2063 = vadd.f32 %v2036, 1.0
  %v2064 = vadd.f32 %v2038, 1.0
  %v2065 = vadd.f32 %v2040, 1.0
  %v2066 = vadd.f32 %v2042, 1.0
  %v2067 = vadd.f32 %v2044, 1.0
  %v2068 = vadd.f32 %v2046, 1.0
  %v2069 = vadd.f32 %v2048, 1.0
  %v2070 = vadd.f32 %v2050, 1.0
  %v2071 = vadd.f32 %v2052, 1.0
  %v2072 = vadd.f32 %v2054, 1.0
  %v2073 = vadd.f32 %v2056, 1.0
  %v2074 = vadd.f32 %v2058, 1.0
  %v2075 = vrcp.pop %v2059
  %v2076 = vmul.f32 1.0, %v2075
  %v2077 = vrcp.pop %v2060
  %v2078 = vmul.f32 1.0, %v2077
  %v2079 = vrcp.pop %v2061
  %v2080 = vmul.f32 1.0, %v2079
  %v2081 = vrcp.pop %v2062
  %v2082 = vmul.f32 1.0, %v2081
  %v2083 = vrcp.pop %v2063
  %v2084 = vmul.f32 1.0, %v2083
  %v2085 = vrcp.pop %v2064
  %v2086 = vmul.f32 1.0, %v2085
  %v2087 = vrcp.pop %v2065
  %v2088 = vmul.f32 1.0, %v2087
  %v2089 = vrcp.pop %v2066
  %v2090 = vmul.f32 1.0, %v2089
  %v2091 = vrcp.pop %v2067
  %v2092 = vmul.f32 1.0, %v2091
  %v2093 = vrcp.pop %v2068
  %v2094 = vmul.f32 1.0, %v2093
  %v2095 = vrcp.pop %v2069
  %v2096 = vmul.f32 1.0, %v2095
  %v2097 = vrcp.pop %v2070
  %v2098 = vmul.f32 1.0, %v2097
  %v2099 = vrcp.pop %v2071
  %v2100 = vmul.f32 1.0, %v2099
  %v2101 = vrcp.pop %v2072
  %v2102 = vmul.f32 1.0, %v2101
  %v2103 = vrcp.pop %v2073
  %v2104 = vmul.f32 1.0, %v2103
  %v2105 = vrcp.pop %v2074
  %v2106 = vmul.f32 1.0, %v2105
  %v2107 = vmul.f32 %v126, %v2076
  %v2108 = vmul.f32 %v129, %v2078
  %v2109 = vmul.f32 %v134, %v2080
  %v2110 = vmul.f32 %v137, %v2082
  %v2111 = vmul.f32 %v142, %v2084
  %v2112 = vmul.f32 %v145, %v2086
  %v2113 = vmul.f32 %v150, %v2088
  %v2114 = vmul.f32 %v153, %v2090
  %v2115 = vmul.f32 %v158, %v2092
  %v2116 = vmul.f32 %v161, %v2094
  %v2117 = vmul.f32 %v166, %v2096
  %v2118 = vmul.f32 %v169, %v2098
  %v2119 = vmul.f32 %v174, %v2100
  %v2120 = vmul.f32 %v177, %v2102
  %v2121 = vmul.f32 %v182, %v2104
  %v2122 = vmul.f32 %v185, %v2106
  %2139 = vrot.lane.b32.xlu0 %v2107, 112
  %v2140 = vpop.permute.xlu0 %2139
  %2141 = vrot.lane.b32.xlu0 %v2108, 112
  %v2142 = vpop.permute.xlu0 %2141
  %2143 = vrot.lane.b32.xlu0 %v2109, 112
  %v2144 = vpop.permute.xlu0 %2143
  %2145 = vrot.lane.b32.xlu0 %v2110, 112
  %v2146 = vpop.permute.xlu0 %2145
  %2147 = vrot.lane.b32.xlu0 %v2111, 112
  %v2148 = vpop.permute.xlu0 %2147
  %2149 = vrot.lane.b32.xlu0 %v2112, 112
  %v2150 = vpop.permute.xlu0 %2149
  %2151 = vrot.lane.b32.xlu0 %v2113, 112
  %v2152 = vpop.permute.xlu0 %2151
  %2153 = vrot.lane.b32.xlu0 %v2114, 112
  %v2154 = vpop.permute.xlu0 %2153
  %2155 = vrot.lane.b32.xlu0 %v2115, 112
  %v2156 = vpop.permute.xlu0 %2155
  %2157 = vrot.lane.b32.xlu0 %v2116, 112
  %v2158 = vpop.permute.xlu0 %2157
  %2159 = vrot.lane.b32.xlu0 %v2117, 112
  %v2160 = vpop.permute.xlu0 %2159
  %2161 = vrot.lane.b32.xlu0 %v2118, 112
  %v2162 = vpop.permute.xlu0 %2161
  %2163 = vrot.lane.b32.xlu0 %v2119, 112
  %v2164 = vpop.permute.xlu0 %2163
  %2165 = vrot.lane.b32.xlu0 %v2120, 112
  %v2166 = vpop.permute.xlu0 %2165
  %2167 = vrot.lane.b32.xlu0 %v2121, 112
  %v2168 = vpop.permute.xlu0 %2167
  %2169 = vrot.lane.b32.xlu0 %v2122, 112
  %v2170 = vpop.permute.xlu0 %2169
  %v2187 = vmul.f32 %v1995, %v2140
  %v2188 = vmul.f32 %v1996, %v2142
  %v2189 = vmul.f32 %v1997, %v2144
  %v2190 = vmul.f32 %v1998, %v2146
  %v2191 = vmul.f32 %v1999, %v2148
  %v2192 = vmul.f32 %v2000, %v2150
  %v2193 = vmul.f32 %v2001, %v2152
  %v2194 = vmul.f32 %v2002, %v2154
  %v2195 = vmul.f32 %v2003, %v2156
  %v2196 = vmul.f32 %v2004, %v2158
  %v2197 = vmul.f32 %v2005, %v2160
  %v2198 = vmul.f32 %v2006, %v2162
  %v2199 = vmul.f32 %v2007, %v2164
  %v2200 = vmul.f32 %v2008, %v2166
  %v2201 = vmul.f32 %v2009, %v2168
  %v2202 = vmul.f32 %v2010, %v2170
  %v2203 = vpack.c.bf16 %v2188, %v2187
  %v2204 = vpack.c.bf16 %v2190, %v2189
  %v2205 = vpack.c.bf16 %v2192, %v2191
  %v2206 = vpack.c.bf16 %v2194, %v2193
  %v2207 = vpack.c.bf16 %v2196, %v2195
  %v2208 = vpack.c.bf16 %v2198, %v2197
  %v2209 = vpack.c.bf16 %v2200, %v2199
  %v2210 = vpack.c.bf16 %v2202, %v2201
  %v2211 = vld [vmem:[%s8] sm:$0xff]
  %v2212 = vld [vmem:[%s8 + $0x8] sm:$0xff]
  %v2213 = vpack.c.bf16 %v2212, %v2211
  %v2215 = vsel %vm66, %v2203, 0
  %v2218 = vsel %vm66, %v2204, 0
  %v2221 = vsel %vm66, %v2205, 0
  %v2224 = vsel %vm66, %v2206, 0
  %v2227 = vsel %vm66, %v2207, 0
  %v2230 = vsel %vm66, %v2208, 0
  %v2233 = vsel %vm66, %v2209, 0
  %v2236 = vsel %vm66, %v2210, 0
  %2238 = vmatprep.subr.bf16.mxu0 0
  %2239 = vmatpush1.bf16.msra.mxu0 %v2213
  %2240 = vmatprep.subr.bf16.mxu0 0
  %2241 = vmatpush1.bf16.msra.mxu0 0
  %2242 = vmatprep.subr.bf16.mxu0 0
  %2243 = vmatpush1.bf16.msra.mxu0 0
  %2244 = vmatprep.subr.bf16.mxu0 0
  %2245 = vmatpush1.bf16.msra.mxu0 0
  %2246 = vmatprep.subr.bf16.mxu0 0
  %2247 = vmatpush1.bf16.msra.mxu0 0
  %2248 = vmatprep.subr.bf16.mxu0 0
  %2249 = vmatpush1.bf16.msra.mxu0 0
  %2250 = vmatprep.subr.bf16.mxu0 0
  %2251 = vmatpush1.bf16.msra.mxu0 0
  %2252 = vmatprep.subr.bf16.mxu0 0
  %2253 = vmatpush1.bf16.msra.mxu0 0
  %2254 = vmatprep.subr.bf16.mxu0 0
  %2255 = vmatpush1.bf16.msra.mxu0 0
  %2256 = vmatprep.subr.bf16.mxu0 0
  %2257 = vmatpush1.bf16.msra.mxu0 0
  %2258 = vmatprep.subr.bf16.mxu0 0
  %2259 = vmatpush1.bf16.msra.mxu0 0
  %2260 = vmatprep.subr.bf16.mxu0 0
  %2261 = vmatpush1.bf16.msra.mxu0 0
  %2262 = vmatprep.subr.bf16.mxu0 0
  %2263 = vmatpush1.bf16.msra.mxu0 0
  %2264 = vmatprep.subr.bf16.mxu0 0
  %2265 = vmatpush1.bf16.msra.mxu0 0
  %2266 = vmatprep.subr.bf16.mxu0 0
  %2267 = vmatpush1.bf16.msra.mxu0 0
  %2268 = vmatprep.subr.bf16.mxu0 0
  %2269 = vmatpush1.bf16.msra.mxu0 0
  %2270 = vmatprep.mubr.bf16.mxu0 0
  %2271 = vmatmul.mubr.bf16.gmra.mrb[0].mxu0 %v2215
  %v2272 = vpop.f32.mrb[0].mxu0
  %v2273 = vadd.f32 0.0, %v2272
  %v2274 = vpop.f32.mrb[0].mxu0
  %v2275 = vpop.f32.mrb[0].mxu0
  %v2276 = vadd.f32 0.0, %v2275
  %v2277 = vpop.f32.mrb[0].mxu0
  %2278 = vmatprep.mubr.bf16.mxu0 0
  %2279 = vmatmul.mubr.bf16.gmra.mrb[0].mxu0 %v2218
  %v2280 = vpop.f32.mrb[0].mxu0
  %v2281 = vadd.f32 0.0, %v2280
  %v2282 = vpop.f32.mrb[0].mxu0
  %v2283 = vpop.f32.mrb[0].mxu0
  %v2284 = vadd.f32 0.0, %v2283
  %v2285 = vpop.f32.mrb[0].mxu0
  %2286 = vmatprep.mubr.bf16.mxu0 0
  %2287 = vmatmul.mubr.bf16.gmra.mrb[0].mxu0 %v2221
  %v2288 = vpop.f32.mrb[0].mxu0
  %v2289 = vadd.f32 0.0, %v2288
  %v2290 = vpop.f32.mrb[0].mxu0
  %v2291 = vpop.f32.mrb[0].mxu0
  %v2292 = vadd.f32 0.0, %v2291
  %v2293 = vpop.f32.mrb[0].mxu0
  %2294 = vmatprep.mubr.bf16.mxu0 0
  %2295 = vmatmul.mubr.bf16.gmra.mrb[0].mxu0 %v2224
  %v2296 = vpop.f32.mrb[0].mxu0
  %v2297 = vadd.f32 0.0, %v2296
  %v2298 = vpop.f32.mrb[0].mxu0
  %v2299 = vpop.f32.mrb[0].mxu0
  %v2300 = vadd.f32 0.0, %v2299
  %v2301 = vpop.f32.mrb[0].mxu0
  %2302 = vmatprep.mubr.bf16.mxu0 0
  %2303 = vmatmul.mubr.bf16.gmra.mrb[0].mxu0 %v2227
  %v2304 = vpop.f32.mrb[0].mxu0
  %v2305 = vadd.f32 0.0, %v2304
  %v2306 = vpop.f32.mrb[0].mxu0
  %v2307 = vpop.f32.mrb[0].mxu0
  %v2308 = vadd.f32 0.0, %v2307
  %v2309 = vpop.f32.mrb[0].mxu0
  %2310 = vmatprep.mubr.bf16.mxu0 0
  %2311 = vmatmul.mubr.bf16.gmra.mrb[0].mxu0 %v2230
  %v2312 = vpop.f32.mrb[0].mxu0
  %v2313 = vadd.f32 0.0, %v2312
  %v2314 = vpop.f32.mrb[0].mxu0
  %v2315 = vpop.f32.mrb[0].mxu0
  %v2316 = vadd.f32 0.0, %v2315
  %v2317 = vpop.f32.mrb[0].mxu0
  %2318 = vmatprep.mubr.bf16.mxu0 0
  %2319 = vmatmul.mubr.bf16.gmra.mrb[0].mxu0 %v2233
  %v2320 = vpop.f32.mrb[0].mxu0
  %v2321 = vadd.f32 0.0, %v2320
  %v2322 = vpop.f32.mrb[0].mxu0
  %v2323 = vpop.f32.mrb[0].mxu0
  %v2324 = vadd.f32 0.0, %v2323
  %v2325 = vpop.f32.mrb[0].mxu0
  %2326 = vmatprep.mubr.bf16.mxu0 0
  %2327 = vmatmul.mubr.bf16.gmra.mrb[0].mxu0 %v2236
  %v2328 = vpop.f32.mrb[0].mxu0
  %v2329 = vadd.f32 0.0, %v2328
  %v2330 = vpop.f32.mrb[0].mxu0
  %v2331 = vpop.f32.mrb[0].mxu0
  %v2332 = vadd.f32 0.0, %v2331
  %v2333 = vpop.f32.mrb[0].mxu0
  %2334 = vdwg.mxu0
  %vm2335 = vcmask 261120
  %v2336 = vsel %vm2335, %v2273, 0.0
  %2337 = vadd.xlane.f32.xlu0 %v2336
  %v2338 = vpop.xlane.xlu0 %2337
  %v2339 = vsel %vm2335, %v2276, 0.0
  %2340 = vadd.xlane.f32.xlu0 %v2339
  %v2341 = vpop.xlane.xlu0 %2340
  %v2342 = vsel %vm2335, %v2281, 0.0
  %2343 = vadd.xlane.f32.xlu0 %v2342
  %v2344 = vpop.xlane.xlu0 %2343
  %v2345 = vsel %vm2335, %v2284, 0.0
  %2346 = vadd.xlane.f32.xlu0 %v2345
  %v2347 = vpop.xlane.xlu0 %2346
  %v2348 = vsel %vm2335, %v2289, 0.0
  %2349 = vadd.xlane.f32.xlu0 %v2348
  %v2350 = vpop.xlane.xlu0 %2349
  %v2351 = vsel %vm2335, %v2292, 0.0
  %2352 = vadd.xlane.f32.xlu0 %v2351
  %v2353 = vpop.xlane.xlu0 %2352
  %v2354 = vsel %vm2335, %v2297, 0.0
  %2355 = vadd.xlane.f32.xlu0 %v2354
  %v2356 = vpop.xlane.xlu0 %2355
  %v2357 = vsel %vm2335, %v2300, 0.0
  %2358 = vadd.xlane.f32.xlu0 %v2357
  %v2359 = vpop.xlane.xlu0 %2358
  %v2360 = vsel %vm2335, %v2305, 0.0
  %2361 = vadd.xlane.f32.xlu0 %v2360
  %v2362 = vpop.xlane.xlu0 %2361
  %v2363 = vsel %vm2335, %v2308, 0.0
  %2364 = vadd.xlane.f32.xlu0 %v2363
  %v2365 = vpop.xlane.xlu0 %2364
  %v2366 = vsel %vm2335, %v2313, 0.0
  %2367 = vadd.xlane.f32.xlu0 %v2366
  %v2368 = vpop.xlane.xlu0 %2367
  %v2369 = vsel %vm2335, %v2316, 0.0
  %2370 = vadd.xlane.f32.xlu0 %v2369
  %v2371 = vpop.xlane.xlu0 %2370
  %v2372 = vsel %vm2335, %v2321, 0.0
  %2373 = vadd.xlane.f32.xlu0 %v2372
  %v2374 = vpop.xlane.xlu0 %2373
  %v2375 = vsel %vm2335, %v2324, 0.0
  %2376 = vadd.xlane.f32.xlu0 %v2375
  %v2377 = vpop.xlane.xlu0 %2376
  %v2378 = vsel %vm2335, %v2329, 0.0
  %2379 = vadd.xlane.f32.xlu0 %v2378
  %v2380 = vpop.xlane.xlu0 %2379
  %v2381 = vsel %vm2335, %v2332, 0.0
  %2382 = vadd.xlane.f32.xlu0 %v2381
  %v2383 = vpop.xlane.xlu0 %2382
  %v2384 = vrcp.pop 32.0
  %v2385 = vmul.f32 %v2338, %v2384
  %v2386 = vmul.f32 %v2341, %v2384
  %v2387 = vmul.f32 %v2344, %v2384
  %v2388 = vmul.f32 %v2347, %v2384
  %v2389 = vmul.f32 %v2350, %v2384
  %v2390 = vmul.f32 %v2353, %v2384
  %v2391 = vmul.f32 %v2356, %v2384
  %v2392 = vmul.f32 %v2359, %v2384
  %v2393 = vmul.f32 %v2362, %v2384
  %v2394 = vmul.f32 %v2365, %v2384
  %v2395 = vmul.f32 %v2368, %v2384
  %v2396 = vmul.f32 %v2371, %v2384
  %v2397 = vmul.f32 %v2374, %v2384
  %v2398 = vmul.f32 %v2377, %v2384
  %v2399 = vmul.f32 %v2380, %v2384
  %v2400 = vmul.f32 %v2383, %v2384
  %v2401 = vsub.f32 %v2273, %v2385
  %v2402 = vsub.f32 %v2276, %v2386
  %v2403 = vsub.f32 %v2281, %v2387
  %v2404 = vsub.f32 %v2284, %v2388
  %v2405 = vsub.f32 %v2289, %v2389
  %v2406 = vsub.f32 %v2292, %v2390
  %v2407 = vsub.f32 %v2297, %v2391
  %v2408 = vsub.f32 %v2300, %v2392
  %v2409 = vsub.f32 %v2305, %v2393
  %v2410 = vsub.f32 %v2308, %v2394
  %v2411 = vsub.f32 %v2313, %v2395
  %v2412 = vsub.f32 %v2316, %v2396
  %v2413 = vsub.f32 %v2321, %v2397
  %v2414 = vsub.f32 %v2324, %v2398
  %v2415 = vsub.f32 %v2329, %v2399
  %v2416 = vsub.f32 %v2332, %v2400
  %v2417 = vmul.f32 %v2401, %v2401
  %v2418 = vmul.f32 %v2402, %v2402
  %v2419 = vmul.f32 %v2403, %v2403
  %v2420 = vmul.f32 %v2404, %v2404
  %v2421 = vmul.f32 %v2405, %v2405
  %v2422 = vmul.f32 %v2406, %v2406
  %v2423 = vmul.f32 %v2407, %v2407
  %v2424 = vmul.f32 %v2408, %v2408
  %v2425 = vmul.f32 %v2409, %v2409
  %v2426 = vmul.f32 %v2410, %v2410
  %v2427 = vmul.f32 %v2411, %v2411
  %v2428 = vmul.f32 %v2412, %v2412
  %v2429 = vmul.f32 %v2413, %v2413
  %v2430 = vmul.f32 %v2414, %v2414
  %v2431 = vmul.f32 %v2415, %v2415
  %v2432 = vmul.f32 %v2416, %v2416
  %v2433 = vsel %vm2335, %v2417, 0.0
  %2434 = vadd.xlane.f32.xlu0 %v2433
  %v2435 = vpop.xlane.xlu0 %2434
  %v2436 = vsel %vm2335, %v2418, 0.0
  %2437 = vadd.xlane.f32.xlu0 %v2436
  %v2438 = vpop.xlane.xlu0 %2437
  %v2439 = vsel %vm2335, %v2419, 0.0
  %2440 = vadd.xlane.f32.xlu0 %v2439
  %v2441 = vpop.xlane.xlu0 %2440
  %v2442 = vsel %vm2335, %v2420, 0.0
  %2443 = vadd.xlane.f32.xlu0 %v2442
  %v2444 = vpop.xlane.xlu0 %2443
  %v2445 = vsel %vm2335, %v2421, 0.0
  %2446 = vadd.xlane.f32.xlu0 %v2445
  %v2447 = vpop.xlane.xlu0 %2446
  %v2448 = vsel %vm2335, %v2422, 0.0
  %2449 = vadd.xlane.f32.xlu0 %v2448
  %v2450 = vpop.xlane.xlu0 %2449
  %v2451 = vsel %vm2335, %v2423, 0.0
  %2452 = vadd.xlane.f32.xlu0 %v2451
  %v2453 = vpop.xlane.xlu0 %2452
  %v2454 = vsel %vm2335, %v2424, 0.0
  %2455 = vadd.xlane.f32.xlu0 %v2454
  %v2456 = vpop.xlane.xlu0 %2455
  %v2457 = vsel %vm2335, %v2425, 0.0
  %2458 = vadd.xlane.f32.xlu0 %v2457
  %v2459 = vpop.xlane.xlu0 %2458
  %v2460 = vsel %vm2335, %v2426, 0.0
  %2461 = vadd.xlane.f32.xlu0 %v2460
  %v2462 = vpop.xlane.xlu0 %2461
  %v2463 = vsel %vm2335, %v2427, 0.0
  %2464 = vadd.xlane.f32.xlu0 %v2463
  %v2465 = vpop.xlane.xlu0 %2464
  %v2466 = vsel %vm2335, %v2428, 0.0
  %2467 = vadd.xlane.f32.xlu0 %v2466
  %v2468 = vpop.xlane.xlu0 %2467
  %v2469 = vsel %vm2335, %v2429, 0.0
  %2470 = vadd.xlane.f32.xlu0 %v2469
  %v2471 = vpop.xlane.xlu0 %2470
  %v2472 = vsel %vm2335, %v2430, 0.0
  %2473 = vadd.xlane.f32.xlu0 %v2472
  %v2474 = vpop.xlane.xlu0 %2473
  %v2475 = vsel %vm2335, %v2431, 0.0
  %2476 = vadd.xlane.f32.xlu0 %v2475
  %v2477 = vpop.xlane.xlu0 %2476
  %v2478 = vsel %vm2335, %v2432, 0.0
  %2479 = vadd.xlane.f32.xlu0 %v2478
  %v2480 = vpop.xlane.xlu0 %2479
  %v2481 = vmul.f32 %v2435, %v2384
  %v2482 = vmul.f32 %v2438, %v2384
  %v2483 = vmul.f32 %v2441, %v2384
  %v2484 = vmul.f32 %v2444, %v2384
  %v2485 = vmul.f32 %v2447, %v2384
  %v2486 = vmul.f32 %v2450, %v2384
  %v2487 = vmul.f32 %v2453, %v2384
  %v2488 = vmul.f32 %v2456, %v2384
  %v2489 = vmul.f32 %v2459, %v2384
  %v2490 = vmul.f32 %v2462, %v2384
  %v2491 = vmul.f32 %v2465, %v2384
  %v2492 = vmul.f32 %v2468, %v2384
  %v2493 = vmul.f32 %v2471, %v2384
  %v2494 = vmul.f32 %v2474, %v2384
  %v2495 = vmul.f32 %v2477, %v2384
  %v2496 = vmul.f32 %v2480, %v2384
  %v2497 = vadd.f32 %v2481, 1e-05
  %v2498 = vadd.f32 %v2482, 1e-05
  %v2499 = vadd.f32 %v2483, 1e-05
  %v2500 = vadd.f32 %v2484, 1e-05
  %v2501 = vadd.f32 %v2485, 1e-05
  %v2502 = vadd.f32 %v2486, 1e-05
  %v2503 = vadd.f32 %v2487, 1e-05
  %v2504 = vadd.f32 %v2488, 1e-05
  %v2505 = vadd.f32 %v2489, 1e-05
  %v2506 = vadd.f32 %v2490, 1e-05
  %v2507 = vadd.f32 %v2491, 1e-05
  %v2508 = vadd.f32 %v2492, 1e-05
  %v2509 = vadd.f32 %v2493, 1e-05
  %v2510 = vadd.f32 %v2494, 1e-05
  %v2511 = vadd.f32 %v2495, 1e-05
  %v2512 = vadd.f32 %v2496, 1e-05
  %v2513 = vrsqrt.pop %v2497
  %v2514 = vrsqrt.pop %v2498
  %v2515 = vrsqrt.pop %v2499
  %v2516 = vrsqrt.pop %v2500
  %v2517 = vrsqrt.pop %v2501
  %v2518 = vrsqrt.pop %v2502
  %v2519 = vrsqrt.pop %v2503
  %v2520 = vrsqrt.pop %v2504
  %v2521 = vrsqrt.pop %v2505
  %v2522 = vrsqrt.pop %v2506
  %v2523 = vrsqrt.pop %v2507
  %v2524 = vrsqrt.pop %v2508
  %v2525 = vrsqrt.pop %v2509
  %v2526 = vrsqrt.pop %v2510
  %v2527 = vrsqrt.pop %v2511
  %v2528 = vrsqrt.pop %v2512
  %v2529 = vmul.f32 %v2401, %v2513
  %v2530 = vmul.f32 %v2402, %v2514
  %v2531 = vmul.f32 %v2403, %v2515
  %v2532 = vmul.f32 %v2404, %v2516
  %v2533 = vmul.f32 %v2405, %v2517
  %v2534 = vmul.f32 %v2406, %v2518
  %v2535 = vmul.f32 %v2407, %v2519
  %v2536 = vmul.f32 %v2408, %v2520
  %v2537 = vmul.f32 %v2409, %v2521
  %v2538 = vmul.f32 %v2410, %v2522
  %v2539 = vmul.f32 %v2411, %v2523
  %v2540 = vmul.f32 %v2412, %v2524
  %v2541 = vmul.f32 %v2413, %v2525
  %v2542 = vmul.f32 %v2414, %v2526
  %v2543 = vmul.f32 %v2415, %v2527
  %v2544 = vmul.f32 %v2416, %v2528
  %v2545 = vld [vmem:[%s9] sm:$0x1]
  %v2547 = vlaneseq
  %v2548 = vshrl.u32 %v2547, 7
  %v2549 = vsub.s32 0, %v2548
  %v2550 = vrot.slane %v2545, %v2549
  %v2552 = vmul.f32 %v2529, %v2550
  %v2553 = vmul.f32 %v2530, %v2550
  %v2554 = vmul.f32 %v2531, %v2550
  %v2555 = vmul.f32 %v2532, %v2550
  %v2556 = vmul.f32 %v2533, %v2550
  %v2557 = vmul.f32 %v2534, %v2550
  %v2558 = vmul.f32 %v2535, %v2550
  %v2559 = vmul.f32 %v2536, %v2550
  %v2560 = vmul.f32 %v2537, %v2550
  %v2561 = vmul.f32 %v2538, %v2550
  %v2562 = vmul.f32 %v2539, %v2550
  %v2563 = vmul.f32 %v2540, %v2550
  %v2564 = vmul.f32 %v2541, %v2550
  %v2565 = vmul.f32 %v2542, %v2550
  %v2566 = vmul.f32 %v2543, %v2550
  %v2567 = vmul.f32 %v2544, %v2550
  %v2568 = vld [vmem:[%s10] sm:$0x1]
  %v2570 = vlaneseq
  %v2571 = vshrl.u32 %v2570, 7
  %v2572 = vsub.s32 0, %v2571
  %v2573 = vrot.slane %v2568, %v2572
  %v2575 = vadd.f32 %v2552, %v2573
  %v2576 = vadd.f32 %v2553, %v2573
  %v2577 = vadd.f32 %v2554, %v2573
  %v2578 = vadd.f32 %v2555, %v2573
  %v2579 = vadd.f32 %v2556, %v2573
  %v2580 = vadd.f32 %v2557, %v2573
  %v2581 = vadd.f32 %v2558, %v2573
  %v2582 = vadd.f32 %v2559, %v2573
  %v2583 = vadd.f32 %v2560, %v2573
  %v2584 = vadd.f32 %v2561, %v2573
  %v2585 = vadd.f32 %v2562, %v2573
  %v2586 = vadd.f32 %v2563, %v2573
  %v2587 = vadd.f32 %v2564, %v2573
  %v2588 = vadd.f32 %v2565, %v2573
  %v2589 = vadd.f32 %v2566, %v2573
  %v2590 = vadd.f32 %v2567, %v2573
  %2591 = vst.msk [vmem:[%s11] sm:$0xff] %vm2335, %v2575
  %2592 = vst.msk [vmem:[%s11 + $0x8] sm:$0xff] %vm2335, %v2576
  %2593 = vst.msk [vmem:[%s11 + $0x10] sm:$0xff] %vm2335, %v2577
  %2594 = vst.msk [vmem:[%s11 + $0x18] sm:$0xff] %vm2335, %v2578
  %2595 = vst.msk [vmem:[%s11 + $0x20] sm:$0xff] %vm2335, %v2579
  %2596 = vst.msk [vmem:[%s11 + $0x28] sm:$0xff] %vm2335, %v2580
  %2597 = vst.msk [vmem:[%s11 + $0x30] sm:$0xff] %vm2335, %v2581
  %2598 = vst.msk [vmem:[%s11 + $0x38] sm:$0xff] %vm2335, %v2582
  %2599 = vst.msk [vmem:[%s11 + $0x40] sm:$0xff] %vm2335, %v2583
  %2600 = vst.msk [vmem:[%s11 + $0x48] sm:$0xff] %vm2335, %v2584
  %2601 = vst.msk [vmem:[%s11 + $0x50] sm:$0xff] %vm2335, %v2585
  %2602 = vst.msk [vmem:[%s11 + $0x58] sm:$0xff] %vm2335, %v2586
  %2603 = vst.msk [vmem:[%s11 + $0x60] sm:$0xff] %vm2335, %v2587
  %2604 = vst.msk [vmem:[%s11 + $0x68] sm:$0xff] %vm2335, %v2588
  %2605 = vst.msk [vmem:[%s11 + $0x70] sm:$0xff] %vm2335, %v2589
  %2606 = vst.msk [vmem:[%s11 + $0x78] sm:$0xff] %vm2335, %v2590
  // Predicated region
  $region53: #{tpu_custom_call.1} parent=0 // pred_check
    _
  $region54: #{tpu_custom_call.1} parent=0 // pred_check_branch
    %2608 = sbr.rel (0) target = $region56
  $region55: #{tpu_custom_call.1} parent=0 // pred_region
    _
  $region56: #{tpu_custom_call.1} parent=0 // pred_fallthru
    _
  // Predicated region
  $region57: #{tpu_custom_call.1} parent=0 // pred_check
    _
  $region58: #{tpu_custom_call.1} parent=0 // pred_check_branch
    %2610 = sbr.rel (0) target = $region60
  $region59: #{tpu_custom_call.1} parent=0 // pred_region
    _
  $region60: #{tpu_custom_call.1} parent=0 // pred_fallthru
    _

</llo_original>
